<compile_context>
chip_gen: v5e
topology: v5e:2x2
jax: 0.10.0
libtpu: 0.0.40
codegen_flags: <defaults>
</compile_context>

<pallas_src>
import numpy as np
import jax
import jax.numpy as jnp
from jax import lax
from jax.experimental import pallas as pl
from jax.experimental.pallas import tpu as pltpu

EPS = 1e-5          # PyTorch InstanceNorm default
NEG_SLOPE = 0.01    # LeakyReLU negative_slope


def _axis_masks(D, H, W):
    """(6, 1, DHW) f32 per-axis boundary masks in output coordinates.

    Rows: [z>=1, z<=D-2, y>=1, y<=H-2, x>=1, x<=W-2].  For a tap offset
    (dz, dy, dx) the product of the masks selected by its nonzero components is
    1 exactly where the source voxel lies inside the volume, so they zero both
    genuine out-of-volume taps and the circular-wrap positions produced by
    pltpu.roll on the flattened DHW axis.
    """
    z, y, x = np.meshgrid(np.arange(D), np.arange(H), np.arange(W), indexing="ij")
    rows = [z >= 1, z <= D - 2, y >= 1, y <= H - 2, x >= 1, x <= W - 2]
    return np.stack([r.reshape(1, -1).astype(np.float32) for r in rows])


def _make_kernel(D, H, W, Cout, cin_p, cout_p, mxu_dtype):
    HW = H * W
    DHW = D * HW
    K1 = 27 * cin_p
    K2 = 27 * cout_p

    def inorm(y):
        # per-channel instance norm over spatial lanes, biased variance
        m = jnp.mean(y, axis=-1, keepdims=True)
        v = jnp.mean(jnp.square(y - m), axis=-1, keepdims=True)
        return (y - m) * lax.rsqrt(v + EPS)

    def lrelu(y):
        return jnp.where(y > 0, y, NEG_SLOPE * y)

    def kernel(x_ref, m_ref, w13_ref, w2_ref, ssf_ref, o_ref, patch_ref):
        def fill_patches(act, cb):
            # im2col via lane rolls: patch[t*cb + c, p] = act[c, p + s_t] where
            # valid, else 0.  Rolls run on the XLU; masks kill wrap positions.
            m = [m_ref[i] for i in range(6)]          # six (1, DHW) masks
            t = 0
            for dz in (-1, 0, 1):
                for dy in (-1, 0, 1):
                    for dx in (-1, 0, 1):
                        s = dz * HW + dy * W + dx
                        if s == 0:
                            slab = act                # center tap: identity
                        else:
                            slab = pltpu.roll(act, shift=(-s) % DHW, axis=1)
                            mk = None
                            for ax, d in ((0, dz), (1, dy), (2, dx)):
                                if d != 0:
                                    mi = m[2 * ax + (0 if d < 0 else 1)]
                                    mk = mi if mk is None else mk * mi
                            slab = slab * mk
                        # full-tile aligned store (cb is a sublane multiple)
                        patch_ref[t * cb:(t + 1) * cb, :] = slab.astype(mxu_dtype)
                        t += 1

        x = x_ref[0]                                   # (cin_p, DHW) f32

        # ---- conv1 (3x3x3) + fused 1x1x1 shortcut: ONE im2col matmul ----
        fill_patches(x, cin_p)
        yr = jnp.dot(w13_ref[...], patch_ref[0:K1, :],
                     preferred_element_type=jnp.float32)   # (2*cout_p, DHW)

        ssf = ssf_ref[...]                             # (cout_p, 4)
        s1, sh1 = ssf[:, 0:1], ssf[:, 1:2]
        s2, sh2 = ssf[:, 2:3], ssf[:, 3:4]

        # norm1 -> SSF1 -> LeakyReLU (stays in VMEM/registers)
        y = lrelu(inorm(yr[0:cout_p]) * s1 + sh1)

        # ---- conv2 (3x3x3) -> norm2 -> SSF2 ----
        fill_patches(y, cout_p)                        # reuse the patch scratch
        y2 = jnp.dot(w2_ref[...], patch_ref[0:K2, :],
                     preferred_element_type=jnp.float32)    # (cout_p, DHW)
        y2 = inorm(y2) * s2 + sh2

        # ---- shortcut branch: norm3(conv3(x)), conv3 came out of the fused matmul
        r = inorm(yr[cout_p:2 * cout_p])

        out = lrelu(y2 + r)
        o_ref[0] = out[0:Cout].astype(o_ref.dtype)     # lane-dense store

    return kernel


def de_ssf_block(x, params, *, mxu_dtype=jnp.float32):
    """Fused De_SSF_Block forward pass.

    x: (N, Cin, D, H, W) float32 (NCDHW, PyTorch layout).
    Returns (N, Cout, D, H, W) float32.

    Implements the `downsample` configuration of the module (in_channels !=
    out_channels, stride=1): conv3 (1x1x1) shortcut + norm3 are present.
    mxu_dtype=jnp.bfloat16 stores im2col patches + weights in bf16 (halves the
    dominant patch store/load traffic and patch VMEM, ~2x MXU on v6e/v7x);
    elementwise math stays f32.  Re-verify with a looser ~1e-2 tolerance if
    bf16 is enabled.
    """
    N, Cin, D, H, W = x.shape
    Cout = params["w1"].shape[0]
    DHW = D * H * W

    # channel padding to the sublane tile of the patch dtype so every im2col
    # tap block store lands on a full (sub, 128) tile (unmasked vst).
    sub = 8 * (4 // np.dtype(mxu_dtype).itemsize)
    cin_p = -(-Cin // sub) * sub
    cout_p = -(-Cout // sub) * sub

    # --- weight prep (tiny one-off XLA ops) --------------------------------
    # Fused conv1 + 1x1x1-shortcut weight: rows [0:cout_p) are conv1, rows
    # [cout_p:2*cout_p) hold w3 placed at the center-tap (t=13) column block,
    # whose patch rows equal x exactly.  K ordering is tap-major/channel-minor
    # to match fill_patches; padded rows/columns are zero.
    w1_r = params["w1"].transpose(0, 2, 3, 4, 1).reshape(Cout, 27, Cin)
    w1_p = jnp.zeros((cout_p, 27, cin_p), jnp.float32).at[:Cout, :, :Cin].set(w1_r)
    w3_p = jnp.zeros((cout_p, 27, cin_p), jnp.float32).at[:Cout, 13, :Cin].set(params["w3"])
    w13 = (jnp.concatenate([w1_p, w3_p], axis=0)
           .reshape(2 * cout_p, 27 * cin_p).astype(mxu_dtype))

    w2_r = params["w2"].transpose(0, 2, 3, 4, 1).reshape(Cout, 27, Cout)
    w2m = (jnp.zeros((cout_p, 27, cout_p), jnp.float32).at[:Cout, :, :Cout].set(w2_r)
           .reshape(cout_p, 27 * cout_p).astype(mxu_dtype))

    # SSF scale/shift packed into one (cout_p, 4) block; padded rows are zero
    # so padded output channels stay exactly zero through SSF / LeakyReLU.
    ssf = jnp.zeros((cout_p, 4), jnp.float32)
    ssf = ssf.at[:Cout, 0].set(params["s1"]).at[:Cout, 1].set(params["sh1"])
    ssf = ssf.at[:Cout, 2].set(params["s2"]).at[:Cout, 3].set(params["sh2"])

    # input: channels-first, flattened spatial (free reshape on contiguous
    # NCDHW), channels zero-padded so conv1 tap blocks need no in-kernel fill.
    x_flat = x.reshape(N, Cin, DHW)
    if cin_p > Cin:
        x_flat = jnp.pad(x_flat, ((0, 0), (0, cin_p - Cin), (0, 0)))

    masks6 = jnp.asarray(_axis_masks(D, H, W))     # (6, 1, DHW) constant

    kernel = _make_kernel(D, H, W, Cout, cin_p, cout_p, mxu_dtype)
    kmax = 27 * max(cin_p, cout_p)

    # TODO(synk): for production UNETR volumes (64^3+, Cout>=32) add a D-slab
    # grid axis (1-plane halo, two-pass sum/sumsq instance norm with a finalize
    # step), mark it CORE_PARALLEL so both v7x TensorCores are busy at N=1,
    # and set vmem_limit_bytes explicitly; the per-sample-resident design
    # below is intended for small volumes only.
    out = pl.pallas_call(
        kernel,
        out_shape=jax.ShapeDtypeStruct((N, Cout, DHW), jnp.float32),
        grid_spec=pltpu.PrefetchScalarGridSpec(
            num_scalar_prefetch=0,
            grid=(N,),                              # one grid step per sample
            in_specs=[
                pl.BlockSpec((1, cin_p, DHW), lambda n: (n, 0, 0)),
                pl.BlockSpec((6, 1, DHW), lambda n: (0, 0, 0)),
                pl.BlockSpec((2 * cout_p, 27 * cin_p), lambda n: (0, 0)),
                pl.BlockSpec((cout_p, 27 * cout_p), lambda n: (0, 0)),
                pl.BlockSpec((cout_p, 4), lambda n: (0, 0)),
            ],
            out_specs=pl.BlockSpec((1, Cout, DHW), lambda n: (n, 0, 0)),
            scratch_shapes=[
                pltpu.VMEM((kmax, DHW), mxu_dtype),  # shared im2col patch buffer
            ],
        ),
        compiler_params=pltpu.CompilerParams(
            dimension_semantics=("parallel",),       # N>=2 keeps both v7x TCs busy
        ),
    )(x_flat, masks6, w13, w2m, ssf)

    return out.reshape(N, Cout, D, H, W)


def reference(x, p):
    """Pure-JAX reference of the same forward pass (NCDHW)."""
    dn = ("NCDHW", "OIDHW", "NCDHW")

    def conv(v, w, padding):
        return lax.conv_general_dilated(v, w, (1, 1, 1), padding,
                                        dimension_numbers=dn)

    def inorm(y):
        m = jnp.mean(y, axis=(2, 3, 4), keepdims=True)
        v = jnp.mean(jnp.square(y - m), axis=(2, 3, 4), keepdims=True)
        return (y - m) * lax.rsqrt(v + EPS)

    def lrelu(y):
        return jnp.where(y > 0, y, NEG_SLOPE * y)

    def ssf(y, s, sh):
        return y * s.reshape(1, -1, 1, 1, 1) + sh.reshape(1, -1, 1, 1, 1)

    y = lrelu(ssf(inorm(conv(x, p["w1"], "SAME")), p["s1"], p["sh1"]))
    y = ssf(inorm(conv(y, p["w2"], "SAME")), p["s2"], p["sh2"])
    r = inorm(conv(x, p["w3"][:, :, None, None, None], "VALID"))
    return lrelu(y + r)


if __name__ == "__main__":
    # Module config: spatial_dims=3, in_channels=4, out_channels=8,
    # kernel_size=3, stride=1, norm_name="instance" -> downsample path (1x1x1
    # conv3 shortcut).  Small deterministic shapes.
    N, Cin, Cout, D, H, W = 2, 4, 8, 8, 8, 8

    key = jax.random.PRNGKey(0)
    ks = jax.random.split(key, 8)
    # Conv weights in PyTorch OIDHW layout; SSF params follow
    # init_ssf_scale_shift: scale ~ N(1, 0.02), shift ~ N(0, 0.02).
    params = {
        "w1": 0.1 * jax.random.normal(ks[0], (Cout, Cin, 3, 3, 3), jnp.float32),
        "w2": 0.1 * jax.random.normal(ks[1], (Cout, Cout, 3, 3, 3), jnp.float32),
        "w3": 0.1 * jax.random.normal(ks[2], (Cout, Cin), jnp.float32),
        "s1": 1.0 + 0.02 * jax.random.normal(ks[3], (Cout,), jnp.float32),
        "sh1": 0.02 * jax.random.normal(ks[4], (Cout,), jnp.float32),
        "s2": 1.0 + 0.02 * jax.random.normal(ks[5], (Cout,), jnp.float32),
        "sh2": 0.02 * jax.random.normal(ks[6], (Cout,), jnp.float32),
    }
    x = jax.random.normal(ks[7], (N, Cin, D, H, W), jnp.float32)

    out = jax.block_until_ready(jax.jit(de_ssf_block)(x, params))

    ref = reference(x, params)
    np.testing.assert_allclose(np.asarray(out), np.asarray(ref),
                               atol=2e-3, rtol=2e-3)
    print("KERNEL_OK")
</pallas_src>

<mosaic_0001>
module attributes {stable_mosaic.version = 11 : i64} {
  func.func @kernel(%arg0: i32, %arg1: memref<1x8x512xf32, #tpu.memory_space<vmem>>, %arg2: memref<6x1x512xf32, #tpu.memory_space<vmem>>, %arg3: memref<16x216xf32, #tpu.memory_space<vmem>>, %arg4: memref<8x216xf32, #tpu.memory_space<vmem>>, %arg5: memref<8x4xf32, #tpu.memory_space<vmem>>, %arg6: memref<1x8x512xf32, #tpu.memory_space<vmem>>, %arg7: memref<216x512xf32, #tpu.memory_space<vmem>>) attributes {dimension_semantics = [#tpu.dimension_semantics<parallel>], iteration_bounds = array<i64: 2>, scalar_prefetch = 0 : i64, scratch_operands = 1 : i64, tpu.core_type = #tpu.core_type<tc>, window_params = [{transform_indices = @transform_0, window_bounds = array<i64: 1, 8, 512>}, {pipeline_mode = #tpu.pipeline_mode<synchronous>, transform_indices = @transform_1, window_bounds = array<i64: 6, 1, 512>}, {pipeline_mode = #tpu.pipeline_mode<synchronous>, transform_indices = @transform_2, window_bounds = array<i64: 16, 216>}, {pipeline_mode = #tpu.pipeline_mode<synchronous>, transform_indices = @transform_3, window_bounds = array<i64: 8, 216>}, {pipeline_mode = #tpu.pipeline_mode<synchronous>, transform_indices = @transform_4, window_bounds = array<i64: 8, 4>}, {transform_indices = @transform_5, window_bounds = array<i64: 1, 8, 512>}]} {
    %c0 = arith.constant 0 : index
    %c0_0 = arith.constant 0 : index
    %c0_1 = arith.constant 0 : index
    %0 = vector.load %arg1[%c0, %c0_0, %c0_1] : memref<1x8x512xf32, #tpu.memory_space<vmem>>, vector<1x8x512xf32>
    %1 = vector.shape_cast %0 : vector<1x8x512xf32> to vector<8x512xf32>
    %c0_2 = arith.constant 0 : index
    %c0_3 = arith.constant 0 : index
    %c0_4 = arith.constant 0 : index
    %2 = vector.load %arg2[%c0_2, %c0_3, %c0_4] : memref<6x1x512xf32, #tpu.memory_space<vmem>>, vector<1x1x512xf32>
    %3 = vector.shape_cast %2 : vector<1x1x512xf32> to vector<1x512xf32>
    %c1 = arith.constant 1 : index
    %c0_5 = arith.constant 0 : index
    %c0_6 = arith.constant 0 : index
    %4 = vector.load %arg2[%c1, %c0_5, %c0_6] : memref<6x1x512xf32, #tpu.memory_space<vmem>>, vector<1x1x512xf32>
    %5 = vector.shape_cast %4 : vector<1x1x512xf32> to vector<1x512xf32>
    %c2 = arith.constant 2 : index
    %c0_7 = arith.constant 0 : index
    %c0_8 = arith.constant 0 : index
    %6 = vector.load %arg2[%c2, %c0_7, %c0_8] : memref<6x1x512xf32, #tpu.memory_space<vmem>>, vector<1x1x512xf32>
    %7 = vector.shape_cast %6 : vector<1x1x512xf32> to vector<1x512xf32>
    %c3 = arith.constant 3 : index
    %c0_9 = arith.constant 0 : index
    %c0_10 = arith.constant 0 : index
    %8 = vector.load %arg2[%c3, %c0_9, %c0_10] : memref<6x1x512xf32, #tpu.memory_space<vmem>>, vector<1x1x512xf32>
    %9 = vector.shape_cast %8 : vector<1x1x512xf32> to vector<1x512xf32>
    %c4 = arith.constant 4 : index
    %c0_11 = arith.constant 0 : index
    %c0_12 = arith.constant 0 : index
    %10 = vector.load %arg2[%c4, %c0_11, %c0_12] : memref<6x1x512xf32, #tpu.memory_space<vmem>>, vector<1x1x512xf32>
    %11 = vector.shape_cast %10 : vector<1x1x512xf32> to vector<1x512xf32>
    %c5 = arith.constant 5 : index
    %c0_13 = arith.constant 0 : index
    %c0_14 = arith.constant 0 : index
    %12 = vector.load %arg2[%c5, %c0_13, %c0_14] : memref<6x1x512xf32, #tpu.memory_space<vmem>>, vector<1x1x512xf32>
    %13 = vector.shape_cast %12 : vector<1x1x512xf32> to vector<1x512xf32>
    %c73_i32 = arith.constant 73 : i32
    %14 = tpu.dynamic_rotate %1 by %c73_i32 dim 1 : vector<8x512xf32>, i32 -> vector<8x512xf32>
    %15 = arith.mulf %3, %7 : vector<1x512xf32>
    %16 = arith.mulf %15, %11 : vector<1x512xf32>
    %17 = vector.broadcast %16 : vector<1x512xf32> to vector<8x512xf32>
    %18 = arith.mulf %14, %17 : vector<8x512xf32>
    %c0_15 = arith.constant 0 : index
    %c0_16 = arith.constant 0 : index
    %19 = vector.load %arg7[%c0_15, %c0_16] : memref<216x512xf32, #tpu.memory_space<vmem>>, vector<8x512xf32>
    tpu.vector_store %arg7[%c0_15, %c0_16], %18 {strides = array<i32>} : memref<216x512xf32, #tpu.memory_space<vmem>>, vector<8x512xf32>,
    %c72_i32 = arith.constant 72 : i32
    %20 = tpu.dynamic_rotate %1 by %c72_i32 dim 1 : vector<8x512xf32>, i32 -> vector<8x512xf32>
    %21 = arith.mulf %3, %7 : vector<1x512xf32>
    %22 = vector.broadcast %21 : vector<1x512xf32> to vector<8x512xf32>
    %23 = arith.mulf %20, %22 : vector<8x512xf32>
    %c8 = arith.constant 8 : index
    %c0_17 = arith.constant 0 : index
    %24 = vector.load %arg7[%c8, %c0_17] : memref<216x512xf32, #tpu.memory_space<vmem>>, vector<8x512xf32>
    tpu.vector_store %arg7[%c8, %c0_17], %23 {strides = array<i32>} : memref<216x512xf32, #tpu.memory_space<vmem>>, vector<8x512xf32>,
    %c71_i32 = arith.constant 71 : i32
    %25 = tpu.dynamic_rotate %1 by %c71_i32 dim 1 : vector<8x512xf32>, i32 -> vector<8x512xf32>
    %26 = arith.mulf %3, %7 : vector<1x512xf32>
    %27 = arith.mulf %26, %13 : vector<1x512xf32>
    %28 = vector.broadcast %27 : vector<1x512xf32> to vector<8x512xf32>
    %29 = arith.mulf %25, %28 : vector<8x512xf32>
    %c16 = arith.constant 16 : index
    %c0_18 = arith.constant 0 : index
    %30 = vector.load %arg7[%c16, %c0_18] : memref<216x512xf32, #tpu.memory_space<vmem>>, vector<8x512xf32>
    tpu.vector_store %arg7[%c16, %c0_18], %29 {strides = array<i32>} : memref<216x512xf32, #tpu.memory_space<vmem>>, vector<8x512xf32>,
    %c65_i32 = arith.constant 65 : i32
    %31 = tpu.dynamic_rotate %1 by %c65_i32 dim 1 : vector<8x512xf32>, i32 -> vector<8x512xf32>
    %32 = arith.mulf %3, %11 : vector<1x512xf32>
    %33 = vector.broadcast %32 : vector<1x512xf32> to vector<8x512xf32>
    %34 = arith.mulf %31, %33 : vector<8x512xf32>
    %c24 = arith.constant 24 : index
    %c0_19 = arith.constant 0 : index
    %35 = vector.load %arg7[%c24, %c0_19] : memref<216x512xf32, #tpu.memory_space<vmem>>, vector<8x512xf32>
    tpu.vector_store %arg7[%c24, %c0_19], %34 {strides = array<i32>} : memref<216x512xf32, #tpu.memory_space<vmem>>, vector<8x512xf32>,
    %c64_i32 = arith.constant 64 : i32
    %36 = tpu.dynamic_rotate %1 by %c64_i32 dim 1 : vector<8x512xf32>, i32 -> vector<8x512xf32>
    %37 = vector.broadcast %3 : vector<1x512xf32> to vector<8x512xf32>
    %38 = arith.mulf %36, %37 : vector<8x512xf32>
    %c32 = arith.constant 32 : index
    %c0_20 = arith.constant 0 : index
    %39 = vector.load %arg7[%c32, %c0_20] : memref<216x512xf32, #tpu.memory_space<vmem>>, vector<8x512xf32>
    tpu.vector_store %arg7[%c32, %c0_20], %38 {strides = array<i32>} : memref<216x512xf32, #tpu.memory_space<vmem>>, vector<8x512xf32>,
    %c63_i32 = arith.constant 63 : i32
    %40 = tpu.dynamic_rotate %1 by %c63_i32 dim 1 : vector<8x512xf32>, i32 -> vector<8x512xf32>
    %41 = arith.mulf %3, %13 : vector<1x512xf32>
    %42 = vector.broadcast %41 : vector<1x512xf32> to vector<8x512xf32>
    %43 = arith.mulf %40, %42 : vector<8x512xf32>
    %c40 = arith.constant 40 : index
    %c0_21 = arith.constant 0 : index
    %44 = vector.load %arg7[%c40, %c0_21] : memref<216x512xf32, #tpu.memory_space<vmem>>, vector<8x512xf32>
    tpu.vector_store %arg7[%c40, %c0_21], %43 {strides = array<i32>} : memref<216x512xf32, #tpu.memory_space<vmem>>, vector<8x512xf32>,
    %c57_i32 = arith.constant 57 : i32
    %45 = tpu.dynamic_rotate %1 by %c57_i32 dim 1 : vector<8x512xf32>, i32 -> vector<8x512xf32>
    %46 = arith.mulf %3, %9 : vector<1x512xf32>
    %47 = arith.mulf %46, %11 : vector<1x512xf32>
    %48 = vector.broadcast %47 : vector<1x512xf32> to vector<8x512xf32>
    %49 = arith.mulf %45, %48 : vector<8x512xf32>
    %c48 = arith.constant 48 : index
    %c0_22 = arith.constant 0 : index
    %50 = vector.load %arg7[%c48, %c0_22] : memref<216x512xf32, #tpu.memory_space<vmem>>, vector<8x512xf32>
    tpu.vector_store %arg7[%c48, %c0_22], %49 {strides = array<i32>} : memref<216x512xf32, #tpu.memory_space<vmem>>, vector<8x512xf32>,
    %c56_i32 = arith.constant 56 : i32
    %51 = tpu.dynamic_rotate %1 by %c56_i32 dim 1 : vector<8x512xf32>, i32 -> vector<8x512xf32>
    %52 = arith.mulf %3, %9 : vector<1x512xf32>
    %53 = vector.broadcast %52 : vector<1x512xf32> to vector<8x512xf32>
    %54 = arith.mulf %51, %53 : vector<8x512xf32>
    %c56 = arith.constant 56 : index
    %c0_23 = arith.constant 0 : index
    %55 = vector.load %arg7[%c56, %c0_23] : memref<216x512xf32, #tpu.memory_space<vmem>>, vector<8x512xf32>
    tpu.vector_store %arg7[%c56, %c0_23], %54 {strides = array<i32>} : memref<216x512xf32, #tpu.memory_space<vmem>>, vector<8x512xf32>,
    %c55_i32 = arith.constant 55 : i32
    %56 = tpu.dynamic_rotate %1 by %c55_i32 dim 1 : vector<8x512xf32>, i32 -> vector<8x512xf32>
    %57 = arith.mulf %3, %9 : vector<1x512xf32>
    %58 = arith.mulf %57, %13 : vector<1x512xf32>
    %59 = vector.broadcast %58 : vector<1x512xf32> to vector<8x512xf32>
    %60 = arith.mulf %56, %59 : vector<8x512xf32>
    %c64 = arith.constant 64 : index
    %c0_24 = arith.constant 0 : index
    %61 = vector.load %arg7[%c64, %c0_24] : memref<216x512xf32, #tpu.memory_space<vmem>>, vector<8x512xf32>
    tpu.vector_store %arg7[%c64, %c0_24], %60 {strides = array<i32>} : memref<216x512xf32, #tpu.memory_space<vmem>>, vector<8x512xf32>,
    %c9_i32 = arith.constant 9 : i32
    %62 = tpu.dynamic_rotate %1 by %c9_i32 dim 1 : vector<8x512xf32>, i32 -> vector<8x512xf32>
    %63 = arith.mulf %7, %11 : vector<1x512xf32>
    %64 = vector.broadcast %63 : vector<1x512xf32> to vector<8x512xf32>
    %65 = arith.mulf %62, %64 : vector<8x512xf32>
    %c72 = arith.constant 72 : index
    %c0_25 = arith.constant 0 : index
    %66 = vector.load %arg7[%c72, %c0_25] : memref<216x512xf32, #tpu.memory_space<vmem>>, vector<8x512xf32>
    tpu.vector_store %arg7[%c72, %c0_25], %65 {strides = array<i32>} : memref<216x512xf32, #tpu.memory_space<vmem>>, vector<8x512xf32>,
    %c8_i32 = arith.constant 8 : i32
    %67 = tpu.dynamic_rotate %1 by %c8_i32 dim 1 : vector<8x512xf32>, i32 -> vector<8x512xf32>
    %68 = vector.broadcast %7 : vector<1x512xf32> to vector<8x512xf32>
    %69 = arith.mulf %67, %68 : vector<8x512xf32>
    %c80 = arith.constant 80 : index
    %c0_26 = arith.constant 0 : index
    %70 = vector.load %arg7[%c80, %c0_26] : memref<216x512xf32, #tpu.memory_space<vmem>>, vector<8x512xf32>
    tpu.vector_store %arg7[%c80, %c0_26], %69 {strides = array<i32>} : memref<216x512xf32, #tpu.memory_space<vmem>>, vector<8x512xf32>,
    %c7_i32 = arith.constant 7 : i32
    %71 = tpu.dynamic_rotate %1 by %c7_i32 dim 1 : vector<8x512xf32>, i32 -> vector<8x512xf32>
    %72 = arith.mulf %7, %13 : vector<1x512xf32>
    %73 = vector.broadcast %72 : vector<1x512xf32> to vector<8x512xf32>
    %74 = arith.mulf %71, %73 : vector<8x512xf32>
    %c88 = arith.constant 88 : index
    %c0_27 = arith.constant 0 : index
    %75 = vector.load %arg7[%c88, %c0_27] : memref<216x512xf32, #tpu.memory_space<vmem>>, vector<8x512xf32>
    tpu.vector_store %arg7[%c88, %c0_27], %74 {strides = array<i32>} : memref<216x512xf32, #tpu.memory_space<vmem>>, vector<8x512xf32>,
    %c1_i32 = arith.constant 1 : i32
    %76 = tpu.dynamic_rotate %1 by %c1_i32 dim 1 : vector<8x512xf32>, i32 -> vector<8x512xf32>
    %77 = vector.broadcast %11 : vector<1x512xf32> to vector<8x512xf32>
    %78 = arith.mulf %76, %77 : vector<8x512xf32>
    %c96 = arith.constant 96 : index
    %c0_28 = arith.constant 0 : index
    %79 = vector.load %arg7[%c96, %c0_28] : memref<216x512xf32, #tpu.memory_space<vmem>>, vector<8x512xf32>
    tpu.vector_store %arg7[%c96, %c0_28], %78 {strides = array<i32>} : memref<216x512xf32, #tpu.memory_space<vmem>>, vector<8x512xf32>,
    %c104 = arith.constant 104 : index
    %c0_29 = arith.constant 0 : index
    %80 = vector.load %arg7[%c104, %c0_29] : memref<216x512xf32, #tpu.memory_space<vmem>>, vector<8x512xf32>
    tpu.vector_store %arg7[%c104, %c0_29], %1 {strides = array<i32>} : memref<216x512xf32, #tpu.memory_space<vmem>>, vector<8x512xf32>,
    %c511_i32 = arith.constant 511 : i32
    %81 = tpu.dynamic_rotate %1 by %c511_i32 dim 1 : vector<8x512xf32>, i32 -> vector<8x512xf32>
    %82 = vector.broadcast %13 : vector<1x512xf32> to vector<8x512xf32>
    %83 = arith.mulf %81, %82 : vector<8x512xf32>
    %c112 = arith.constant 112 : index
    %c0_30 = arith.constant 0 : index
    %84 = vector.load %arg7[%c112, %c0_30] : memref<216x512xf32, #tpu.memory_space<vmem>>, vector<8x512xf32>
    tpu.vector_store %arg7[%c112, %c0_30], %83 {strides = array<i32>} : memref<216x512xf32, #tpu.memory_space<vmem>>, vector<8x512xf32>,
    %c505_i32 = arith.constant 505 : i32
    %85 = tpu.dynamic_rotate %1 by %c505_i32 dim 1 : vector<8x512xf32>, i32 -> vector<8x512xf32>
    %86 = arith.mulf %9, %11 : vector<1x512xf32>
    %87 = vector.broadcast %86 : vector<1x512xf32> to vector<8x512xf32>
    %88 = arith.mulf %85, %87 : vector<8x512xf32>
    %c120 = arith.constant 120 : index
    %c0_31 = arith.constant 0 : index
    %89 = vector.load %arg7[%c120, %c0_31] : memref<216x512xf32, #tpu.memory_space<vmem>>, vector<8x512xf32>
    tpu.vector_store %arg7[%c120, %c0_31], %88 {strides = array<i32>} : memref<216x512xf32, #tpu.memory_space<vmem>>, vector<8x512xf32>,
    %c504_i32 = arith.constant 504 : i32
    %90 = tpu.dynamic_rotate %1 by %c504_i32 dim 1 : vector<8x512xf32>, i32 -> vector<8x512xf32>
    %91 = vector.broadcast %9 : vector<1x512xf32> to vector<8x512xf32>
    %92 = arith.mulf %90, %91 : vector<8x512xf32>
    %c128 = arith.constant 128 : index
    %c0_32 = arith.constant 0 : index
    %93 = vector.load %arg7[%c128, %c0_32] : memref<216x512xf32, #tpu.memory_space<vmem>>, vector<8x512xf32>
    tpu.vector_store %arg7[%c128, %c0_32], %92 {strides = array<i32>} : memref<216x512xf32, #tpu.memory_space<vmem>>, vector<8x512xf32>,
    %c503_i32 = arith.constant 503 : i32
    %94 = tpu.dynamic_rotate %1 by %c503_i32 dim 1 : vector<8x512xf32>, i32 -> vector<8x512xf32>
    %95 = arith.mulf %9, %13 : vector<1x512xf32>
    %96 = vector.broadcast %95 : vector<1x512xf32> to vector<8x512xf32>
    %97 = arith.mulf %94, %96 : vector<8x512xf32>
    %c136 = arith.constant 136 : index
    %c0_33 = arith.constant 0 : index
    %98 = vector.load %arg7[%c136, %c0_33] : memref<216x512xf32, #tpu.memory_space<vmem>>, vector<8x512xf32>
    tpu.vector_store %arg7[%c136, %c0_33], %97 {strides = array<i32>} : memref<216x512xf32, #tpu.memory_space<vmem>>, vector<8x512xf32>,
    %c457_i32 = arith.constant 457 : i32
    %99 = tpu.dynamic_rotate %1 by %c457_i32 dim 1 : vector<8x512xf32>, i32 -> vector<8x512xf32>
    %100 = arith.mulf %5, %7 : vector<1x512xf32>
    %101 = arith.mulf %100, %11 : vector<1x512xf32>
    %102 = vector.broadcast %101 : vector<1x512xf32> to vector<8x512xf32>
    %103 = arith.mulf %99, %102 : vector<8x512xf32>
    %c144 = arith.constant 144 : index
    %c0_34 = arith.constant 0 : index
    %104 = vector.load %arg7[%c144, %c0_34] : memref<216x512xf32, #tpu.memory_space<vmem>>, vector<8x512xf32>
    tpu.vector_store %arg7[%c144, %c0_34], %103 {strides = array<i32>} : memref<216x512xf32, #tpu.memory_space<vmem>>, vector<8x512xf32>,
    %c456_i32 = arith.constant 456 : i32
    %105 = tpu.dynamic_rotate %1 by %c456_i32 dim 1 : vector<8x512xf32>, i32 -> vector<8x512xf32>
    %106 = arith.mulf %5, %7 : vector<1x512xf32>
    %107 = vector.broadcast %106 : vector<1x512xf32> to vector<8x512xf32>
    %108 = arith.mulf %105, %107 : vector<8x512xf32>
    %c152 = arith.constant 152 : index
    %c0_35 = arith.constant 0 : index
    %109 = vector.load %arg7[%c152, %c0_35] : memref<216x512xf32, #tpu.memory_space<vmem>>, vector<8x512xf32>
    tpu.vector_store %arg7[%c152, %c0_35], %108 {strides = array<i32>} : memref<216x512xf32, #tpu.memory_space<vmem>>, vector<8x512xf32>,
    %c455_i32 = arith.constant 455 : i32
    %110 = tpu.dynamic_rotate %1 by %c455_i32 dim 1 : vector<8x512xf32>, i32 -> vector<8x512xf32>
    %111 = arith.mulf %5, %7 : vector<1x512xf32>
    %112 = arith.mulf %111, %13 : vector<1x512xf32>
    %113 = vector.broadcast %112 : vector<1x512xf32> to vector<8x512xf32>
    %114 = arith.mulf %110, %113 : vector<8x512xf32>
    %c160 = arith.constant 160 : index
    %c0_36 = arith.constant 0 : index
    %115 = vector.load %arg7[%c160, %c0_36] : memref<216x512xf32, #tpu.memory_space<vmem>>, vector<8x512xf32>
    tpu.vector_store %arg7[%c160, %c0_36], %114 {strides = array<i32>} : memref<216x512xf32, #tpu.memory_space<vmem>>, vector<8x512xf32>,
    %c449_i32 = arith.constant 449 : i32
    %116 = tpu.dynamic_rotate %1 by %c449_i32 dim 1 : vector<8x512xf32>, i32 -> vector<8x512xf32>
    %117 = arith.mulf %5, %11 : vector<1x512xf32>
    %118 = vector.broadcast %117 : vector<1x512xf32> to vector<8x512xf32>
    %119 = arith.mulf %116, %118 : vector<8x512xf32>
    %c168 = arith.constant 168 : index
    %c0_37 = arith.constant 0 : index
    %120 = vector.load %arg7[%c168, %c0_37] : memref<216x512xf32, #tpu.memory_space<vmem>>, vector<8x512xf32>
    tpu.vector_store %arg7[%c168, %c0_37], %119 {strides = array<i32>} : memref<216x512xf32, #tpu.memory_space<vmem>>, vector<8x512xf32>,
    %c448_i32 = arith.constant 448 : i32
    %121 = tpu.dynamic_rotate %1 by %c448_i32 dim 1 : vector<8x512xf32>, i32 -> vector<8x512xf32>
    %122 = vector.broadcast %5 : vector<1x512xf32> to vector<8x512xf32>
    %123 = arith.mulf %121, %122 : vector<8x512xf32>
    %c176 = arith.constant 176 : index
    %c0_38 = arith.constant 0 : index
    %124 = vector.load %arg7[%c176, %c0_38] : memref<216x512xf32, #tpu.memory_space<vmem>>, vector<8x512xf32>
    tpu.vector_store %arg7[%c176, %c0_38], %123 {strides = array<i32>} : memref<216x512xf32, #tpu.memory_space<vmem>>, vector<8x512xf32>,
    %c447_i32 = arith.constant 447 : i32
    %125 = tpu.dynamic_rotate %1 by %c447_i32 dim 1 : vector<8x512xf32>, i32 -> vector<8x512xf32>
    %126 = arith.mulf %5, %13 : vector<1x512xf32>
    %127 = vector.broadcast %126 : vector<1x512xf32> to vector<8x512xf32>
    %128 = arith.mulf %125, %127 : vector<8x512xf32>
    %c184 = arith.constant 184 : index
    %c0_39 = arith.constant 0 : index
    %129 = vector.load %arg7[%c184, %c0_39] : memref<216x512xf32, #tpu.memory_space<vmem>>, vector<8x512xf32>
    tpu.vector_store %arg7[%c184, %c0_39], %128 {strides = array<i32>} : memref<216x512xf32, #tpu.memory_space<vmem>>, vector<8x512xf32>,
    %c441_i32 = arith.constant 441 : i32
    %130 = tpu.dynamic_rotate %1 by %c441_i32 dim 1 : vector<8x512xf32>, i32 -> vector<8x512xf32>
    %131 = arith.mulf %5, %9 : vector<1x512xf32>
    %132 = arith.mulf %131, %11 : vector<1x512xf32>
    %133 = vector.broadcast %132 : vector<1x512xf32> to vector<8x512xf32>
    %134 = arith.mulf %130, %133 : vector<8x512xf32>
    %c192 = arith.constant 192 : index
    %c0_40 = arith.constant 0 : index
    %135 = vector.load %arg7[%c192, %c0_40] : memref<216x512xf32, #tpu.memory_space<vmem>>, vector<8x512xf32>
    tpu.vector_store %arg7[%c192, %c0_40], %134 {strides = array<i32>} : memref<216x512xf32, #tpu.memory_space<vmem>>, vector<8x512xf32>,
    %c440_i32 = arith.constant 440 : i32
    %136 = tpu.dynamic_rotate %1 by %c440_i32 dim 1 : vector<8x512xf32>, i32 -> vector<8x512xf32>
    %137 = arith.mulf %5, %9 : vector<1x512xf32>
    %138 = vector.broadcast %137 : vector<1x512xf32> to vector<8x512xf32>
    %139 = arith.mulf %136, %138 : vector<8x512xf32>
    %c200 = arith.constant 200 : index
    %c0_41 = arith.constant 0 : index
    %140 = vector.load %arg7[%c200, %c0_41] : memref<216x512xf32, #tpu.memory_space<vmem>>, vector<8x512xf32>
    tpu.vector_store %arg7[%c200, %c0_41], %139 {strides = array<i32>} : memref<216x512xf32, #tpu.memory_space<vmem>>, vector<8x512xf32>,
    %c439_i32 = arith.constant 439 : i32
    %141 = tpu.dynamic_rotate %1 by %c439_i32 dim 1 : vector<8x512xf32>, i32 -> vector<8x512xf32>
    %142 = arith.mulf %5, %9 : vector<1x512xf32>
    %143 = arith.mulf %142, %13 : vector<1x512xf32>
    %144 = vector.broadcast %143 : vector<1x512xf32> to vector<8x512xf32>
    %145 = arith.mulf %141, %144 : vector<8x512xf32>
    %c208 = arith.constant 208 : index
    %c0_42 = arith.constant 0 : index
    %146 = vector.load %arg7[%c208, %c0_42] : memref<216x512xf32, #tpu.memory_space<vmem>>, vector<8x512xf32>
    tpu.vector_store %arg7[%c208, %c0_42], %145 {strides = array<i32>} : memref<216x512xf32, #tpu.memory_space<vmem>>, vector<8x512xf32>,
    %c0_43 = arith.constant 0 : index
    %c0_44 = arith.constant 0 : index
    %147 = vector.load %arg3[%c0_43, %c0_44] : memref<16x216xf32, #tpu.memory_space<vmem>>, vector<16x216xf32>
    %c0_45 = arith.constant 0 : index
    %c0_46 = arith.constant 0 : index
    %148 = vector.load %arg7[%c0_45, %c0_46] : memref<216x512xf32, #tpu.memory_space<vmem>>, vector<216x512xf32>
    %cst = arith.constant dense<0.000000e+00> : vector<16x512xf32>
    %149 = tpu.matmul %147, %148, %cst {dimension_numbers = #tpu.dot_dimension_numbers<[1], [0], [0], [1], [0, 0, 1, 1], [], []>} : vector<16x216xf32>, vector<216x512xf32>, vector<16x512xf32> -> vector<16x512xf32>
    %c0_47 = arith.constant 0 : index
    %c0_48 = arith.constant 0 : index
    %150 = vector.load %arg5[%c0_47, %c0_48] : memref<8x4xf32, #tpu.memory_space<vmem>>, vector<8x4xf32>
    %151 = vector.extract_strided_slice %150 {offsets = [0, 0], sizes = [8, 1], strides = [1, 1]} : vector<8x4xf32> to vector<8x1xf32>
    %152 = vector.extract_strided_slice %150 {offsets = [0, 1], sizes = [8, 1], strides = [1, 1]} : vector<8x4xf32> to vector<8x1xf32>
    %153 = vector.extract_strided_slice %150 {offsets = [0, 2], sizes = [8, 1], strides = [1, 1]} : vector<8x4xf32> to vector<8x1xf32>
    %154 = vector.extract_strided_slice %150 {offsets = [0, 3], sizes = [8, 1], strides = [1, 1]} : vector<8x4xf32> to vector<8x1xf32>
    %155 = vector.extract_strided_slice %149 {offsets = [0, 0], sizes = [8, 512], strides = [1, 1]} : vector<16x512xf32> to vector<8x512xf32>
    %cst_49 = arith.constant dense<0.000000e+00> : vector<8xf32>
    %156 = vector.multi_reduction <add>, %155, %cst_49 [1] : vector<8x512xf32> to vector<8xf32>
    %157 = vector.shape_cast %156 : vector<8xf32> to vector<8x1xf32>
    %cst_50 = arith.constant 5.120000e+02 : f32
    %158 = vector.broadcast %cst_50 : f32 to vector<8x1xf32>
    %159 = arith.divf %157, %158 : vector<8x1xf32>
    %160 = vector.broadcast %159 : vector<8x1xf32> to vector<8x512xf32>
    %161 = arith.subf %155, %160 : vector<8x512xf32>
    %162 = arith.mulf %161, %161 : vector<8x512xf32>
    %cst_51 = arith.constant dense<0.000000e+00> : vector<8xf32>
    %163 = vector.multi_reduction <add>, %162, %cst_51 [1] : vector<8x512xf32> to vector<8xf32>
    %164 = vector.shape_cast %163 : vector<8xf32> to vector<8x1xf32>
    %cst_52 = arith.constant 5.120000e+02 : f32
    %165 = vector.broadcast %cst_52 : f32 to vector<8x1xf32>
    %166 = arith.divf %164, %165 : vector<8x1xf32>
    %167 = vector.broadcast %159 : vector<8x1xf32> to vector<8x512xf32>
    %168 = arith.subf %155, %167 : vector<8x512xf32>
    %cst_53 = arith.constant 9.99999974E-6 : f32
    %169 = vector.broadcast %cst_53 : f32 to vector<8x1xf32>
    %170 = arith.addf %166, %169 : vector<8x1xf32>
    %171 = math.rsqrt %170 : vector<8x1xf32>
    %172 = vector.broadcast %171 : vector<8x1xf32> to vector<8x512xf32>
    %173 = arith.mulf %168, %172 : vector<8x512xf32>
    %174 = vector.broadcast %151 : vector<8x1xf32> to vector<8x512xf32>
    %175 = arith.mulf %173, %174 : vector<8x512xf32>
    %176 = vector.broadcast %152 : vector<8x1xf32> to vector<8x512xf32>
    %177 = arith.addf %175, %176 : vector<8x512xf32>
    %cst_54 = arith.constant 0.000000e+00 : f32
    %178 = vector.broadcast %cst_54 : f32 to vector<8x512xf32>
    %179 = arith.cmpf ogt, %177, %178 : vector<8x512xf32>
    %cst_55 = arith.constant 0.00999999977 : f32
    %180 = vector.broadcast %cst_55 : f32 to vector<8x512xf32>
    %181 = arith.mulf %180, %177 : vector<8x512xf32>
    %182 = arith.select %179, %177, %181 : vector<8x512xi1>, vector<8x512xf32>
    %c0_56 = arith.constant 0 : index
    %c0_57 = arith.constant 0 : index
    %c0_58 = arith.constant 0 : index
    %183 = vector.load %arg2[%c0_56, %c0_57, %c0_58] : memref<6x1x512xf32, #tpu.memory_space<vmem>>, vector<1x1x512xf32>
    %184 = vector.shape_cast %183 : vector<1x1x512xf32> to vector<1x512xf32>
    %c1_59 = arith.constant 1 : index
    %c0_60 = arith.constant 0 : index
    %c0_61 = arith.constant 0 : index
    %185 = vector.load %arg2[%c1_59, %c0_60, %c0_61] : memref<6x1x512xf32, #tpu.memory_space<vmem>>, vector<1x1x512xf32>
    %186 = vector.shape_cast %185 : vector<1x1x512xf32> to vector<1x512xf32>
    %c2_62 = arith.constant 2 : index
    %c0_63 = arith.constant 0 : index
    %c0_64 = arith.constant 0 : index
    %187 = vector.load %arg2[%c2_62, %c0_63, %c0_64] : memref<6x1x512xf32, #tpu.memory_space<vmem>>, vector<1x1x512xf32>
    %188 = vector.shape_cast %187 : vector<1x1x512xf32> to vector<1x512xf32>
    %c3_65 = arith.constant 3 : index
    %c0_66 = arith.constant 0 : index
    %c0_67 = arith.constant 0 : index
    %189 = vector.load %arg2[%c3_65, %c0_66, %c0_67] : memref<6x1x512xf32, #tpu.memory_space<vmem>>, vector<1x1x512xf32>
    %190 = vector.shape_cast %189 : vector<1x1x512xf32> to vector<1x512xf32>
    %c4_68 = arith.constant 4 : index
    %c0_69 = arith.constant 0 : index
    %c0_70 = arith.constant 0 : index
    %191 = vector.load %arg2[%c4_68, %c0_69, %c0_70] : memref<6x1x512xf32, #tpu.memory_space<vmem>>, vector<1x1x512xf32>
    %192 = vector.shape_cast %191 : vector<1x1x512xf32> to vector<1x512xf32>
    %c5_71 = arith.constant 5 : index
    %c0_72 = arith.constant 0 : index
    %c0_73 = arith.constant 0 : index
    %193 = vector.load %arg2[%c5_71, %c0_72, %c0_73] : memref<6x1x512xf32, #tpu.memory_space<vmem>>, vector<1x1x512xf32>
    %194 = vector.shape_cast %193 : vector<1x1x512xf32> to vector<1x512xf32>
    %c73_i32_74 = arith.constant 73 : i32
    %195 = tpu.dynamic_rotate %182 by %c73_i32_74 dim 1 : vector<8x512xf32>, i32 -> vector<8x512xf32>
    %196 = arith.mulf %184, %188 : vector<1x512xf32>
    %197 = arith.mulf %196, %192 : vector<1x512xf32>
    %198 = vector.broadcast %197 : vector<1x512xf32> to vector<8x512xf32>
    %199 = arith.mulf %195, %198 : vector<8x512xf32>
    %c0_75 = arith.constant 0 : index
    %c0_76 = arith.constant 0 : index
    %200 = vector.load %arg7[%c0_75, %c0_76] : memref<216x512xf32, #tpu.memory_space<vmem>>, vector<8x512xf32>
    tpu.vector_store %arg7[%c0_75, %c0_76], %199 {strides = array<i32>} : memref<216x512xf32, #tpu.memory_space<vmem>>, vector<8x512xf32>,
    %c72_i32_77 = arith.constant 72 : i32
    %201 = tpu.dynamic_rotate %182 by %c72_i32_77 dim 1 : vector<8x512xf32>, i32 -> vector<8x512xf32>
    %202 = arith.mulf %184, %188 : vector<1x512xf32>
    %203 = vector.broadcast %202 : vector<1x512xf32> to vector<8x512xf32>
    %204 = arith.mulf %201, %203 : vector<8x512xf32>
    %c8_78 = arith.constant 8 : index
    %c0_79 = arith.constant 0 : index
    %205 = vector.load %arg7[%c8_78, %c0_79] : memref<216x512xf32, #tpu.memory_space<vmem>>, vector<8x512xf32>
    tpu.vector_store %arg7[%c8_78, %c0_79], %204 {strides = array<i32>} : memref<216x512xf32, #tpu.memory_space<vmem>>, vector<8x512xf32>,
    %c71_i32_80 = arith.constant 71 : i32
    %206 = tpu.dynamic_rotate %182 by %c71_i32_80 dim 1 : vector<8x512xf32>, i32 -> vector<8x512xf32>
    %207 = arith.mulf %184, %188 : vector<1x512xf32>
    %208 = arith.mulf %207, %194 : vector<1x512xf32>
    %209 = vector.broadcast %208 : vector<1x512xf32> to vector<8x512xf32>
    %210 = arith.mulf %206, %209 : vector<8x512xf32>
    %c16_81 = arith.constant 16 : index
    %c0_82 = arith.constant 0 : index
    %211 = vector.load %arg7[%c16_81, %c0_82] : memref<216x512xf32, #tpu.memory_space<vmem>>, vector<8x512xf32>
    tpu.vector_store %arg7[%c16_81, %c0_82], %210 {strides = array<i32>} : memref<216x512xf32, #tpu.memory_space<vmem>>, vector<8x512xf32>,
    %c65_i32_83 = arith.constant 65 : i32
    %212 = tpu.dynamic_rotate %182 by %c65_i32_83 dim 1 : vector<8x512xf32>, i32 -> vector<8x512xf32>
    %213 = arith.mulf %184, %192 : vector<1x512xf32>
    %214 = vector.broadcast %213 : vector<1x512xf32> to vector<8x512xf32>
    %215 = arith.mulf %212, %214 : vector<8x512xf32>
    %c24_84 = arith.constant 24 : index
    %c0_85 = arith.constant 0 : index
    %216 = vector.load %arg7[%c24_84, %c0_85] : memref<216x512xf32, #tpu.memory_space<vmem>>, vector<8x512xf32>
    tpu.vector_store %arg7[%c24_84, %c0_85], %215 {strides = array<i32>} : memref<216x512xf32, #tpu.memory_space<vmem>>, vector<8x512xf32>,
    %c64_i32_86 = arith.constant 64 : i32
    %217 = tpu.dynamic_rotate %182 by %c64_i32_86 dim 1 : vector<8x512xf32>, i32 -> vector<8x512xf32>
    %218 = vector.broadcast %184 : vector<1x512xf32> to vector<8x512xf32>
    %219 = arith.mulf %217, %218 : vector<8x512xf32>
    %c32_87 = arith.constant 32 : index
    %c0_88 = arith.constant 0 : index
    %220 = vector.load %arg7[%c32_87, %c0_88] : memref<216x512xf32, #tpu.memory_space<vmem>>, vector<8x512xf32>
    tpu.vector_store %arg7[%c32_87, %c0_88], %219 {strides = array<i32>} : memref<216x512xf32, #tpu.memory_space<vmem>>, vector<8x512xf32>,
    %c63_i32_89 = arith.constant 63 : i32
    %221 = tpu.dynamic_rotate %182 by %c63_i32_89 dim 1 : vector<8x512xf32>, i32 -> vector<8x512xf32>
    %222 = arith.mulf %184, %194 : vector<1x512xf32>
    %223 = vector.broadcast %222 : vector<1x512xf32> to vector<8x512xf32>
    %224 = arith.mulf %221, %223 : vector<8x512xf32>
    %c40_90 = arith.constant 40 : index
    %c0_91 = arith.constant 0 : index
    %225 = vector.load %arg7[%c40_90, %c0_91] : memref<216x512xf32, #tpu.memory_space<vmem>>, vector<8x512xf32>
    tpu.vector_store %arg7[%c40_90, %c0_91], %224 {strides = array<i32>} : memref<216x512xf32, #tpu.memory_space<vmem>>, vector<8x512xf32>,
    %c57_i32_92 = arith.constant 57 : i32
    %226 = tpu.dynamic_rotate %182 by %c57_i32_92 dim 1 : vector<8x512xf32>, i32 -> vector<8x512xf32>
    %227 = arith.mulf %184, %190 : vector<1x512xf32>
    %228 = arith.mulf %227, %192 : vector<1x512xf32>
    %229 = vector.broadcast %228 : vector<1x512xf32> to vector<8x512xf32>
    %230 = arith.mulf %226, %229 : vector<8x512xf32>
    %c48_93 = arith.constant 48 : index
    %c0_94 = arith.constant 0 : index
    %231 = vector.load %arg7[%c48_93, %c0_94] : memref<216x512xf32, #tpu.memory_space<vmem>>, vector<8x512xf32>
    tpu.vector_store %arg7[%c48_93, %c0_94], %230 {strides = array<i32>} : memref<216x512xf32, #tpu.memory_space<vmem>>, vector<8x512xf32>,
    %c56_i32_95 = arith.constant 56 : i32
    %232 = tpu.dynamic_rotate %182 by %c56_i32_95 dim 1 : vector<8x512xf32>, i32 -> vector<8x512xf32>
    %233 = arith.mulf %184, %190 : vector<1x512xf32>
    %234 = vector.broadcast %233 : vector<1x512xf32> to vector<8x512xf32>
    %235 = arith.mulf %232, %234 : vector<8x512xf32>
    %c56_96 = arith.constant 56 : index
    %c0_97 = arith.constant 0 : index
    %236 = vector.load %arg7[%c56_96, %c0_97] : memref<216x512xf32, #tpu.memory_space<vmem>>, vector<8x512xf32>
    tpu.vector_store %arg7[%c56_96, %c0_97], %235 {strides = array<i32>} : memref<216x512xf32, #tpu.memory_space<vmem>>, vector<8x512xf32>,
    %c55_i32_98 = arith.constant 55 : i32
    %237 = tpu.dynamic_rotate %182 by %c55_i32_98 dim 1 : vector<8x512xf32>, i32 -> vector<8x512xf32>
    %238 = arith.mulf %184, %190 : vector<1x512xf32>
    %239 = arith.mulf %238, %194 : vector<1x512xf32>
    %240 = vector.broadcast %239 : vector<1x512xf32> to vector<8x512xf32>
    %241 = arith.mulf %237, %240 : vector<8x512xf32>
    %c64_99 = arith.constant 64 : index
    %c0_100 = arith.constant 0 : index
    %242 = vector.load %arg7[%c64_99, %c0_100] : memref<216x512xf32, #tpu.memory_space<vmem>>, vector<8x512xf32>
    tpu.vector_store %arg7[%c64_99, %c0_100], %241 {strides = array<i32>} : memref<216x512xf32, #tpu.memory_space<vmem>>, vector<8x512xf32>,
    %c9_i32_101 = arith.constant 9 : i32
    %243 = tpu.dynamic_rotate %182 by %c9_i32_101 dim 1 : vector<8x512xf32>, i32 -> vector<8x512xf32>
    %244 = arith.mulf %188, %192 : vector<1x512xf32>
    %245 = vector.broadcast %244 : vector<1x512xf32> to vector<8x512xf32>
    %246 = arith.mulf %243, %245 : vector<8x512xf32>
    %c72_102 = arith.constant 72 : index
    %c0_103 = arith.constant 0 : index
    %247 = vector.load %arg7[%c72_102, %c0_103] : memref<216x512xf32, #tpu.memory_space<vmem>>, vector<8x512xf32>
    tpu.vector_store %arg7[%c72_102, %c0_103], %246 {strides = array<i32>} : memref<216x512xf32, #tpu.memory_space<vmem>>, vector<8x512xf32>,
    %c8_i32_104 = arith.constant 8 : i32
    %248 = tpu.dynamic_rotate %182 by %c8_i32_104 dim 1 : vector<8x512xf32>, i32 -> vector<8x512xf32>
    %249 = vector.broadcast %188 : vector<1x512xf32> to vector<8x512xf32>
    %250 = arith.mulf %248, %249 : vector<8x512xf32>
    %c80_105 = arith.constant 80 : index
    %c0_106 = arith.constant 0 : index
    %251 = vector.load %arg7[%c80_105, %c0_106] : memref<216x512xf32, #tpu.memory_space<vmem>>, vector<8x512xf32>
    tpu.vector_store %arg7[%c80_105, %c0_106], %250 {strides = array<i32>} : memref<216x512xf32, #tpu.memory_space<vmem>>, vector<8x512xf32>,
    %c7_i32_107 = arith.constant 7 : i32
    %252 = tpu.dynamic_rotate %182 by %c7_i32_107 dim 1 : vector<8x512xf32>, i32 -> vector<8x512xf32>
    %253 = arith.mulf %188, %194 : vector<1x512xf32>
    %254 = vector.broadcast %253 : vector<1x512xf32> to vector<8x512xf32>
    %255 = arith.mulf %252, %254 : vector<8x512xf32>
    %c88_108 = arith.constant 88 : index
    %c0_109 = arith.constant 0 : index
    %256 = vector.load %arg7[%c88_108, %c0_109] : memref<216x512xf32, #tpu.memory_space<vmem>>, vector<8x512xf32>
    tpu.vector_store %arg7[%c88_108, %c0_109], %255 {strides = array<i32>} : memref<216x512xf32, #tpu.memory_space<vmem>>, vector<8x512xf32>,
    %c1_i32_110 = arith.constant 1 : i32
    %257 = tpu.dynamic_rotate %182 by %c1_i32_110 dim 1 : vector<8x512xf32>, i32 -> vector<8x512xf32>
    %258 = vector.broadcast %192 : vector<1x512xf32> to vector<8x512xf32>
    %259 = arith.mulf %257, %258 : vector<8x512xf32>
    %c96_111 = arith.constant 96 : index
    %c0_112 = arith.constant 0 : index
    %260 = vector.load %arg7[%c96_111, %c0_112] : memref<216x512xf32, #tpu.memory_space<vmem>>, vector<8x512xf32>
    tpu.vector_store %arg7[%c96_111, %c0_112], %259 {strides = array<i32>} : memref<216x512xf32, #tpu.memory_space<vmem>>, vector<8x512xf32>,
    %c104_113 = arith.constant 104 : index
    %c0_114 = arith.constant 0 : index
    %261 = vector.load %arg7[%c104_113, %c0_114] : memref<216x512xf32, #tpu.memory_space<vmem>>, vector<8x512xf32>
    tpu.vector_store %arg7[%c104_113, %c0_114], %182 {strides = array<i32>} : memref<216x512xf32, #tpu.memory_space<vmem>>, vector<8x512xf32>,
    %c511_i32_115 = arith.constant 511 : i32
    %262 = tpu.dynamic_rotate %182 by %c511_i32_115 dim 1 : vector<8x512xf32>, i32 -> vector<8x512xf32>
    %263 = vector.broadcast %194 : vector<1x512xf32> to vector<8x512xf32>
    %264 = arith.mulf %262, %263 : vector<8x512xf32>
    %c112_116 = arith.constant 112 : index
    %c0_117 = arith.constant 0 : index
    %265 = vector.load %arg7[%c112_116, %c0_117] : memref<216x512xf32, #tpu.memory_space<vmem>>, vector<8x512xf32>
    tpu.vector_store %arg7[%c112_116, %c0_117], %264 {strides = array<i32>} : memref<216x512xf32, #tpu.memory_space<vmem>>, vector<8x512xf32>,
    %c505_i32_118 = arith.constant 505 : i32
    %266 = tpu.dynamic_rotate %182 by %c505_i32_118 dim 1 : vector<8x512xf32>, i32 -> vector<8x512xf32>
    %267 = arith.mulf %190, %192 : vector<1x512xf32>
    %268 = vector.broadcast %267 : vector<1x512xf32> to vector<8x512xf32>
    %269 = arith.mulf %266, %268 : vector<8x512xf32>
    %c120_119 = arith.constant 120 : index
    %c0_120 = arith.constant 0 : index
    %270 = vector.load %arg7[%c120_119, %c0_120] : memref<216x512xf32, #tpu.memory_space<vmem>>, vector<8x512xf32>
    tpu.vector_store %arg7[%c120_119, %c0_120], %269 {strides = array<i32>} : memref<216x512xf32, #tpu.memory_space<vmem>>, vector<8x512xf32>,
    %c504_i32_121 = arith.constant 504 : i32
    %271 = tpu.dynamic_rotate %182 by %c504_i32_121 dim 1 : vector<8x512xf32>, i32 -> vector<8x512xf32>
    %272 = vector.broadcast %190 : vector<1x512xf32> to vector<8x512xf32>
    %273 = arith.mulf %271, %272 : vector<8x512xf32>
    %c128_122 = arith.constant 128 : index
    %c0_123 = arith.constant 0 : index
    %274 = vector.load %arg7[%c128_122, %c0_123] : memref<216x512xf32, #tpu.memory_space<vmem>>, vector<8x512xf32>
    tpu.vector_store %arg7[%c128_122, %c0_123], %273 {strides = array<i32>} : memref<216x512xf32, #tpu.memory_space<vmem>>, vector<8x512xf32>,
    %c503_i32_124 = arith.constant 503 : i32
    %275 = tpu.dynamic_rotate %182 by %c503_i32_124 dim 1 : vector<8x512xf32>, i32 -> vector<8x512xf32>
    %276 = arith.mulf %190, %194 : vector<1x512xf32>
    %277 = vector.broadcast %276 : vector<1x512xf32> to vector<8x512xf32>
    %278 = arith.mulf %275, %277 : vector<8x512xf32>
    %c136_125 = arith.constant 136 : index
    %c0_126 = arith.constant 0 : index
    %279 = vector.load %arg7[%c136_125, %c0_126] : memref<216x512xf32, #tpu.memory_space<vmem>>, vector<8x512xf32>
    tpu.vector_store %arg7[%c136_125, %c0_126], %278 {strides = array<i32>} : memref<216x512xf32, #tpu.memory_space<vmem>>, vector<8x512xf32>,
    %c457_i32_127 = arith.constant 457 : i32
    %280 = tpu.dynamic_rotate %182 by %c457_i32_127 dim 1 : vector<8x512xf32>, i32 -> vector<8x512xf32>
    %281 = arith.mulf %186, %188 : vector<1x512xf32>
    %282 = arith.mulf %281, %192 : vector<1x512xf32>
    %283 = vector.broadcast %282 : vector<1x512xf32> to vector<8x512xf32>
    %284 = arith.mulf %280, %283 : vector<8x512xf32>
    %c144_128 = arith.constant 144 : index
    %c0_129 = arith.constant 0 : index
    %285 = vector.load %arg7[%c144_128, %c0_129] : memref<216x512xf32, #tpu.memory_space<vmem>>, vector<8x512xf32>
    tpu.vector_store %arg7[%c144_128, %c0_129], %284 {strides = array<i32>} : memref<216x512xf32, #tpu.memory_space<vmem>>, vector<8x512xf32>,
    %c456_i32_130 = arith.constant 456 : i32
    %286 = tpu.dynamic_rotate %182 by %c456_i32_130 dim 1 : vector<8x512xf32>, i32 -> vector<8x512xf32>
    %287 = arith.mulf %186, %188 : vector<1x512xf32>
    %288 = vector.broadcast %287 : vector<1x512xf32> to vector<8x512xf32>
    %289 = arith.mulf %286, %288 : vector<8x512xf32>
    %c152_131 = arith.constant 152 : index
    %c0_132 = arith.constant 0 : index
    %290 = vector.load %arg7[%c152_131, %c0_132] : memref<216x512xf32, #tpu.memory_space<vmem>>, vector<8x512xf32>
    tpu.vector_store %arg7[%c152_131, %c0_132], %289 {strides = array<i32>} : memref<216x512xf32, #tpu.memory_space<vmem>>, vector<8x512xf32>,
    %c455_i32_133 = arith.constant 455 : i32
    %291 = tpu.dynamic_rotate %182 by %c455_i32_133 dim 1 : vector<8x512xf32>, i32 -> vector<8x512xf32>
    %292 = arith.mulf %186, %188 : vector<1x512xf32>
    %293 = arith.mulf %292, %194 : vector<1x512xf32>
    %294 = vector.broadcast %293 : vector<1x512xf32> to vector<8x512xf32>
    %295 = arith.mulf %291, %294 : vector<8x512xf32>
    %c160_134 = arith.constant 160 : index
    %c0_135 = arith.constant 0 : index
    %296 = vector.load %arg7[%c160_134, %c0_135] : memref<216x512xf32, #tpu.memory_space<vmem>>, vector<8x512xf32>
    tpu.vector_store %arg7[%c160_134, %c0_135], %295 {strides = array<i32>} : memref<216x512xf32, #tpu.memory_space<vmem>>, vector<8x512xf32>,
    %c449_i32_136 = arith.constant 449 : i32
    %297 = tpu.dynamic_rotate %182 by %c449_i32_136 dim 1 : vector<8x512xf32>, i32 -> vector<8x512xf32>
    %298 = arith.mulf %186, %192 : vector<1x512xf32>
    %299 = vector.broadcast %298 : vector<1x512xf32> to vector<8x512xf32>
    %300 = arith.mulf %297, %299 : vector<8x512xf32>
    %c168_137 = arith.constant 168 : index
    %c0_138 = arith.constant 0 : index
    %301 = vector.load %arg7[%c168_137, %c0_138] : memref<216x512xf32, #tpu.memory_space<vmem>>, vector<8x512xf32>
    tpu.vector_store %arg7[%c168_137, %c0_138], %300 {strides = array<i32>} : memref<216x512xf32, #tpu.memory_space<vmem>>, vector<8x512xf32>,
    %c448_i32_139 = arith.constant 448 : i32
    %302 = tpu.dynamic_rotate %182 by %c448_i32_139 dim 1 : vector<8x512xf32>, i32 -> vector<8x512xf32>
    %303 = vector.broadcast %186 : vector<1x512xf32> to vector<8x512xf32>
    %304 = arith.mulf %302, %303 : vector<8x512xf32>
    %c176_140 = arith.constant 176 : index
    %c0_141 = arith.constant 0 : index
    %305 = vector.load %arg7[%c176_140, %c0_141] : memref<216x512xf32, #tpu.memory_space<vmem>>, vector<8x512xf32>
    tpu.vector_store %arg7[%c176_140, %c0_141], %304 {strides = array<i32>} : memref<216x512xf32, #tpu.memory_space<vmem>>, vector<8x512xf32>,
    %c447_i32_142 = arith.constant 447 : i32
    %306 = tpu.dynamic_rotate %182 by %c447_i32_142 dim 1 : vector<8x512xf32>, i32 -> vector<8x512xf32>
    %307 = arith.mulf %186, %194 : vector<1x512xf32>
    %308 = vector.broadcast %307 : vector<1x512xf32> to vector<8x512xf32>
    %309 = arith.mulf %306, %308 : vector<8x512xf32>
    %c184_143 = arith.constant 184 : index
    %c0_144 = arith.constant 0 : index
    %310 = vector.load %arg7[%c184_143, %c0_144] : memref<216x512xf32, #tpu.memory_space<vmem>>, vector<8x512xf32>
    tpu.vector_store %arg7[%c184_143, %c0_144], %309 {strides = array<i32>} : memref<216x512xf32, #tpu.memory_space<vmem>>, vector<8x512xf32>,
    %c441_i32_145 = arith.constant 441 : i32
    %311 = tpu.dynamic_rotate %182 by %c441_i32_145 dim 1 : vector<8x512xf32>, i32 -> vector<8x512xf32>
    %312 = arith.mulf %186, %190 : vector<1x512xf32>
    %313 = arith.mulf %312, %192 : vector<1x512xf32>
    %314 = vector.broadcast %313 : vector<1x512xf32> to vector<8x512xf32>
    %315 = arith.mulf %311, %314 : vector<8x512xf32>
    %c192_146 = arith.constant 192 : index
    %c0_147 = arith.constant 0 : index
    %316 = vector.load %arg7[%c192_146, %c0_147] : memref<216x512xf32, #tpu.memory_space<vmem>>, vector<8x512xf32>
    tpu.vector_store %arg7[%c192_146, %c0_147], %315 {strides = array<i32>} : memref<216x512xf32, #tpu.memory_space<vmem>>, vector<8x512xf32>,
    %c440_i32_148 = arith.constant 440 : i32
    %317 = tpu.dynamic_rotate %182 by %c440_i32_148 dim 1 : vector<8x512xf32>, i32 -> vector<8x512xf32>
    %318 = arith.mulf %186, %190 : vector<1x512xf32>
    %319 = vector.broadcast %318 : vector<1x512xf32> to vector<8x512xf32>
    %320 = arith.mulf %317, %319 : vector<8x512xf32>
    %c200_149 = arith.constant 200 : index
    %c0_150 = arith.constant 0 : index
    %321 = vector.load %arg7[%c200_149, %c0_150] : memref<216x512xf32, #tpu.memory_space<vmem>>, vector<8x512xf32>
    tpu.vector_store %arg7[%c200_149, %c0_150], %320 {strides = array<i32>} : memref<216x512xf32, #tpu.memory_space<vmem>>, vector<8x512xf32>,
    %c439_i32_151 = arith.constant 439 : i32
    %322 = tpu.dynamic_rotate %182 by %c439_i32_151 dim 1 : vector<8x512xf32>, i32 -> vector<8x512xf32>
    %323 = arith.mulf %186, %190 : vector<1x512xf32>
    %324 = arith.mulf %323, %194 : vector<1x512xf32>
    %325 = vector.broadcast %324 : vector<1x512xf32> to vector<8x512xf32>
    %326 = arith.mulf %322, %325 : vector<8x512xf32>
    %c208_152 = arith.constant 208 : index
    %c0_153 = arith.constant 0 : index
    %327 = vector.load %arg7[%c208_152, %c0_153] : memref<216x512xf32, #tpu.memory_space<vmem>>, vector<8x512xf32>
    tpu.vector_store %arg7[%c208_152, %c0_153], %326 {strides = array<i32>} : memref<216x512xf32, #tpu.memory_space<vmem>>, vector<8x512xf32>,
    %c0_154 = arith.constant 0 : index
    %c0_155 = arith.constant 0 : index
    %328 = vector.load %arg4[%c0_154, %c0_155] : memref<8x216xf32, #tpu.memory_space<vmem>>, vector<8x216xf32>
    %c0_156 = arith.constant 0 : index
    %c0_157 = arith.constant 0 : index
    %329 = vector.load %arg7[%c0_156, %c0_157] : memref<216x512xf32, #tpu.memory_space<vmem>>, vector<216x512xf32>
    %cst_158 = arith.constant dense<0.000000e+00> : vector<8x512xf32>
    %330 = tpu.matmul %328, %329, %cst_158 {dimension_numbers = #tpu.dot_dimension_numbers<[1], [0], [0], [1], [0, 0, 1, 1], [], []>} : vector<8x216xf32>, vector<216x512xf32>, vector<8x512xf32> -> vector<8x512xf32>
    %cst_159 = arith.constant dense<0.000000e+00> : vector<8xf32>
    %331 = vector.multi_reduction <add>, %330, %cst_159 [1] : vector<8x512xf32> to vector<8xf32>
    %332 = vector.shape_cast %331 : vector<8xf32> to vector<8x1xf32>
    %cst_160 = arith.constant 5.120000e+02 : f32
    %333 = vector.broadcast %cst_160 : f32 to vector<8x1xf32>
    %334 = arith.divf %332, %333 : vector<8x1xf32>
    %335 = vector.broadcast %334 : vector<8x1xf32> to vector<8x512xf32>
    %336 = arith.subf %330, %335 : vector<8x512xf32>
    %337 = arith.mulf %336, %336 : vector<8x512xf32>
    %cst_161 = arith.constant dense<0.000000e+00> : vector<8xf32>
    %338 = vector.multi_reduction <add>, %337, %cst_161 [1] : vector<8x512xf32> to vector<8xf32>
    %339 = vector.shape_cast %338 : vector<8xf32> to vector<8x1xf32>
    %cst_162 = arith.constant 5.120000e+02 : f32
    %340 = vector.broadcast %cst_162 : f32 to vector<8x1xf32>
    %341 = arith.divf %339, %340 : vector<8x1xf32>
    %342 = vector.broadcast %334 : vector<8x1xf32> to vector<8x512xf32>
    %343 = arith.subf %330, %342 : vector<8x512xf32>
    %cst_163 = arith.constant 9.99999974E-6 : f32
    %344 = vector.broadcast %cst_163 : f32 to vector<8x1xf32>
    %345 = arith.addf %341, %344 : vector<8x1xf32>
    %346 = math.rsqrt %345 : vector<8x1xf32>
    %347 = vector.broadcast %346 : vector<8x1xf32> to vector<8x512xf32>
    %348 = arith.mulf %343, %347 : vector<8x512xf32>
    %349 = vector.broadcast %153 : vector<8x1xf32> to vector<8x512xf32>
    %350 = arith.mulf %348, %349 : vector<8x512xf32>
    %351 = vector.broadcast %154 : vector<8x1xf32> to vector<8x512xf32>
    %352 = arith.addf %350, %351 : vector<8x512xf32>
    %353 = vector.extract_strided_slice %149 {offsets = [8, 0], sizes = [8, 512], strides = [1, 1]} : vector<16x512xf32> to vector<8x512xf32>
    %cst_164 = arith.constant dense<0.000000e+00> : vector<8xf32>
    %354 = vector.multi_reduction <add>, %353, %cst_164 [1] : vector<8x512xf32> to vector<8xf32>
    %355 = vector.shape_cast %354 : vector<8xf32> to vector<8x1xf32>
    %cst_165 = arith.constant 5.120000e+02 : f32
    %356 = vector.broadcast %cst_165 : f32 to vector<8x1xf32>
    %357 = arith.divf %355, %356 : vector<8x1xf32>
    %358 = vector.broadcast %357 : vector<8x1xf32> to vector<8x512xf32>
    %359 = arith.subf %353, %358 : vector<8x512xf32>
    %360 = arith.mulf %359, %359 : vector<8x512xf32>
    %cst_166 = arith.constant dense<0.000000e+00> : vector<8xf32>
    %361 = vector.multi_reduction <add>, %360, %cst_166 [1] : vector<8x512xf32> to vector<8xf32>
    %362 = vector.shape_cast %361 : vector<8xf32> to vector<8x1xf32>
    %cst_167 = arith.constant 5.120000e+02 : f32
    %363 = vector.broadcast %cst_167 : f32 to vector<8x1xf32>
    %364 = arith.divf %362, %363 : vector<8x1xf32>
    %365 = vector.broadcast %357 : vector<8x1xf32> to vector<8x512xf32>
    %366 = arith.subf %353, %365 : vector<8x512xf32>
    %cst_168 = arith.constant 9.99999974E-6 : f32
    %367 = vector.broadcast %cst_168 : f32 to vector<8x1xf32>
    %368 = arith.addf %364, %367 : vector<8x1xf32>
    %369 = math.rsqrt %368 : vector<8x1xf32>
    %370 = vector.broadcast %369 : vector<8x1xf32> to vector<8x512xf32>
    %371 = arith.mulf %366, %370 : vector<8x512xf32>
    %372 = arith.addf %352, %371 : vector<8x512xf32>
    %cst_169 = arith.constant 0.000000e+00 : f32
    %373 = vector.broadcast %cst_169 : f32 to vector<8x512xf32>
    %374 = arith.cmpf ogt, %372, %373 : vector<8x512xf32>
    %cst_170 = arith.constant 0.00999999977 : f32
    %375 = vector.broadcast %cst_170 : f32 to vector<8x512xf32>
    %376 = arith.mulf %375, %372 : vector<8x512xf32>
    %377 = arith.select %374, %372, %376 : vector<8x512xi1>, vector<8x512xf32>
    %c0_171 = arith.constant 0 : index
    %c0_172 = arith.constant 0 : index
    %c0_173 = arith.constant 0 : index
    %378 = vector.load %arg6[%c0_171, %c0_172, %c0_173] : memref<1x8x512xf32, #tpu.memory_space<vmem>>, vector<1x8x512xf32>
    %379 = vector.shape_cast %378 : vector<1x8x512xf32> to vector<8x512xf32>
    %380 = vector.shape_cast %377 : vector<8x512xf32> to vector<1x8x512xf32>
    tpu.vector_store %arg6[%c0_171, %c0_172, %c0_173], %380 {strides = array<i32>} : memref<1x8x512xf32, #tpu.memory_space<vmem>>, vector<1x8x512xf32>,
    return
  }
  func.func @transform_0(%arg0: i32) -> (i32, i32, i32) {
    %c0_i32 = arith.constant 0 : i32
    %c0_i32_0 = arith.constant 0 : i32
    %c0_i32_1 = arith.constant 0 : i32
    return %arg0, %c0_i32, %c0_i32_0 : i32, i32, i32
  }
  func.func @transform_1(%arg0: i32) -> (i32, i32, i32) {
    %c0_i32 = arith.constant 0 : i32
    %c0_i32_0 = arith.constant 0 : i32
    %c0_i32_1 = arith.constant 0 : i32
    %c0_i32_2 = arith.constant 0 : i32
    return %c0_i32, %c0_i32_0, %c0_i32_1 : i32, i32, i32
  }
  func.func @transform_2(%arg0: i32) -> (i32, i32) {
    %c0_i32 = arith.constant 0 : i32
    %c0_i32_0 = arith.constant 0 : i32
    %c0_i32_1 = arith.constant 0 : i32
    return %c0_i32, %c0_i32_0 : i32, i32
  }
  func.func @transform_3(%arg0: i32) -> (i32, i32) {
    %c0_i32 = arith.constant 0 : i32
    %c0_i32_0 = arith.constant 0 : i32
    %c0_i32_1 = arith.constant 0 : i32
    return %c0_i32, %c0_i32_0 : i32, i32
  }
  func.func @transform_4(%arg0: i32) -> (i32, i32) {
    %c0_i32 = arith.constant 0 : i32
    %c0_i32_0 = arith.constant 0 : i32
    %c0_i32_1 = arith.constant 0 : i32
    return %c0_i32, %c0_i32_0 : i32, i32
  }
  func.func @transform_5(%arg0: i32) -> (i32, i32, i32) {
    %c0_i32 = arith.constant 0 : i32
    %c0_i32_0 = arith.constant 0 : i32
    %c0_i32_1 = arith.constant 0 : i32
    return %arg0, %c0_i32, %c0_i32_0 : i32, i32, i32
  }
}

</mosaic_0001>

<llo_original>
// kernel: de_ssf_block.1
$region0: #{de_ssf_block.1}
  #allocation0 [shape = 'u32[]', space=smem, size = 0x4, offset = 0x4, fixed_abs, tag = 'smem constant byte address 0x4 - core index']
  #allocation1 [shape = 'u32[72,128]{1,0:T(1,128)}', space=vmem, size = 0x9000, scoped, tag = 'internal scratch']
  #allocation2 [shape = 'f32[216,512]{1,0:T(8,128)}', space=vmem, size = 0x6c000, scoped, tag = 'scratch operand']
  %s0 = inlined_call_operand.vmem [shape: f32[2,8,512], index: 0, kind: input, shape index: {}]
  %s1 = inlined_call_operand.vmem [shape: f32[6,1,512], index: 1, kind: input, shape index: {}]
  %s2 = inlined_call_operand.vmem [shape: f32[16,216], index: 2, kind: input, shape index: {}]
  %s3 = inlined_call_operand.vmem [shape: f32[8,216], index: 3, kind: input, shape index: {}]
  %s4 = inlined_call_operand.vmem [shape: f32[8,4], index: 4, kind: input, shape index: {}]
  %s5 = inlined_call_operand.vmem [shape: f32[2,8,512], index: 5, kind: output, shape index: {}]
  %s6 = sld [smem:[#allocation0]]
  $region53: #{de_ssf_block.1} parent=0
    _
  %s8 = ssub.s32 1, %s6
  %s9 = scalar_select 0, %s8, %s6
  loop: start=0, step=1, limit=4
  $region2: #{de_ssf_block.1} parent=0 // loop_pre_header
    _
  $region3: #{de_ssf_block.1} parent=0 // loop_header
    %s11 = sphi 0, %s15
    %p12 = scmp.ge.s32.totalorder %s11, 4
    %s21 = sphi 0, %s23
    %s24 = sphi 0, %s21
    %s25 = sphi 0, %s24
    %s41 = sphi 0, %s25
    %s45 = sphi 0, %s45
    %s47 = sphi 0, %s45
    %s48 = sphi 0, %s47
    %s62 = sphi 0, %s48
    %s66 = sphi 0, %s66
    %s68 = sphi 0, %s66
    %s69 = sphi 0, %s68
    %s83 = sphi 0, %s69
    %s87 = sphi 0, %s87
    %s89 = sphi 0, %s87
    %s90 = sphi 0, %s89
    %s104 = sphi 0, %s90
    %s108 = sphi 0, %s108
    %s110 = sphi 0, %s108
    %s111 = sphi 0, %s110
    %s125 = sphi 0, %s111
    %s131 = sphi 0, %s133
    %s134 = sphi 0, %s131
    %s135 = sphi 0, %s134
    %s151 = sphi 0, %s135
  $region4: #{de_ssf_block.1} parent=0 // loop_header_branch
    %14 = sbr.rel (%p12) target = $region8
  $region5: #{de_ssf_block.1} parent=0 // loop_body
    %s16 = ssub.s32 %s11, 1
    %s17 = ssub.s32 %s11, 2
    %s18 = sadd.s32 %s11, 1
    %s19 = ssub.s32 %s11, %s18
    %p20 = scmp.eq.s32.totalorder %s19, 0
    %s22 = sadd.s32 %s21, 1
    %s23 = scalar_select %p20, %s21, %s22
    %p26 = pneg %p20
    %p27 = scmp.eq.s32.totalorder %s11, 1
    %p28 = por %p26, %p27
    %p29 = scmp.ne.s32.totalorder %s21, %s24
    %p30 = scmp.eq.s32.totalorder %s11, 0
    %p31 = por %p29, %p30
    %p32 = scmp.ne.s32.totalorder %s21, %s24
    %p33 = scmp.eq.s32.totalorder %s16, 1
    %p34 = por %p32, %p33
    %p35 = scmp.ne.s32.totalorder %s24, %s25
    %p36 = scmp.eq.s32.totalorder %s16, 0
    %p37 = por %p35, %p36
    %p38 = scmp.ne.s32.totalorder %s24, %s25
    %p39 = scmp.eq.s32.totalorder %s17, 1
    %p40 = por %p38, %p39
    %p42 = scmp.ne.s32.totalorder %s25, %s41
    %p43 = scmp.eq.s32.totalorder %s17, 0
    %p44 = por %p42, %p43
    %s46 = sadd.s32 %s45, 1
    %p49 = scmp.eq.s32.totalorder %s11, 1
    %p50 = scmp.ne.s32.totalorder %s45, %s47
    %p51 = scmp.eq.s32.totalorder %s11, 0
    %p52 = por %p50, %p51
    %p53 = scmp.ne.s32.totalorder %s45, %s47
    %p54 = scmp.eq.s32.totalorder %s16, 1
    %p55 = por %p53, %p54
    %p56 = scmp.ne.s32.totalorder %s47, %s48
    %p57 = scmp.eq.s32.totalorder %s16, 0
    %p58 = por %p56, %p57
    %p59 = scmp.ne.s32.totalorder %s47, %s48
    %p60 = scmp.eq.s32.totalorder %s17, 1
    %p61 = por %p59, %p60
    %p63 = scmp.ne.s32.totalorder %s48, %s62
    %p64 = scmp.eq.s32.totalorder %s17, 0
    %p65 = por %p63, %p64
    %s67 = sadd.s32 %s66, 1
    %p70 = scmp.eq.s32.totalorder %s11, 1
    %p71 = scmp.ne.s32.totalorder %s66, %s68
    %p72 = scmp.eq.s32.totalorder %s11, 0
    %p73 = por %p71, %p72
    %p74 = scmp.ne.s32.totalorder %s66, %s68
    %p75 = scmp.eq.s32.totalorder %s16, 1
    %p76 = por %p74, %p75
    %p77 = scmp.ne.s32.totalorder %s68, %s69
    %p78 = scmp.eq.s32.totalorder %s16, 0
    %p79 = por %p77, %p78
    %p80 = scmp.ne.s32.totalorder %s68, %s69
    %p81 = scmp.eq.s32.totalorder %s17, 1
    %p82 = por %p80, %p81
    %p84 = scmp.ne.s32.totalorder %s69, %s83
    %p85 = scmp.eq.s32.totalorder %s17, 0
    %p86 = por %p84, %p85
    %s88 = sadd.s32 %s87, 1
    %p91 = scmp.eq.s32.totalorder %s11, 1
    %p92 = scmp.ne.s32.totalorder %s87, %s89
    %p93 = scmp.eq.s32.totalorder %s11, 0
    %p94 = por %p92, %p93
    %p95 = scmp.ne.s32.totalorder %s87, %s89
    %p96 = scmp.eq.s32.totalorder %s16, 1
    %p97 = por %p95, %p96
    %p98 = scmp.ne.s32.totalorder %s89, %s90
    %p99 = scmp.eq.s32.totalorder %s16, 0
    %p100 = por %p98, %p99
    %p101 = scmp.ne.s32.totalorder %s89, %s90
    %p102 = scmp.eq.s32.totalorder %s17, 1
    %p103 = por %p101, %p102
    %p105 = scmp.ne.s32.totalorder %s90, %s104
    %p106 = scmp.eq.s32.totalorder %s17, 0
    %p107 = por %p105, %p106
    %s109 = sadd.s32 %s108, 1
    %p112 = scmp.eq.s32.totalorder %s11, 1
    %p113 = scmp.ne.s32.totalorder %s108, %s110
    %p114 = scmp.eq.s32.totalorder %s11, 0
    %p115 = por %p113, %p114
    %p116 = scmp.ne.s32.totalorder %s108, %s110
    %p117 = scmp.eq.s32.totalorder %s16, 1
    %p118 = por %p116, %p117
    %p119 = scmp.ne.s32.totalorder %s110, %s111
    %p120 = scmp.eq.s32.totalorder %s16, 0
    %p121 = por %p119, %p120
    %p122 = scmp.ne.s32.totalorder %s110, %s111
    %p123 = scmp.eq.s32.totalorder %s17, 1
    %p124 = por %p122, %p123
    %p126 = scmp.ne.s32.totalorder %s111, %s125
    %p127 = scmp.eq.s32.totalorder %s17, 0
    %p128 = por %p126, %p127
    %s129 = ssub.s32 %s11, %s18
    %p130 = scmp.eq.s32.totalorder %s129, 0
    %s132 = sadd.s32 %s131, 1
    %s133 = scalar_select %p130, %s131, %s132
    %p136 = pneg %p130
    %p137 = scmp.eq.s32.totalorder %s11, 1
    %p138 = por %p136, %p137
    %p139 = scmp.ne.s32.totalorder %s131, %s134
    %p140 = scmp.eq.s32.totalorder %s11, 0
    %p141 = por %p139, %p140
    %p142 = scmp.ne.s32.totalorder %s131, %s134
    %p143 = scmp.eq.s32.totalorder %s16, 1
    %p144 = por %p142, %p143
    %p145 = scmp.ne.s32.totalorder %s134, %s135
    %p146 = scmp.eq.s32.totalorder %s16, 0
    %p147 = por %p145, %p146
    %p148 = scmp.ne.s32.totalorder %s134, %s135
    %p149 = scmp.eq.s32.totalorder %s17, 1
    %p150 = por %p148, %p149
    %p152 = scmp.ne.s32.totalorder %s135, %s151
    %p153 = scmp.eq.s32.totalorder %s17, 0
    %p154 = por %p152, %p153
    %p155 = scmp.le.s32.totalorder 1, %s11
    %p156 = scmp.lt.s32.totalorder %s11, 3
    %p157 = pnand %p155, %p156
    %p158 = pneg %p157
    // Predicated region
    $region9: #{de_ssf_block.1} parent=5 // pred_check
      _
    $region10: #{de_ssf_block.1} parent=5 // pred_check_branch
      %160 = sbr.rel (%p157) target = $region12
    $region11: #{de_ssf_block.1} parent=5 // pred_region
      %s161 = ssub.s32 %s11, 1
      // Predicated region
      $region13: #{de_ssf_block.1} parent=11 // pred_check
        %p162 = pneg %p58
      $region14: #{de_ssf_block.1} parent=11 // pred_check_branch
        %164 = sbr.rel (%p162) target = $region16
      $region15: #{de_ssf_block.1} parent=11 // pred_region
        _
      $region16: #{de_ssf_block.1} parent=11 // pred_fallthru
        _
      // Predicated region
      $region17: #{de_ssf_block.1} parent=11 // pred_check
        %p165 = pneg %p79
      $region18: #{de_ssf_block.1} parent=11 // pred_check_branch
        %167 = sbr.rel (%p165) target = $region20
      $region19: #{de_ssf_block.1} parent=11 // pred_region
        _
      $region20: #{de_ssf_block.1} parent=11 // pred_fallthru
        _
      // Predicated region
      $region21: #{de_ssf_block.1} parent=11 // pred_check
        %p168 = pneg %p100
      $region22: #{de_ssf_block.1} parent=11 // pred_check_branch
        %170 = sbr.rel (%p168) target = $region24
      $region23: #{de_ssf_block.1} parent=11 // pred_region
        _
      $region24: #{de_ssf_block.1} parent=11 // pred_fallthru
        _
      // Predicated region
      $region25: #{de_ssf_block.1} parent=11 // pred_check
        %p171 = pneg %p121
      $region26: #{de_ssf_block.1} parent=11 // pred_check_branch
        %173 = sbr.rel (%p171) target = $region28
      $region27: #{de_ssf_block.1} parent=11 // pred_region
        _
      $region28: #{de_ssf_block.1} parent=11 // pred_fallthru
        _
    $region12: #{de_ssf_block.1} parent=5 // pred_fallthru
      _
    %p174 = scmp.lt.s32.totalorder %s11, 2
    // Predicated region
    $region29: #{de_ssf_block.1} parent=5 // pred_check
      %p175 = pneg %p174
    $region30: #{de_ssf_block.1} parent=5 // pred_check_branch
      %177 = sbr.rel (%p175) target = $region32
    $region31: #{de_ssf_block.1} parent=5 // pred_region
      // Predicated region
      $region33: #{de_ssf_block.1} parent=31 // pred_check
        %p178 = pneg %p31
      $region34: #{de_ssf_block.1} parent=31 // pred_check_branch
        %180 = sbr.rel (%p178) target = $region36
      $region35: #{de_ssf_block.1} parent=31 // pred_region
        %p181 = scmp.lt.s32.totalorder %s11, 1
        %s182 = scalar_select %p181, %s11, 1
        %s183 = smul.addr %s182, 4
        %s184 = smul.addr %s183, 8
        %s185 = scalar_lea.vmem %s0, %s184
      $region36: #{de_ssf_block.1} parent=31 // pred_fallthru
        _
    $region32: #{de_ssf_block.1} parent=5 // pred_fallthru
      _
    %p186 = scmp.le.s32.totalorder 1, %s11
    %p187 = scmp.lt.s32.totalorder %s11, 3
    %p188 = pnand %p186, %p187
    %p189 = pneg %p188
    // Predicated region
    $region37: #{de_ssf_block.1} parent=5 // pred_check
      _
    $region38: #{de_ssf_block.1} parent=5 // pred_check_branch
      %191 = sbr.rel (%p188) target = $region40
    $region39: #{de_ssf_block.1} parent=5 // pred_region
      %s192 = ssub.s32 %s11, 1
      %p193 = scmp.lt.s32.totalorder %s16, 1
      %s194 = scalar_select %p193, %s16, 1
      %s195 = smul.addr %s194, 4
      %s196 = smul.addr %s195, 8
      %s197 = scalar_lea.vmem %s0, %s196
      %p198 = pneg %p37
      %p199 = pneg %p34
      %p200 = pneg %p58
      %p201 = pneg %p55
      %p202 = pneg %p79
      %p203 = pneg %p76
      %p204 = pneg %p100
      %p205 = pneg %p97
      %p206 = pneg %p121
      %p207 = pneg %p118
      %p208 = pneg %p147
      %p209 = pneg %p144
      %p210 = scmp.lt.s32.totalorder %s16, 1
      %s211 = scalar_select %p210, %s16, 1
      %s212 = smul.addr %s211, 4
      %s213 = smul.addr %s212, 8
      %s214 = scalar_lea.vmem %s5, %s213
      %p215 = scmp.lt.s32.totalorder %s16, 1
      %s216 = scalar_select %p215, %s16, 1
      %s217 = smul.addr %s216, 4
      %s218 = smul.addr %s217, 8
      %s219 = scalar_lea.vmem %s0, %s218
      %p220 = scmp.lt.s32.totalorder %s16, 1
      %s221 = scalar_select %p220, %s16, 1
      %s222 = smul.addr %s221, 4
      %s223 = smul.addr %s222, 8
      %s224 = scalar_lea.vmem %s5, %s223
      %v225 = vld [vmem:[%s219] sm:$0xff]
      %v226 = vld [vmem:[%s219 + $0x8] sm:$0xff]
      %v227 = vld [vmem:[%s219 + $0x10] sm:$0xff]
      %v228 = vld [vmem:[%s219 + $0x18] sm:$0xff]
      %v229 = vld [vmem:[%s1] sm:$0xf]
      %s230 = scalar_lea.vmem %s1, 4
      %v231 = vld [vmem:[%s230] sm:$0xf]
      %s232 = scalar_lea.vmem %s1, 8
      %v233 = vld [vmem:[%s232] sm:$0xf]
      %s234 = scalar_lea.vmem %s1, 12
      %v235 = vld [vmem:[%s234] sm:$0xf]
      %s236 = scalar_lea.vmem %s1, 16
      %v237 = vld [vmem:[%s236] sm:$0xf]
      %s238 = scalar_lea.vmem %s1, 20
      %v239 = vld [vmem:[%s238] sm:$0xf]
      %240 = vrot.lane.b32.xlu0 %v225, 73
      %v241 = vpop.permute.xlu0 %240
      %242 = vrot.lane.b32.xlu0 %v226, 73
      %v243 = vpop.permute.xlu0 %242
      %244 = vrot.lane.b32.xlu0 %v227, 73
      %v245 = vpop.permute.xlu0 %244
      %246 = vrot.lane.b32.xlu0 %v228, 73
      %v247 = vpop.permute.xlu0 %246
      %v248 = vlaneseq
      %v249 = vand.u32 %v248, 127
      %vm250 = vcmp.lt.s32.totalorder %v249, 73
      %v251 = vsel %vm250, %v245, %v247
      %v252 = vsel %vm250, %v243, %v245
      %v253 = vsel %vm250, %v241, %v243
      %v254 = vsel %vm250, %v247, %v241
      %v255 = vmul.f32 %v229, %v233
      %v256 = vmul.f32 %v255, %v237
      %v258 = vperm.slane %v256, 0
      %v259 = vperm.slane %v256, 1
      %v260 = vperm.slane %v256, 2
      %v261 = vperm.slane %v256, 3
      %v266 = vmul.f32 %v254, %v258
      %v267 = vmul.f32 %v253, %v259
      %v268 = vmul.f32 %v252, %v260
      %v269 = vmul.f32 %v251, %v261
      %270 = vst [vmem:[#allocation2] sm:$0xff] %v266
      %271 = vst [vmem:[#allocation2 + $0x8] sm:$0xff] %v267
      %272 = vst [vmem:[#allocation2 + $0x10] sm:$0xff] %v268
      %273 = vst [vmem:[#allocation2 + $0x18] sm:$0xff] %v269
      %274 = vrot.lane.b32.xlu0 %v225, 72
      %v275 = vpop.permute.xlu0 %274
      %276 = vrot.lane.b32.xlu0 %v226, 72
      %v277 = vpop.permute.xlu0 %276
      %278 = vrot.lane.b32.xlu0 %v227, 72
      %v279 = vpop.permute.xlu0 %278
      %280 = vrot.lane.b32.xlu0 %v228, 72
      %v281 = vpop.permute.xlu0 %280
      %vm282 = vcmp.lt.s32.totalorder %v249, 72
      %v283 = vsel %vm282, %v279, %v281
      %v284 = vsel %vm282, %v277, %v279
      %v285 = vsel %vm282, %v275, %v277
      %v286 = vsel %vm282, %v281, %v275
      %v288 = vperm.slane %v255, 0
      %v289 = vperm.slane %v255, 1
      %v290 = vperm.slane %v255, 2
      %v291 = vperm.slane %v255, 3
      %v296 = vmul.f32 %v286, %v288
      %v297 = vmul.f32 %v285, %v289
      %v298 = vmul.f32 %v284, %v290
      %v299 = vmul.f32 %v283, %v291
      %300 = vst [vmem:[#allocation2 + $0x20] sm:$0xff] %v296
      %301 = vst [vmem:[#allocation2 + $0x28] sm:$0xff] %v297
      %302 = vst [vmem:[#allocation2 + $0x30] sm:$0xff] %v298
      %303 = vst [vmem:[#allocation2 + $0x38] sm:$0xff] %v299
      %304 = vrot.lane.b32.xlu0 %v225, 71
      %v305 = vpop.permute.xlu0 %304
      %306 = vrot.lane.b32.xlu0 %v226, 71
      %v307 = vpop.permute.xlu0 %306
      %308 = vrot.lane.b32.xlu0 %v227, 71
      %v309 = vpop.permute.xlu0 %308
      %310 = vrot.lane.b32.xlu0 %v228, 71
      %v311 = vpop.permute.xlu0 %310
      %vm312 = vcmp.lt.s32.totalorder %v249, 71
      %v313 = vsel %vm312, %v309, %v311
      %v314 = vsel %vm312, %v307, %v309
      %v315 = vsel %vm312, %v305, %v307
      %v316 = vsel %vm312, %v311, %v305
      %v317 = vmul.f32 %v255, %v239
      %v319 = vperm.slane %v317, 0
      %v320 = vperm.slane %v317, 1
      %v321 = vperm.slane %v317, 2
      %v322 = vperm.slane %v317, 3
      %v327 = vmul.f32 %v316, %v319
      %v328 = vmul.f32 %v315, %v320
      %v329 = vmul.f32 %v314, %v321
      %v330 = vmul.f32 %v313, %v322
      %331 = vst [vmem:[#allocation2 + $0x40] sm:$0xff] %v327
      %332 = vst [vmem:[#allocation2 + $0x48] sm:$0xff] %v328
      %333 = vst [vmem:[#allocation2 + $0x50] sm:$0xff] %v329
      %334 = vst [vmem:[#allocation2 + $0x58] sm:$0xff] %v330
      %335 = vrot.lane.b32.xlu0 %v225, 65
      %v336 = vpop.permute.xlu0 %335
      %337 = vrot.lane.b32.xlu0 %v226, 65
      %v338 = vpop.permute.xlu0 %337
      %339 = vrot.lane.b32.xlu0 %v227, 65
      %v340 = vpop.permute.xlu0 %339
      %341 = vrot.lane.b32.xlu0 %v228, 65
      %v342 = vpop.permute.xlu0 %341
      %vm343 = vcmp.lt.s32.totalorder %v249, 65
      %v344 = vsel %vm343, %v340, %v342
      %v345 = vsel %vm343, %v338, %v340
      %v346 = vsel %vm343, %v336, %v338
      %v347 = vsel %vm343, %v342, %v336
      %v348 = vmul.f32 %v229, %v237
      %v350 = vperm.slane %v348, 0
      %v351 = vperm.slane %v348, 1
      %v352 = vperm.slane %v348, 2
      %v353 = vperm.slane %v348, 3
      %v358 = vmul.f32 %v347, %v350
      %v359 = vmul.f32 %v346, %v351
      %v360 = vmul.f32 %v345, %v352
      %v361 = vmul.f32 %v344, %v353
      %362 = vst [vmem:[#allocation2 + $0x60] sm:$0xff] %v358
      %363 = vst [vmem:[#allocation2 + $0x68] sm:$0xff] %v359
      %364 = vst [vmem:[#allocation2 + $0x70] sm:$0xff] %v360
      %365 = vst [vmem:[#allocation2 + $0x78] sm:$0xff] %v361
      %366 = vrot.lane.b32.xlu0 %v225, 64
      %v367 = vpop.permute.xlu0 %366
      %368 = vrot.lane.b32.xlu0 %v226, 64
      %v369 = vpop.permute.xlu0 %368
      %370 = vrot.lane.b32.xlu0 %v227, 64
      %v371 = vpop.permute.xlu0 %370
      %372 = vrot.lane.b32.xlu0 %v228, 64
      %v373 = vpop.permute.xlu0 %372
      %vm374 = vcmp.lt.s32.totalorder %v249, 64
      %v375 = vsel %vm374, %v371, %v373
      %v376 = vsel %vm374, %v369, %v371
      %v377 = vsel %vm374, %v367, %v369
      %v378 = vsel %vm374, %v373, %v367
      %v380 = vperm.slane %v229, 0
      %v381 = vperm.slane %v229, 1
      %v382 = vperm.slane %v229, 2
      %v383 = vperm.slane %v229, 3
      %v388 = vmul.f32 %v378, %v380
      %v389 = vmul.f32 %v377, %v381
      %v390 = vmul.f32 %v376, %v382
      %v391 = vmul.f32 %v375, %v383
      %392 = vst [vmem:[#allocation2 + $0x80] sm:$0xff] %v388
      %393 = vst [vmem:[#allocation2 + $0x88] sm:$0xff] %v389
      %394 = vst [vmem:[#allocation2 + $0x90] sm:$0xff] %v390
      %395 = vst [vmem:[#allocation2 + $0x98] sm:$0xff] %v391
      %396 = vrot.lane.b32.xlu0 %v225, 63
      %v397 = vpop.permute.xlu0 %396
      %398 = vrot.lane.b32.xlu0 %v226, 63
      %v399 = vpop.permute.xlu0 %398
      %400 = vrot.lane.b32.xlu0 %v227, 63
      %v401 = vpop.permute.xlu0 %400
      %402 = vrot.lane.b32.xlu0 %v228, 63
      %v403 = vpop.permute.xlu0 %402
      %vm404 = vcmp.lt.s32.totalorder %v249, 63
      %v405 = vsel %vm404, %v401, %v403
      %v406 = vsel %vm404, %v399, %v401
      %v407 = vsel %vm404, %v397, %v399
      %v408 = vsel %vm404, %v403, %v397
      %v409 = vmul.f32 %v229, %v239
      %v411 = vperm.slane %v409, 0
      %v412 = vperm.slane %v409, 1
      %v413 = vperm.slane %v409, 2
      %v414 = vperm.slane %v409, 3
      %v419 = vmul.f32 %v408, %v411
      %v420 = vmul.f32 %v407, %v412
      %v421 = vmul.f32 %v406, %v413
      %v422 = vmul.f32 %v405, %v414
      %423 = vst [vmem:[#allocation2 + $0xa0] sm:$0xff] %v419
      %424 = vst [vmem:[#allocation2 + $0xa8] sm:$0xff] %v420
      %425 = vst [vmem:[#allocation2 + $0xb0] sm:$0xff] %v421
      %426 = vst [vmem:[#allocation2 + $0xb8] sm:$0xff] %v422
      %427 = vrot.lane.b32.xlu0 %v225, 57
      %v428 = vpop.permute.xlu0 %427
      %429 = vrot.lane.b32.xlu0 %v226, 57
      %v430 = vpop.permute.xlu0 %429
      %431 = vrot.lane.b32.xlu0 %v227, 57
      %v432 = vpop.permute.xlu0 %431
      %433 = vrot.lane.b32.xlu0 %v228, 57
      %v434 = vpop.permute.xlu0 %433
      %vm435 = vcmp.lt.s32.totalorder %v249, 57
      %v436 = vsel %vm435, %v432, %v434
      %v437 = vsel %vm435, %v430, %v432
      %v438 = vsel %vm435, %v428, %v430
      %v439 = vsel %vm435, %v434, %v428
      %v440 = vmul.f32 %v229, %v235
      %v441 = vmul.f32 %v440, %v237
      %v443 = vperm.slane %v441, 0
      %v444 = vperm.slane %v441, 1
      %v445 = vperm.slane %v441, 2
      %v446 = vperm.slane %v441, 3
      %v451 = vmul.f32 %v439, %v443
      %v452 = vmul.f32 %v438, %v444
      %v453 = vmul.f32 %v437, %v445
      %v454 = vmul.f32 %v436, %v446
      %455 = vst [vmem:[#allocation2 + $0xc0] sm:$0xff] %v451
      %456 = vst [vmem:[#allocation2 + $0xc8] sm:$0xff] %v452
      %457 = vst [vmem:[#allocation2 + $0xd0] sm:$0xff] %v453
      %458 = vst [vmem:[#allocation2 + $0xd8] sm:$0xff] %v454
      %459 = vrot.lane.b32.xlu0 %v225, 56
      %v460 = vpop.permute.xlu0 %459
      %461 = vrot.lane.b32.xlu0 %v226, 56
      %v462 = vpop.permute.xlu0 %461
      %463 = vrot.lane.b32.xlu0 %v227, 56
      %v464 = vpop.permute.xlu0 %463
      %465 = vrot.lane.b32.xlu0 %v228, 56
      %v466 = vpop.permute.xlu0 %465
      %vm467 = vcmp.lt.s32.totalorder %v249, 56
      %v468 = vsel %vm467, %v464, %v466
      %v469 = vsel %vm467, %v462, %v464
      %v470 = vsel %vm467, %v460, %v462
      %v471 = vsel %vm467, %v466, %v460
      %v473 = vperm.slane %v440, 0
      %v474 = vperm.slane %v440, 1
      %v475 = vperm.slane %v440, 2
      %v476 = vperm.slane %v440, 3
      %v481 = vmul.f32 %v471, %v473
      %v482 = vmul.f32 %v470, %v474
      %v483 = vmul.f32 %v469, %v475
      %v484 = vmul.f32 %v468, %v476
      %485 = vst [vmem:[#allocation2 + $0xe0] sm:$0xff] %v481
      %486 = vst [vmem:[#allocation2 + $0xe8] sm:$0xff] %v482
      %487 = vst [vmem:[#allocation2 + $0xf0] sm:$0xff] %v483
      %488 = vst [vmem:[#allocation2 + $0xf8] sm:$0xff] %v484
      %489 = vrot.lane.b32.xlu0 %v225, 55
      %v490 = vpop.permute.xlu0 %489
      %491 = vrot.lane.b32.xlu0 %v226, 55
      %v492 = vpop.permute.xlu0 %491
      %493 = vrot.lane.b32.xlu0 %v227, 55
      %v494 = vpop.permute.xlu0 %493
      %495 = vrot.lane.b32.xlu0 %v228, 55
      %v496 = vpop.permute.xlu0 %495
      %vm497 = vcmp.lt.s32.totalorder %v249, 55
      %v498 = vsel %vm497, %v494, %v496
      %v499 = vsel %vm497, %v492, %v494
      %v500 = vsel %vm497, %v490, %v492
      %v501 = vsel %vm497, %v496, %v490
      %v502 = vmul.f32 %v440, %v239
      %v504 = vperm.slane %v502, 0
      %v505 = vperm.slane %v502, 1
      %v506 = vperm.slane %v502, 2
      %v507 = vperm.slane %v502, 3
      %v512 = vmul.f32 %v501, %v504
      %v513 = vmul.f32 %v500, %v505
      %v514 = vmul.f32 %v499, %v506
      %v515 = vmul.f32 %v498, %v507
      %516 = vst [vmem:[#allocation2 + $0x100] sm:$0xff] %v512
      %517 = vst [vmem:[#allocation2 + $0x108] sm:$0xff] %v513
      %518 = vst [vmem:[#allocation2 + $0x110] sm:$0xff] %v514
      %519 = vst [vmem:[#allocation2 + $0x118] sm:$0xff] %v515
      %520 = vrot.lane.b32.xlu0 %v225, 9
      %v521 = vpop.permute.xlu0 %520
      %522 = vrot.lane.b32.xlu0 %v226, 9
      %v523 = vpop.permute.xlu0 %522
      %524 = vrot.lane.b32.xlu0 %v227, 9
      %v525 = vpop.permute.xlu0 %524
      %526 = vrot.lane.b32.xlu0 %v228, 9
      %v527 = vpop.permute.xlu0 %526
      %vm528 = vcmp.lt.s32.totalorder %v249, 9
      %v529 = vsel %vm528, %v525, %v527
      %v530 = vsel %vm528, %v523, %v525
      %v531 = vsel %vm528, %v521, %v523
      %v532 = vsel %vm528, %v527, %v521
      %v533 = vmul.f32 %v233, %v237
      %v535 = vperm.slane %v533, 0
      %v536 = vperm.slane %v533, 1
      %v537 = vperm.slane %v533, 2
      %v538 = vperm.slane %v533, 3
      %v543 = vmul.f32 %v532, %v535
      %v544 = vmul.f32 %v531, %v536
      %v545 = vmul.f32 %v530, %v537
      %v546 = vmul.f32 %v529, %v538
      %547 = vst [vmem:[#allocation2 + $0x120] sm:$0xff] %v543
      %548 = vst [vmem:[#allocation2 + $0x128] sm:$0xff] %v544
      %549 = vst [vmem:[#allocation2 + $0x130] sm:$0xff] %v545
      %550 = vst [vmem:[#allocation2 + $0x138] sm:$0xff] %v546
      %551 = vrot.lane.b32.xlu0 %v225, 8
      %v552 = vpop.permute.xlu0 %551
      %553 = vrot.lane.b32.xlu0 %v226, 8
      %v554 = vpop.permute.xlu0 %553
      %555 = vrot.lane.b32.xlu0 %v227, 8
      %v556 = vpop.permute.xlu0 %555
      %557 = vrot.lane.b32.xlu0 %v228, 8
      %v558 = vpop.permute.xlu0 %557
      %vm559 = vcmp.lt.s32.totalorder %v249, 8
      %v560 = vsel %vm559, %v556, %v558
      %v561 = vsel %vm559, %v554, %v556
      %v562 = vsel %vm559, %v552, %v554
      %v563 = vsel %vm559, %v558, %v552
      %v565 = vperm.slane %v233, 0
      %v566 = vperm.slane %v233, 1
      %v567 = vperm.slane %v233, 2
      %v568 = vperm.slane %v233, 3
      %v573 = vmul.f32 %v563, %v565
      %v574 = vmul.f32 %v562, %v566
      %v575 = vmul.f32 %v561, %v567
      %v576 = vmul.f32 %v560, %v568
      %577 = vst [vmem:[#allocation2 + $0x140] sm:$0xff] %v573
      %578 = vst [vmem:[#allocation2 + $0x148] sm:$0xff] %v574
      %579 = vst [vmem:[#allocation2 + $0x150] sm:$0xff] %v575
      %580 = vst [vmem:[#allocation2 + $0x158] sm:$0xff] %v576
      %581 = vrot.lane.b32.xlu0 %v225, 7
      %v582 = vpop.permute.xlu0 %581
      %583 = vrot.lane.b32.xlu0 %v226, 7
      %v584 = vpop.permute.xlu0 %583
      %585 = vrot.lane.b32.xlu0 %v227, 7
      %v586 = vpop.permute.xlu0 %585
      %587 = vrot.lane.b32.xlu0 %v228, 7
      %v588 = vpop.permute.xlu0 %587
      %vm589 = vcmp.lt.s32.totalorder %v249, 7
      %v590 = vsel %vm589, %v586, %v588
      %v591 = vsel %vm589, %v584, %v586
      %v592 = vsel %vm589, %v582, %v584
      %v593 = vsel %vm589, %v588, %v582
      %v594 = vmul.f32 %v233, %v239
      %v596 = vperm.slane %v594, 0
      %v597 = vperm.slane %v594, 1
      %v598 = vperm.slane %v594, 2
      %v599 = vperm.slane %v594, 3
      %v604 = vmul.f32 %v593, %v596
      %v605 = vmul.f32 %v592, %v597
      %v606 = vmul.f32 %v591, %v598
      %v607 = vmul.f32 %v590, %v599
      %608 = vst [vmem:[#allocation2 + $0x160] sm:$0xff] %v604
      %609 = vst [vmem:[#allocation2 + $0x168] sm:$0xff] %v605
      %610 = vst [vmem:[#allocation2 + $0x170] sm:$0xff] %v606
      %611 = vst [vmem:[#allocation2 + $0x178] sm:$0xff] %v607
      %612 = vrot.lane.b32.xlu0 %v225, 1
      %v613 = vpop.permute.xlu0 %612
      %614 = vrot.lane.b32.xlu0 %v226, 1
      %v615 = vpop.permute.xlu0 %614
      %616 = vrot.lane.b32.xlu0 %v227, 1
      %v617 = vpop.permute.xlu0 %616
      %618 = vrot.lane.b32.xlu0 %v228, 1
      %v619 = vpop.permute.xlu0 %618
      %vm620 = vcmp.lt.s32.totalorder %v249, 1
      %v621 = vsel %vm620, %v617, %v619
      %v622 = vsel %vm620, %v615, %v617
      %v623 = vsel %vm620, %v613, %v615
      %v624 = vsel %vm620, %v619, %v613
      %v626 = vperm.slane %v237, 0
      %v627 = vperm.slane %v237, 1
      %v628 = vperm.slane %v237, 2
      %v629 = vperm.slane %v237, 3
      %v634 = vmul.f32 %v624, %v626
      %v635 = vmul.f32 %v623, %v627
      %v636 = vmul.f32 %v622, %v628
      %v637 = vmul.f32 %v621, %v629
      %638 = vst [vmem:[#allocation2 + $0x180] sm:$0xff] %v634
      %639 = vst [vmem:[#allocation2 + $0x188] sm:$0xff] %v635
      %640 = vst [vmem:[#allocation2 + $0x190] sm:$0xff] %v636
      %641 = vst [vmem:[#allocation2 + $0x198] sm:$0xff] %v637
      %642 = vst [vmem:[#allocation2 + $0x1a0] sm:$0xff] %v225
      %643 = vst [vmem:[#allocation2 + $0x1a8] sm:$0xff] %v226
      %644 = vst [vmem:[#allocation2 + $0x1b0] sm:$0xff] %v227
      %645 = vst [vmem:[#allocation2 + $0x1b8] sm:$0xff] %v228
      %646 = vrot.lane.b32.xlu0 %v225, 127
      %v647 = vpop.permute.xlu0 %646
      %648 = vrot.lane.b32.xlu0 %v226, 127
      %v649 = vpop.permute.xlu0 %648
      %650 = vrot.lane.b32.xlu0 %v227, 127
      %v651 = vpop.permute.xlu0 %650
      %652 = vrot.lane.b32.xlu0 %v228, 127
      %v653 = vpop.permute.xlu0 %652
      %vm654 = vcmp.lt.s32.totalorder %v249, 127
      %v655 = vsel %vm654, %v651, %v653
      %v656 = vsel %vm654, %v649, %v651
      %v657 = vsel %vm654, %v647, %v649
      %v658 = vsel %vm654, %v653, %v647
      %v660 = vperm.slane %v239, 0
      %v661 = vperm.slane %v239, 1
      %v662 = vperm.slane %v239, 2
      %v663 = vperm.slane %v239, 3
      %v668 = vmul.f32 %v657, %v660
      %v669 = vmul.f32 %v656, %v661
      %v670 = vmul.f32 %v655, %v662
      %v671 = vmul.f32 %v658, %v663
      %672 = vst [vmem:[#allocation2 + $0x1c0] sm:$0xff] %v668
      %673 = vst [vmem:[#allocation2 + $0x1c8] sm:$0xff] %v669
      %674 = vst [vmem:[#allocation2 + $0x1d0] sm:$0xff] %v670
      %675 = vst [vmem:[#allocation2 + $0x1d8] sm:$0xff] %v671
      %676 = vrot.lane.b32.xlu0 %v225, 121
      %v677 = vpop.permute.xlu0 %676
      %678 = vrot.lane.b32.xlu0 %v226, 121
      %v679 = vpop.permute.xlu0 %678
      %680 = vrot.lane.b32.xlu0 %v227, 121
      %v681 = vpop.permute.xlu0 %680
      %682 = vrot.lane.b32.xlu0 %v228, 121
      %v683 = vpop.permute.xlu0 %682
      %vm684 = vcmp.lt.s32.totalorder %v249, 121
      %v685 = vsel %vm684, %v681, %v683
      %v686 = vsel %vm684, %v679, %v681
      %v687 = vsel %vm684, %v677, %v679
      %v688 = vsel %vm684, %v683, %v677
      %v689 = vmul.f32 %v235, %v237
      %v691 = vperm.slane %v689, 0
      %v692 = vperm.slane %v689, 1
      %v693 = vperm.slane %v689, 2
      %v694 = vperm.slane %v689, 3
      %v699 = vmul.f32 %v687, %v691
      %v700 = vmul.f32 %v686, %v692
      %v701 = vmul.f32 %v685, %v693
      %v702 = vmul.f32 %v688, %v694
      %703 = vst [vmem:[#allocation2 + $0x1e0] sm:$0xff] %v699
      %704 = vst [vmem:[#allocation2 + $0x1e8] sm:$0xff] %v700
      %705 = vst [vmem:[#allocation2 + $0x1f0] sm:$0xff] %v701
      %706 = vst [vmem:[#allocation2 + $0x1f8] sm:$0xff] %v702
      %707 = vrot.lane.b32.xlu0 %v225, 120
      %v708 = vpop.permute.xlu0 %707
      %709 = vrot.lane.b32.xlu0 %v226, 120
      %v710 = vpop.permute.xlu0 %709
      %711 = vrot.lane.b32.xlu0 %v227, 120
      %v712 = vpop.permute.xlu0 %711
      %713 = vrot.lane.b32.xlu0 %v228, 120
      %v714 = vpop.permute.xlu0 %713
      %vm715 = vcmp.lt.s32.totalorder %v249, 120
      %v716 = vsel %vm715, %v712, %v714
      %v717 = vsel %vm715, %v710, %v712
      %v718 = vsel %vm715, %v708, %v710
      %v719 = vsel %vm715, %v714, %v708
      %v721 = vperm.slane %v235, 0
      %v722 = vperm.slane %v235, 1
      %v723 = vperm.slane %v235, 2
      %v724 = vperm.slane %v235, 3
      %v729 = vmul.f32 %v718, %v721
      %v730 = vmul.f32 %v717, %v722
      %v731 = vmul.f32 %v716, %v723
      %v732 = vmul.f32 %v719, %v724
      %733 = vst [vmem:[#allocation2 + $0x200] sm:$0xff] %v729
      %734 = vst [vmem:[#allocation2 + $0x208] sm:$0xff] %v730
      %735 = vst [vmem:[#allocation2 + $0x210] sm:$0xff] %v731
      %736 = vst [vmem:[#allocation2 + $0x218] sm:$0xff] %v732
      %737 = vrot.lane.b32.xlu0 %v225, 119
      %v738 = vpop.permute.xlu0 %737
      %739 = vrot.lane.b32.xlu0 %v226, 119
      %v740 = vpop.permute.xlu0 %739
      %741 = vrot.lane.b32.xlu0 %v227, 119
      %v742 = vpop.permute.xlu0 %741
      %743 = vrot.lane.b32.xlu0 %v228, 119
      %v744 = vpop.permute.xlu0 %743
      %vm745 = vcmp.lt.s32.totalorder %v249, 119
      %v746 = vsel %vm745, %v742, %v744
      %v747 = vsel %vm745, %v740, %v742
      %v748 = vsel %vm745, %v738, %v740
      %v749 = vsel %vm745, %v744, %v738
      %v750 = vmul.f32 %v235, %v239
      %v752 = vperm.slane %v750, 0
      %v753 = vperm.slane %v750, 1
      %v754 = vperm.slane %v750, 2
      %v755 = vperm.slane %v750, 3
      %v760 = vmul.f32 %v748, %v752
      %v761 = vmul.f32 %v747, %v753
      %v762 = vmul.f32 %v746, %v754
      %v763 = vmul.f32 %v749, %v755
      %764 = vst [vmem:[#allocation2 + $0x220] sm:$0xff] %v760
      %765 = vst [vmem:[#allocation2 + $0x228] sm:$0xff] %v761
      %766 = vst [vmem:[#allocation2 + $0x230] sm:$0xff] %v762
      %767 = vst [vmem:[#allocation2 + $0x238] sm:$0xff] %v763
      %v768 = vmul.f32 %v231, %v233
      %v769 = vmul.f32 %v768, %v237
      %v771 = vperm.slane %v769, 0
      %v772 = vperm.slane %v769, 1
      %v773 = vperm.slane %v769, 2
      %v774 = vperm.slane %v769, 3
      %v779 = vmul.f32 %v253, %v771
      %v780 = vmul.f32 %v252, %v772
      %v781 = vmul.f32 %v251, %v773
      %v782 = vmul.f32 %v254, %v774
      %783 = vst [vmem:[#allocation2 + $0x240] sm:$0xff] %v779
      %784 = vst [vmem:[#allocation2 + $0x248] sm:$0xff] %v780
      %785 = vst [vmem:[#allocation2 + $0x250] sm:$0xff] %v781
      %786 = vst [vmem:[#allocation2 + $0x258] sm:$0xff] %v782
      %v788 = vperm.slane %v768, 0
      %v789 = vperm.slane %v768, 1
      %v790 = vperm.slane %v768, 2
      %v791 = vperm.slane %v768, 3
      %v796 = vmul.f32 %v285, %v788
      %v797 = vmul.f32 %v284, %v789
      %v798 = vmul.f32 %v283, %v790
      %v799 = vmul.f32 %v286, %v791
      %800 = vst [vmem:[#allocation2 + $0x260] sm:$0xff] %v796
      %801 = vst [vmem:[#allocation2 + $0x268] sm:$0xff] %v797
      %802 = vst [vmem:[#allocation2 + $0x270] sm:$0xff] %v798
      %803 = vst [vmem:[#allocation2 + $0x278] sm:$0xff] %v799
      %v804 = vmul.f32 %v768, %v239
      %v806 = vperm.slane %v804, 0
      %v807 = vperm.slane %v804, 1
      %v808 = vperm.slane %v804, 2
      %v809 = vperm.slane %v804, 3
      %v814 = vmul.f32 %v315, %v806
      %v815 = vmul.f32 %v314, %v807
      %v816 = vmul.f32 %v313, %v808
      %v817 = vmul.f32 %v316, %v809
      %818 = vst [vmem:[#allocation2 + $0x280] sm:$0xff] %v814
      %819 = vst [vmem:[#allocation2 + $0x288] sm:$0xff] %v815
      %820 = vst [vmem:[#allocation2 + $0x290] sm:$0xff] %v816
      %821 = vst [vmem:[#allocation2 + $0x298] sm:$0xff] %v817
      %v822 = vmul.f32 %v231, %v237
      %v824 = vperm.slane %v822, 0
      %v825 = vperm.slane %v822, 1
      %v826 = vperm.slane %v822, 2
      %v827 = vperm.slane %v822, 3
      %v832 = vmul.f32 %v346, %v824
      %v833 = vmul.f32 %v345, %v825
      %v834 = vmul.f32 %v344, %v826
      %v835 = vmul.f32 %v347, %v827
      %836 = vst [vmem:[#allocation2 + $0x2a0] sm:$0xff] %v832
      %837 = vst [vmem:[#allocation2 + $0x2a8] sm:$0xff] %v833
      %838 = vst [vmem:[#allocation2 + $0x2b0] sm:$0xff] %v834
      %839 = vst [vmem:[#allocation2 + $0x2b8] sm:$0xff] %v835
      %v841 = vperm.slane %v231, 0
      %v842 = vperm.slane %v231, 1
      %v843 = vperm.slane %v231, 2
      %v844 = vperm.slane %v231, 3
      %v849 = vmul.f32 %v377, %v841
      %v850 = vmul.f32 %v376, %v842
      %v851 = vmul.f32 %v375, %v843
      %v852 = vmul.f32 %v378, %v844
      %853 = vst [vmem:[#allocation2 + $0x2c0] sm:$0xff] %v849
      %854 = vst [vmem:[#allocation2 + $0x2c8] sm:$0xff] %v850
      %855 = vst [vmem:[#allocation2 + $0x2d0] sm:$0xff] %v851
      %856 = vst [vmem:[#allocation2 + $0x2d8] sm:$0xff] %v852
      %v857 = vmul.f32 %v231, %v239
      %v859 = vperm.slane %v857, 0
      %v860 = vperm.slane %v857, 1
      %v861 = vperm.slane %v857, 2
      %v862 = vperm.slane %v857, 3
      %v867 = vmul.f32 %v407, %v859
      %v868 = vmul.f32 %v406, %v860
      %v869 = vmul.f32 %v405, %v861
      %v870 = vmul.f32 %v408, %v862
      %871 = vst [vmem:[#allocation2 + $0x2e0] sm:$0xff] %v867
      %872 = vst [vmem:[#allocation2 + $0x2e8] sm:$0xff] %v868
      %873 = vst [vmem:[#allocation2 + $0x2f0] sm:$0xff] %v869
      %874 = vst [vmem:[#allocation2 + $0x2f8] sm:$0xff] %v870
      %v875 = vmul.f32 %v231, %v235
      %v876 = vmul.f32 %v875, %v237
      %v878 = vperm.slane %v876, 0
      %v879 = vperm.slane %v876, 1
      %v880 = vperm.slane %v876, 2
      %v881 = vperm.slane %v876, 3
      %v886 = vmul.f32 %v438, %v878
      %v887 = vmul.f32 %v437, %v879
      %v888 = vmul.f32 %v436, %v880
      %v889 = vmul.f32 %v439, %v881
      %890 = vst [vmem:[#allocation2 + $0x300] sm:$0xff] %v886
      %891 = vst [vmem:[#allocation2 + $0x308] sm:$0xff] %v887
      %892 = vst [vmem:[#allocation2 + $0x310] sm:$0xff] %v888
      %893 = vst [vmem:[#allocation2 + $0x318] sm:$0xff] %v889
      %v895 = vperm.slane %v875, 0
      %v896 = vperm.slane %v875, 1
      %v897 = vperm.slane %v875, 2
      %v898 = vperm.slane %v875, 3
      %v903 = vmul.f32 %v470, %v895
      %v904 = vmul.f32 %v469, %v896
      %v905 = vmul.f32 %v468, %v897
      %v906 = vmul.f32 %v471, %v898
      %907 = vst [vmem:[#allocation2 + $0x320] sm:$0xff] %v903
      %908 = vst [vmem:[#allocation2 + $0x328] sm:$0xff] %v904
      %909 = vst [vmem:[#allocation2 + $0x330] sm:$0xff] %v905
      %910 = vst [vmem:[#allocation2 + $0x338] sm:$0xff] %v906
      %v911 = vmul.f32 %v875, %v239
      %v913 = vperm.slane %v911, 0
      %v914 = vperm.slane %v911, 1
      %v915 = vperm.slane %v911, 2
      %v916 = vperm.slane %v911, 3
      %v921 = vmul.f32 %v500, %v913
      %v922 = vmul.f32 %v499, %v914
      %v923 = vmul.f32 %v498, %v915
      %v924 = vmul.f32 %v501, %v916
      %925 = vst [vmem:[#allocation2 + $0x340] sm:$0xff] %v921
      %926 = vst [vmem:[#allocation2 + $0x348] sm:$0xff] %v922
      %927 = vst [vmem:[#allocation2 + $0x350] sm:$0xff] %v923
      %928 = vst [vmem:[#allocation2 + $0x358] sm:$0xff] %v924
      %v929 = vld [vmem:[%s2] sm:$0xff]
      %v930 = vld [vmem:[%s2 + $0x8] sm:$0xff]
      %v931 = vld [vmem:[%s2 + $0x10] sm:$0xff]
      %v932 = vld [vmem:[%s2 + $0x18] sm:$0xff]
      %v933 = vld [vmem:[#allocation2] sm:$0xff]
      %v934 = vld [vmem:[#allocation2 + $0x8] sm:$0xff]
      %v935 = vld [vmem:[#allocation2 + $0x10] sm:$0xff]
      %v936 = vld [vmem:[#allocation2 + $0x18] sm:$0xff]
      %v937 = vld [vmem:[#allocation2 + $0x20] sm:$0xff]
      %v938 = vld [vmem:[#allocation2 + $0x28] sm:$0xff]
      %v939 = vld [vmem:[#allocation2 + $0x30] sm:$0xff]
      %v940 = vld [vmem:[#allocation2 + $0x38] sm:$0xff]
      %v941 = vld [vmem:[#allocation2 + $0x40] sm:$0xff]
      %v942 = vld [vmem:[#allocation2 + $0x48] sm:$0xff]
      %v943 = vld [vmem:[#allocation2 + $0x50] sm:$0xff]
      %v944 = vld [vmem:[#allocation2 + $0x58] sm:$0xff]
      %v945 = vld [vmem:[#allocation2 + $0x60] sm:$0xff]
      %v946 = vld [vmem:[#allocation2 + $0x68] sm:$0xff]
      %v947 = vld [vmem:[#allocation2 + $0x70] sm:$0xff]
      %v948 = vld [vmem:[#allocation2 + $0x78] sm:$0xff]
      %v949 = vld [vmem:[#allocation2 + $0x80] sm:$0xff]
      %v950 = vld [vmem:[#allocation2 + $0x88] sm:$0xff]
      %v951 = vld [vmem:[#allocation2 + $0x90] sm:$0xff]
      %v952 = vld [vmem:[#allocation2 + $0x98] sm:$0xff]
      %v953 = vld [vmem:[#allocation2 + $0xa0] sm:$0xff]
      %v954 = vld [vmem:[#allocation2 + $0xa8] sm:$0xff]
      %v955 = vld [vmem:[#allocation2 + $0xb0] sm:$0xff]
      %v956 = vld [vmem:[#allocation2 + $0xb8] sm:$0xff]
      %v957 = vld [vmem:[#allocation2 + $0xc0] sm:$0xff]
      %v958 = vld [vmem:[#allocation2 + $0xc8] sm:$0xff]
      %v959 = vld [vmem:[#allocation2 + $0xd0] sm:$0xff]
      %v960 = vld [vmem:[#allocation2 + $0xd8] sm:$0xff]
      %v961 = vld [vmem:[#allocation2 + $0xe0] sm:$0xff]
      %v962 = vld [vmem:[#allocation2 + $0xe8] sm:$0xff]
      %v963 = vld [vmem:[#allocation2 + $0xf0] sm:$0xff]
      %v964 = vld [vmem:[#allocation2 + $0xf8] sm:$0xff]
      %v965 = vld [vmem:[#allocation2 + $0x100] sm:$0xff]
      %v966 = vld [vmem:[#allocation2 + $0x108] sm:$0xff]
      %v967 = vld [vmem:[#allocation2 + $0x110] sm:$0xff]
      %v968 = vld [vmem:[#allocation2 + $0x118] sm:$0xff]
      %v969 = vld [vmem:[#allocation2 + $0x120] sm:$0xff]
      %v970 = vld [vmem:[#allocation2 + $0x128] sm:$0xff]
      %v971 = vld [vmem:[#allocation2 + $0x130] sm:$0xff]
      %v972 = vld [vmem:[#allocation2 + $0x138] sm:$0xff]
      %v973 = vld [vmem:[#allocation2 + $0x140] sm:$0xff]
      %v974 = vld [vmem:[#allocation2 + $0x148] sm:$0xff]
      %v975 = vld [vmem:[#allocation2 + $0x150] sm:$0xff]
      %v976 = vld [vmem:[#allocation2 + $0x158] sm:$0xff]
      %v977 = vld [vmem:[#allocation2 + $0x160] sm:$0xff]
      %v978 = vld [vmem:[#allocation2 + $0x168] sm:$0xff]
      %v979 = vld [vmem:[#allocation2 + $0x170] sm:$0xff]
      %v980 = vld [vmem:[#allocation2 + $0x178] sm:$0xff]
      %v981 = vld [vmem:[#allocation2 + $0x180] sm:$0xff]
      %v982 = vld [vmem:[#allocation2 + $0x188] sm:$0xff]
      %v983 = vld [vmem:[#allocation2 + $0x190] sm:$0xff]
      %v984 = vld [vmem:[#allocation2 + $0x198] sm:$0xff]
      %v985 = vld [vmem:[#allocation2 + $0x1a0] sm:$0xff]
      %v986 = vld [vmem:[#allocation2 + $0x1a8] sm:$0xff]
      %v987 = vld [vmem:[#allocation2 + $0x1b0] sm:$0xff]
      %v988 = vld [vmem:[#allocation2 + $0x1b8] sm:$0xff]
      %v989 = vld [vmem:[#allocation2 + $0x1c0] sm:$0xff]
      %v990 = vld [vmem:[#allocation2 + $0x1c8] sm:$0xff]
      %v991 = vld [vmem:[#allocation2 + $0x1d0] sm:$0xff]
      %v992 = vld [vmem:[#allocation2 + $0x1d8] sm:$0xff]
      %v993 = vld [vmem:[#allocation2 + $0x1e0] sm:$0xff]
      %v994 = vld [vmem:[#allocation2 + $0x1e8] sm:$0xff]
      %v995 = vld [vmem:[#allocation2 + $0x1f0] sm:$0xff]
      %v996 = vld [vmem:[#allocation2 + $0x1f8] sm:$0xff]
      %v997 = vld [vmem:[#allocation2 + $0x200] sm:$0xff]
      %v998 = vld [vmem:[#allocation2 + $0x208] sm:$0xff]
      %v999 = vld [vmem:[#allocation2 + $0x210] sm:$0xff]
      %v1000 = vld [vmem:[#allocation2 + $0x218] sm:$0xff]
      %v1001 = vld [vmem:[#allocation2 + $0x220] sm:$0xff]
      %v1002 = vld [vmem:[#allocation2 + $0x228] sm:$0xff]
      %v1003 = vld [vmem:[#allocation2 + $0x230] sm:$0xff]
      %v1004 = vld [vmem:[#allocation2 + $0x238] sm:$0xff]
      %v1005 = vld [vmem:[#allocation2 + $0x240] sm:$0xff]
      %v1006 = vld [vmem:[#allocation2 + $0x248] sm:$0xff]
      %v1007 = vld [vmem:[#allocation2 + $0x250] sm:$0xff]
      %v1008 = vld [vmem:[#allocation2 + $0x258] sm:$0xff]
      %v1009 = vld [vmem:[#allocation2 + $0x260] sm:$0xff]
      %v1010 = vld [vmem:[#allocation2 + $0x268] sm:$0xff]
      %v1011 = vld [vmem:[#allocation2 + $0x270] sm:$0xff]
      %v1012 = vld [vmem:[#allocation2 + $0x278] sm:$0xff]
      %v1013 = vld [vmem:[#allocation2 + $0x280] sm:$0xff]
      %v1014 = vld [vmem:[#allocation2 + $0x288] sm:$0xff]
      %v1015 = vld [vmem:[#allocation2 + $0x290] sm:$0xff]
      %v1016 = vld [vmem:[#allocation2 + $0x298] sm:$0xff]
      %v1017 = vld [vmem:[#allocation2 + $0x2a0] sm:$0xff]
      %v1018 = vld [vmem:[#allocation2 + $0x2a8] sm:$0xff]
      %v1019 = vld [vmem:[#allocation2 + $0x2b0] sm:$0xff]
      %v1020 = vld [vmem:[#allocation2 + $0x2b8] sm:$0xff]
      %v1021 = vld [vmem:[#allocation2 + $0x2c0] sm:$0xff]
      %v1022 = vld [vmem:[#allocation2 + $0x2c8] sm:$0xff]
      %v1023 = vld [vmem:[#allocation2 + $0x2d0] sm:$0xff]
      %v1024 = vld [vmem:[#allocation2 + $0x2d8] sm:$0xff]
      %v1025 = vld [vmem:[#allocation2 + $0x2e0] sm:$0xff]
      %v1026 = vld [vmem:[#allocation2 + $0x2e8] sm:$0xff]
      %v1027 = vld [vmem:[#allocation2 + $0x2f0] sm:$0xff]
      %v1028 = vld [vmem:[#allocation2 + $0x2f8] sm:$0xff]
      %v1029 = vld [vmem:[#allocation2 + $0x300] sm:$0xff]
      %v1030 = vld [vmem:[#allocation2 + $0x308] sm:$0xff]
      %v1031 = vld [vmem:[#allocation2 + $0x310] sm:$0xff]
      %v1032 = vld [vmem:[#allocation2 + $0x318] sm:$0xff]
      %v1033 = vld [vmem:[#allocation2 + $0x320] sm:$0xff]
      %v1034 = vld [vmem:[#allocation2 + $0x328] sm:$0xff]
      %v1035 = vld [vmem:[#allocation2 + $0x330] sm:$0xff]
      %v1036 = vld [vmem:[#allocation2 + $0x338] sm:$0xff]
      %v1037 = vld [vmem:[#allocation2 + $0x340] sm:$0xff]
      %v1038 = vld [vmem:[#allocation2 + $0x348] sm:$0xff]
      %v1039 = vld [vmem:[#allocation2 + $0x350] sm:$0xff]
      %v1040 = vld [vmem:[#allocation2 + $0x358] sm:$0xff]
      %vm1041 = vcmask 719872
      %v1043 = vsel %vm1041, %v930, 0
      %v1046 = vsel %vm1041, %v932, 0
      %1048 = vmatpush.msra.mxu0 %v993
      %1049 = vmatpush.msra.mxu0 %v989
      %1050 = vmatpush.msra.mxu0 %v985
      %1051 = vmatpush.msra.mxu0 %v981
      %1052 = vmatpush.msra.mxu0 %v977
      %1053 = vmatpush.msra.mxu0 %v973
      %1054 = vmatpush.msra.mxu0 %v969
      %1055 = vmatpush.msra.mxu0 %v965
      %1056 = vmatpush.msra.mxu0 %v961
      %1057 = vmatpush.msra.mxu0 %v957
      %1058 = vmatpush.msra.mxu0 %v953
      %1059 = vmatpush.msra.mxu0 %v949
      %1060 = vmatpush.msra.mxu0 %v945
      %1061 = vmatpush.msra.mxu0 %v941
      %1062 = vmatpush.msra.mxu0 %v937
      %1063 = vmatpush.msra.mxu0 %v933
      %1064 = vmatmul.f32.gmra.mxu0 %v929
      %v1065 = vpop.f32.mrf.mxu0
      %v1066 = vadd.f32 0.0, %v1065
      %1067 = vmatmul.f32.gmra.mxu0 %v931
      %v1068 = vpop.f32.mrf.mxu0
      %v1069 = vadd.f32 0.0, %v1068
      %1070 = vdwg.mxu0
      %1071 = vmatpush.msra.mxu0 0.0
      %1072 = vmatpush.msra.mxu0 0.0
      %1073 = vmatpush.msra.mxu0 0.0
      %1074 = vmatpush.msra.mxu0 0.0
      %1075 = vmatpush.msra.mxu0 0.0
      %1076 = vmatpush.msra.mxu0 %v1037
      %1077 = vmatpush.msra.mxu0 %v1033
      %1078 = vmatpush.msra.mxu0 %v1029
      %1079 = vmatpush.msra.mxu0 %v1025
      %1080 = vmatpush.msra.mxu0 %v1021
      %1081 = vmatpush.msra.mxu0 %v1017
      %1082 = vmatpush.msra.mxu0 %v1013
      %1083 = vmatpush.msra.mxu0 %v1009
      %1084 = vmatpush.msra.mxu0 %v1005
      %1085 = vmatpush.msra.mxu0 %v1001
      %1086 = vmatpush.msra.mxu0 %v997
      %1087 = vmatmul.f32.gmra.mxu0 %v1043
      %v1088 = vpop.f32.mrf.mxu0
      %v1089 = vadd.f32 %v1066, %v1088
      %1090 = vmatmul.f32.gmra.mxu0 %v1046
      %v1091 = vpop.f32.mrf.mxu0
      %v1092 = vadd.f32 %v1069, %v1091
      %1093 = vdwg.mxu0
      %1094 = vmatpush.msra.mxu0 %v994
      %1095 = vmatpush.msra.mxu0 %v990
      %1096 = vmatpush.msra.mxu0 %v986
      %1097 = vmatpush.msra.mxu0 %v982
      %1098 = vmatpush.msra.mxu0 %v978
      %1099 = vmatpush.msra.mxu0 %v974
      %1100 = vmatpush.msra.mxu0 %v970
      %1101 = vmatpush.msra.mxu0 %v966
      %1102 = vmatpush.msra.mxu0 %v962
      %1103 = vmatpush.msra.mxu0 %v958
      %1104 = vmatpush.msra.mxu0 %v954
      %1105 = vmatpush.msra.mxu0 %v950
      %1106 = vmatpush.msra.mxu0 %v946
      %1107 = vmatpush.msra.mxu0 %v942
      %1108 = vmatpush.msra.mxu0 %v938
      %1109 = vmatpush.msra.mxu0 %v934
      %1110 = vmatmul.f32.gmra.mxu0 %v929
      %v1111 = vpop.f32.mrf.mxu0
      %v1112 = vadd.f32 0.0, %v1111
      %1113 = vmatmul.f32.gmra.mxu0 %v931
      %v1114 = vpop.f32.mrf.mxu0
      %v1115 = vadd.f32 0.0, %v1114
      %1116 = vdwg.mxu0
      %1117 = vmatpush.msra.mxu0 0.0
      %1118 = vmatpush.msra.mxu0 0.0
      %1119 = vmatpush.msra.mxu0 0.0
      %1120 = vmatpush.msra.mxu0 0.0
      %1121 = vmatpush.msra.mxu0 0.0
      %1122 = vmatpush.msra.mxu0 %v1038
      %1123 = vmatpush.msra.mxu0 %v1034
      %1124 = vmatpush.msra.mxu0 %v1030
      %1125 = vmatpush.msra.mxu0 %v1026
      %1126 = vmatpush.msra.mxu0 %v1022
      %1127 = vmatpush.msra.mxu0 %v1018
      %1128 = vmatpush.msra.mxu0 %v1014
      %1129 = vmatpush.msra.mxu0 %v1010
      %1130 = vmatpush.msra.mxu0 %v1006
      %1131 = vmatpush.msra.mxu0 %v1002
      %1132 = vmatpush.msra.mxu0 %v998
      %1133 = vmatmul.f32.gmra.mxu0 %v1043
      %v1134 = vpop.f32.mrf.mxu0
      %v1135 = vadd.f32 %v1112, %v1134
      %1136 = vmatmul.f32.gmra.mxu0 %v1046
      %v1137 = vpop.f32.mrf.mxu0
      %v1138 = vadd.f32 %v1115, %v1137
      %1139 = vdwg.mxu0
      %1140 = vmatpush.msra.mxu0 %v995
      %1141 = vmatpush.msra.mxu0 %v991
      %1142 = vmatpush.msra.mxu0 %v987
      %1143 = vmatpush.msra.mxu0 %v983
      %1144 = vmatpush.msra.mxu0 %v979
      %1145 = vmatpush.msra.mxu0 %v975
      %1146 = vmatpush.msra.mxu0 %v971
      %1147 = vmatpush.msra.mxu0 %v967
      %1148 = vmatpush.msra.mxu0 %v963
      %1149 = vmatpush.msra.mxu0 %v959
      %1150 = vmatpush.msra.mxu0 %v955
      %1151 = vmatpush.msra.mxu0 %v951
      %1152 = vmatpush.msra.mxu0 %v947
      %1153 = vmatpush.msra.mxu0 %v943
      %1154 = vmatpush.msra.mxu0 %v939
      %1155 = vmatpush.msra.mxu0 %v935
      %1156 = vmatmul.f32.gmra.mxu0 %v929
      %v1157 = vpop.f32.mrf.mxu0
      %v1158 = vadd.f32 0.0, %v1157
      %1159 = vmatmul.f32.gmra.mxu0 %v931
      %v1160 = vpop.f32.mrf.mxu0
      %v1161 = vadd.f32 0.0, %v1160
      %1162 = vdwg.mxu0
      %1163 = vmatpush.msra.mxu0 0.0
      %1164 = vmatpush.msra.mxu0 0.0
      %1165 = vmatpush.msra.mxu0 0.0
      %1166 = vmatpush.msra.mxu0 0.0
      %1167 = vmatpush.msra.mxu0 0.0
      %1168 = vmatpush.msra.mxu0 %v1039
      %1169 = vmatpush.msra.mxu0 %v1035
      %1170 = vmatpush.msra.mxu0 %v1031
      %1171 = vmatpush.msra.mxu0 %v1027
      %1172 = vmatpush.msra.mxu0 %v1023
      %1173 = vmatpush.msra.mxu0 %v1019
      %1174 = vmatpush.msra.mxu0 %v1015
      %1175 = vmatpush.msra.mxu0 %v1011
      %1176 = vmatpush.msra.mxu0 %v1007
      %1177 = vmatpush.msra.mxu0 %v1003
      %1178 = vmatpush.msra.mxu0 %v999
      %1179 = vmatmul.f32.gmra.mxu0 %v1043
      %v1180 = vpop.f32.mrf.mxu0
      %v1181 = vadd.f32 %v1158, %v1180
      %1182 = vmatmul.f32.gmra.mxu0 %v1046
      %v1183 = vpop.f32.mrf.mxu0
      %v1184 = vadd.f32 %v1161, %v1183
      %1185 = vdwg.mxu0
      %1186 = vmatpush.msra.mxu0 %v996
      %1187 = vmatpush.msra.mxu0 %v992
      %1188 = vmatpush.msra.mxu0 %v988
      %1189 = vmatpush.msra.mxu0 %v984
      %1190 = vmatpush.msra.mxu0 %v980
      %1191 = vmatpush.msra.mxu0 %v976
      %1192 = vmatpush.msra.mxu0 %v972
      %1193 = vmatpush.msra.mxu0 %v968
      %1194 = vmatpush.msra.mxu0 %v964
      %1195 = vmatpush.msra.mxu0 %v960
      %1196 = vmatpush.msra.mxu0 %v956
      %1197 = vmatpush.msra.mxu0 %v952
      %1198 = vmatpush.msra.mxu0 %v948
      %1199 = vmatpush.msra.mxu0 %v944
      %1200 = vmatpush.msra.mxu0 %v940
      %1201 = vmatpush.msra.mxu0 %v936
      %1202 = vmatmul.f32.gmra.mxu0 %v929
      %v1203 = vpop.f32.mrf.mxu0
      %v1204 = vadd.f32 0.0, %v1203
      %1205 = vmatmul.f32.gmra.mxu0 %v931
      %v1206 = vpop.f32.mrf.mxu0
      %v1207 = vadd.f32 0.0, %v1206
      %1208 = vdwg.mxu0
      %1209 = vmatpush.msra.mxu0 0.0
      %1210 = vmatpush.msra.mxu0 0.0
      %1211 = vmatpush.msra.mxu0 0.0
      %1212 = vmatpush.msra.mxu0 0.0
      %1213 = vmatpush.msra.mxu0 0.0
      %1214 = vmatpush.msra.mxu0 %v1040
      %1215 = vmatpush.msra.mxu0 %v1036
      %1216 = vmatpush.msra.mxu0 %v1032
      %1217 = vmatpush.msra.mxu0 %v1028
      %1218 = vmatpush.msra.mxu0 %v1024
      %1219 = vmatpush.msra.mxu0 %v1020
      %1220 = vmatpush.msra.mxu0 %v1016
      %1221 = vmatpush.msra.mxu0 %v1012
      %1222 = vmatpush.msra.mxu0 %v1008
      %1223 = vmatpush.msra.mxu0 %v1004
      %1224 = vmatpush.msra.mxu0 %v1000
      %1225 = vmatmul.f32.gmra.mxu0 %v1043
      %v1226 = vpop.f32.mrf.mxu0
      %v1227 = vadd.f32 %v1204, %v1226
      %1228 = vmatmul.f32.gmra.mxu0 %v1046
      %v1229 = vpop.f32.mrf.mxu0
      %v1230 = vadd.f32 %v1207, %v1229
      %1231 = vdwg.mxu0
      %v1232 = vld [vmem:[%s4] sm:$0xff]
      %v1233 = vadd.f32 %v1089, %v1135
      %v1234 = vadd.f32 %v1233, %v1181
      %v1235 = vadd.f32 %v1234, %v1227
      %1236 = vadd.xlane.f32.xlu0 %v1235
      %v1237 = vpop.xlane.xlu0 %1236
      %v1238 = vrcp.pop 512.0
      %v1239 = vmul.f32 512.0, %v1238
      %v1240 = vsub.f32 1.0, %v1239
      %v1241 = vmul.f32 %v1238, %v1240
      %v1242 = vadd.f32 %v1238, %v1241
      %vm1243 = vweird.f32 %v1238
      %v1244 = vsel %vm1243, %v1238, %v1242
      %v1245 = vmul.f32 %v1237, %v1244
      %v1246 = vsub.f32 %v1089, %v1245
      %v1247 = vsub.f32 %v1135, %v1245
      %v1248 = vsub.f32 %v1181, %v1245
      %v1249 = vsub.f32 %v1227, %v1245
      %v1250 = vmul.f32 %v1246, %v1246
      %v1251 = vmul.f32 %v1247, %v1247
      %v1252 = vmul.f32 %v1248, %v1248
      %v1253 = vmul.f32 %v1249, %v1249
      %v1254 = vadd.f32 %v1250, %v1251
      %v1255 = vadd.f32 %v1254, %v1252
      %v1256 = vadd.f32 %v1255, %v1253
      %1257 = vadd.xlane.f32.xlu0 %v1256
      %v1258 = vpop.xlane.xlu0 %1257
      %v1259 = vmul.f32 %v1258, %v1244
      %v1260 = vadd.f32 %v1259, 1e-05
      %v1261 = vrsqrt.pop %v1260
      %v1262 = vmul.f32 %v1261, %v1260
      %v1263 = vmul.f32 %v1262, %v1261
      %v1264 = vmul.f32 0.5, %v1263
      %v1265 = vsub.f32 1.5, %v1264
      %v1266 = vmul.f32 %v1261, %v1265
      %vm1267 = vweird.f32 %v1260
      %vm1268 = vweird.f32 %v1261
      %vm1269 = vmor %vm1267, %vm1268
      %v1270 = vsel %vm1269, %v1261, %v1266
      %v1271 = vmul.f32 %v1246, %v1270
      %v1272 = vmul.f32 %v1247, %v1270
      %v1273 = vmul.f32 %v1248, %v1270
      %v1274 = vmul.f32 %v1249, %v1270
      %1276 = vset.pattern.permute.xlu0 0
      %1277 = vperm.xlu0 %1276, %v1232
      %v1278 = vpop.permute.xlu0 %1277
      %v1280 = vmul.f32 %v1271, %v1278
      %v1281 = vmul.f32 %v1272, %v1278
      %v1282 = vmul.f32 %v1273, %v1278
      %v1283 = vmul.f32 %v1274, %v1278
      %1284 = vset.pattern.permute.xlu0 1
      %1285 = vperm.xlu0 %1284, %v1232
      %v1286 = vpop.permute.xlu0 %1285
      %v1288 = vadd.f32 %v1280, %v1286
      %v1289 = vadd.f32 %v1281, %v1286
      %v1290 = vadd.f32 %v1282, %v1286
      %v1291 = vadd.f32 %v1283, %v1286
      %vm1292 = vcmp.gt.f32.partialorder %v1288, 0.0
      %vm1293 = vcmp.gt.f32.partialorder %v1289, 0.0
      %vm1294 = vcmp.gt.f32.partialorder %v1290, 0.0
      %vm1295 = vcmp.gt.f32.partialorder %v1291, 0.0
      %v1296 = vmul.f32 %v1288, 0.01
      %v1297 = vmul.f32 %v1289, 0.01
      %v1298 = vmul.f32 %v1290, 0.01
      %v1299 = vmul.f32 %v1291, 0.01
      %v1300 = vsel %vm1292, %v1288, %v1296
      %v1301 = vsel %vm1293, %v1289, %v1297
      %v1302 = vsel %vm1294, %v1290, %v1298
      %v1303 = vsel %vm1295, %v1291, %v1299
      %v1304 = vld [vmem:[%s1] sm:$0xf]
      %v1305 = vld [vmem:[%s230] sm:$0xf]
      %v1306 = vld [vmem:[%s232] sm:$0xf]
      %v1307 = vld [vmem:[%s234] sm:$0xf]
      %v1308 = vld [vmem:[%s236] sm:$0xf]
      %v1309 = vld [vmem:[%s238] sm:$0xf]
      %1310 = vrot.lane.b32.xlu0 %v1300, 73
      %v1311 = vpop.permute.xlu0 %1310
      %1312 = vrot.lane.b32.xlu0 %v1301, 73
      %v1313 = vpop.permute.xlu0 %1312
      %1314 = vrot.lane.b32.xlu0 %v1302, 73
      %v1315 = vpop.permute.xlu0 %1314
      %1316 = vrot.lane.b32.xlu0 %v1303, 73
      %v1317 = vpop.permute.xlu0 %1316
      %v1318 = vsel %vm250, %v1315, %v1317
      %v1319 = vsel %vm250, %v1313, %v1315
      %v1320 = vsel %vm250, %v1311, %v1313
      %v1321 = vsel %vm250, %v1317, %v1311
      %v1322 = vmul.f32 %v1304, %v1306
      %v1323 = vmul.f32 %v1322, %v1308
      %v1325 = vperm.slane %v1323, 0
      %v1326 = vperm.slane %v1323, 1
      %v1327 = vperm.slane %v1323, 2
      %v1328 = vperm.slane %v1323, 3
      %v1333 = vmul.f32 %v1321, %v1325
      %v1334 = vmul.f32 %v1320, %v1326
      %v1335 = vmul.f32 %v1319, %v1327
      %v1336 = vmul.f32 %v1318, %v1328
      %1337 = vst [vmem:[#allocation2] sm:$0xff] %v1333
      %1338 = vst [vmem:[#allocation2 + $0x8] sm:$0xff] %v1334
      %1339 = vst [vmem:[#allocation2 + $0x10] sm:$0xff] %v1335
      %1340 = vst [vmem:[#allocation2 + $0x18] sm:$0xff] %v1336
      %1341 = vrot.lane.b32.xlu0 %v1300, 72
      %v1342 = vpop.permute.xlu0 %1341
      %1343 = vrot.lane.b32.xlu0 %v1301, 72
      %v1344 = vpop.permute.xlu0 %1343
      %1345 = vrot.lane.b32.xlu0 %v1302, 72
      %v1346 = vpop.permute.xlu0 %1345
      %1347 = vrot.lane.b32.xlu0 %v1303, 72
      %v1348 = vpop.permute.xlu0 %1347
      %v1349 = vsel %vm282, %v1346, %v1348
      %v1350 = vsel %vm282, %v1344, %v1346
      %v1351 = vsel %vm282, %v1342, %v1344
      %v1352 = vsel %vm282, %v1348, %v1342
      %v1354 = vperm.slane %v1322, 0
      %v1355 = vperm.slane %v1322, 1
      %v1356 = vperm.slane %v1322, 2
      %v1357 = vperm.slane %v1322, 3
      %v1362 = vmul.f32 %v1352, %v1354
      %v1363 = vmul.f32 %v1351, %v1355
      %v1364 = vmul.f32 %v1350, %v1356
      %v1365 = vmul.f32 %v1349, %v1357
      %1366 = vst [vmem:[#allocation2 + $0x20] sm:$0xff] %v1362
      %1367 = vst [vmem:[#allocation2 + $0x28] sm:$0xff] %v1363
      %1368 = vst [vmem:[#allocation2 + $0x30] sm:$0xff] %v1364
      %1369 = vst [vmem:[#allocation2 + $0x38] sm:$0xff] %v1365
      %1370 = vrot.lane.b32.xlu0 %v1300, 71
      %v1371 = vpop.permute.xlu0 %1370
      %1372 = vrot.lane.b32.xlu0 %v1301, 71
      %v1373 = vpop.permute.xlu0 %1372
      %1374 = vrot.lane.b32.xlu0 %v1302, 71
      %v1375 = vpop.permute.xlu0 %1374
      %1376 = vrot.lane.b32.xlu0 %v1303, 71
      %v1377 = vpop.permute.xlu0 %1376
      %v1378 = vsel %vm312, %v1375, %v1377
      %v1379 = vsel %vm312, %v1373, %v1375
      %v1380 = vsel %vm312, %v1371, %v1373
      %v1381 = vsel %vm312, %v1377, %v1371
      %v1382 = vmul.f32 %v1322, %v1309
      %v1384 = vperm.slane %v1382, 0
      %v1385 = vperm.slane %v1382, 1
      %v1386 = vperm.slane %v1382, 2
      %v1387 = vperm.slane %v1382, 3
      %v1392 = vmul.f32 %v1381, %v1384
      %v1393 = vmul.f32 %v1380, %v1385
      %v1394 = vmul.f32 %v1379, %v1386
      %v1395 = vmul.f32 %v1378, %v1387
      %1396 = vst [vmem:[#allocation2 + $0x40] sm:$0xff] %v1392
      %1397 = vst [vmem:[#allocation2 + $0x48] sm:$0xff] %v1393
      %1398 = vst [vmem:[#allocation2 + $0x50] sm:$0xff] %v1394
      %1399 = vst [vmem:[#allocation2 + $0x58] sm:$0xff] %v1395
      %1400 = vrot.lane.b32.xlu0 %v1300, 65
      %v1401 = vpop.permute.xlu0 %1400
      %1402 = vrot.lane.b32.xlu0 %v1301, 65
      %v1403 = vpop.permute.xlu0 %1402
      %1404 = vrot.lane.b32.xlu0 %v1302, 65
      %v1405 = vpop.permute.xlu0 %1404
      %1406 = vrot.lane.b32.xlu0 %v1303, 65
      %v1407 = vpop.permute.xlu0 %1406
      %v1408 = vsel %vm343, %v1405, %v1407
      %v1409 = vsel %vm343, %v1403, %v1405
      %v1410 = vsel %vm343, %v1401, %v1403
      %v1411 = vsel %vm343, %v1407, %v1401
      %v1412 = vmul.f32 %v1304, %v1308
      %v1414 = vperm.slane %v1412, 0
      %v1415 = vperm.slane %v1412, 1
      %v1416 = vperm.slane %v1412, 2
      %v1417 = vperm.slane %v1412, 3
      %v1422 = vmul.f32 %v1411, %v1414
      %v1423 = vmul.f32 %v1410, %v1415
      %v1424 = vmul.f32 %v1409, %v1416
      %v1425 = vmul.f32 %v1408, %v1417
      %1426 = vst [vmem:[#allocation2 + $0x60] sm:$0xff] %v1422
      %1427 = vst [vmem:[#allocation2 + $0x68] sm:$0xff] %v1423
      %1428 = vst [vmem:[#allocation2 + $0x70] sm:$0xff] %v1424
      %1429 = vst [vmem:[#allocation2 + $0x78] sm:$0xff] %v1425
      %1430 = vrot.lane.b32.xlu0 %v1300, 64
      %v1431 = vpop.permute.xlu0 %1430
      %1432 = vrot.lane.b32.xlu0 %v1301, 64
      %v1433 = vpop.permute.xlu0 %1432
      %1434 = vrot.lane.b32.xlu0 %v1302, 64
      %v1435 = vpop.permute.xlu0 %1434
      %1436 = vrot.lane.b32.xlu0 %v1303, 64
      %v1437 = vpop.permute.xlu0 %1436
      %v1438 = vsel %vm374, %v1435, %v1437
      %v1439 = vsel %vm374, %v1433, %v1435
      %v1440 = vsel %vm374, %v1431, %v1433
      %v1441 = vsel %vm374, %v1437, %v1431
      %v1443 = vperm.slane %v1304, 0
      %v1444 = vperm.slane %v1304, 1
      %v1445 = vperm.slane %v1304, 2
      %v1446 = vperm.slane %v1304, 3
      %v1451 = vmul.f32 %v1441, %v1443
      %v1452 = vmul.f32 %v1440, %v1444
      %v1453 = vmul.f32 %v1439, %v1445
      %v1454 = vmul.f32 %v1438, %v1446
      %1455 = vst [vmem:[#allocation2 + $0x80] sm:$0xff] %v1451
      %1456 = vst [vmem:[#allocation2 + $0x88] sm:$0xff] %v1452
      %1457 = vst [vmem:[#allocation2 + $0x90] sm:$0xff] %v1453
      %1458 = vst [vmem:[#allocation2 + $0x98] sm:$0xff] %v1454
      %1459 = vrot.lane.b32.xlu0 %v1300, 63
      %v1460 = vpop.permute.xlu0 %1459
      %1461 = vrot.lane.b32.xlu0 %v1301, 63
      %v1462 = vpop.permute.xlu0 %1461
      %1463 = vrot.lane.b32.xlu0 %v1302, 63
      %v1464 = vpop.permute.xlu0 %1463
      %1465 = vrot.lane.b32.xlu0 %v1303, 63
      %v1466 = vpop.permute.xlu0 %1465
      %v1467 = vsel %vm404, %v1464, %v1466
      %v1468 = vsel %vm404, %v1462, %v1464
      %v1469 = vsel %vm404, %v1460, %v1462
      %v1470 = vsel %vm404, %v1466, %v1460
      %v1471 = vmul.f32 %v1304, %v1309
      %v1473 = vperm.slane %v1471, 0
      %v1474 = vperm.slane %v1471, 1
      %v1475 = vperm.slane %v1471, 2
      %v1476 = vperm.slane %v1471, 3
      %v1481 = vmul.f32 %v1470, %v1473
      %v1482 = vmul.f32 %v1469, %v1474
      %v1483 = vmul.f32 %v1468, %v1475
      %v1484 = vmul.f32 %v1467, %v1476
      %1485 = vst [vmem:[#allocation2 + $0xa0] sm:$0xff] %v1481
      %1486 = vst [vmem:[#allocation2 + $0xa8] sm:$0xff] %v1482
      %1487 = vst [vmem:[#allocation2 + $0xb0] sm:$0xff] %v1483
      %1488 = vst [vmem:[#allocation2 + $0xb8] sm:$0xff] %v1484
      %1489 = vrot.lane.b32.xlu0 %v1300, 57
      %v1490 = vpop.permute.xlu0 %1489
      %1491 = vrot.lane.b32.xlu0 %v1301, 57
      %v1492 = vpop.permute.xlu0 %1491
      %1493 = vrot.lane.b32.xlu0 %v1302, 57
      %v1494 = vpop.permute.xlu0 %1493
      %1495 = vrot.lane.b32.xlu0 %v1303, 57
      %v1496 = vpop.permute.xlu0 %1495
      %v1497 = vsel %vm435, %v1494, %v1496
      %v1498 = vsel %vm435, %v1492, %v1494
      %v1499 = vsel %vm435, %v1490, %v1492
      %v1500 = vsel %vm435, %v1496, %v1490
      %v1501 = vmul.f32 %v1304, %v1307
      %v1502 = vmul.f32 %v1501, %v1308
      %v1504 = vperm.slane %v1502, 0
      %v1505 = vperm.slane %v1502, 1
      %v1506 = vperm.slane %v1502, 2
      %v1507 = vperm.slane %v1502, 3
      %v1512 = vmul.f32 %v1500, %v1504
      %v1513 = vmul.f32 %v1499, %v1505
      %v1514 = vmul.f32 %v1498, %v1506
      %v1515 = vmul.f32 %v1497, %v1507
      %1516 = vst [vmem:[#allocation2 + $0xc0] sm:$0xff] %v1512
      %1517 = vst [vmem:[#allocation2 + $0xc8] sm:$0xff] %v1513
      %1518 = vst [vmem:[#allocation2 + $0xd0] sm:$0xff] %v1514
      %1519 = vst [vmem:[#allocation2 + $0xd8] sm:$0xff] %v1515
      %1520 = vrot.lane.b32.xlu0 %v1300, 56
      %v1521 = vpop.permute.xlu0 %1520
      %1522 = vrot.lane.b32.xlu0 %v1301, 56
      %v1523 = vpop.permute.xlu0 %1522
      %1524 = vrot.lane.b32.xlu0 %v1302, 56
      %v1525 = vpop.permute.xlu0 %1524
      %1526 = vrot.lane.b32.xlu0 %v1303, 56
      %v1527 = vpop.permute.xlu0 %1526
      %v1528 = vsel %vm467, %v1525, %v1527
      %v1529 = vsel %vm467, %v1523, %v1525
      %v1530 = vsel %vm467, %v1521, %v1523
      %v1531 = vsel %vm467, %v1527, %v1521
      %v1533 = vperm.slane %v1501, 0
      %v1534 = vperm.slane %v1501, 1
      %v1535 = vperm.slane %v1501, 2
      %v1536 = vperm.slane %v1501, 3
      %v1541 = vmul.f32 %v1531, %v1533
      %v1542 = vmul.f32 %v1530, %v1534
      %v1543 = vmul.f32 %v1529, %v1535
      %v1544 = vmul.f32 %v1528, %v1536
      %1545 = vst [vmem:[#allocation2 + $0xe0] sm:$0xff] %v1541
      %1546 = vst [vmem:[#allocation2 + $0xe8] sm:$0xff] %v1542
      %1547 = vst [vmem:[#allocation2 + $0xf0] sm:$0xff] %v1543
      %1548 = vst [vmem:[#allocation2 + $0xf8] sm:$0xff] %v1544
      %1549 = vrot.lane.b32.xlu0 %v1300, 55
      %v1550 = vpop.permute.xlu0 %1549
      %1551 = vrot.lane.b32.xlu0 %v1301, 55
      %v1552 = vpop.permute.xlu0 %1551
      %1553 = vrot.lane.b32.xlu0 %v1302, 55
      %v1554 = vpop.permute.xlu0 %1553
      %1555 = vrot.lane.b32.xlu0 %v1303, 55
      %v1556 = vpop.permute.xlu0 %1555
      %v1557 = vsel %vm497, %v1554, %v1556
      %v1558 = vsel %vm497, %v1552, %v1554
      %v1559 = vsel %vm497, %v1550, %v1552
      %v1560 = vsel %vm497, %v1556, %v1550
      %v1561 = vmul.f32 %v1501, %v1309
      %v1563 = vperm.slane %v1561, 0
      %v1564 = vperm.slane %v1561, 1
      %v1565 = vperm.slane %v1561, 2
      %v1566 = vperm.slane %v1561, 3
      %v1571 = vmul.f32 %v1560, %v1563
      %v1572 = vmul.f32 %v1559, %v1564
      %v1573 = vmul.f32 %v1558, %v1565
      %v1574 = vmul.f32 %v1557, %v1566
      %1575 = vst [vmem:[#allocation2 + $0x100] sm:$0xff] %v1571
      %1576 = vst [vmem:[#allocation2 + $0x108] sm:$0xff] %v1572
      %1577 = vst [vmem:[#allocation2 + $0x110] sm:$0xff] %v1573
      %1578 = vst [vmem:[#allocation2 + $0x118] sm:$0xff] %v1574
      %1579 = vrot.lane.b32.xlu0 %v1300, 9
      %v1580 = vpop.permute.xlu0 %1579
      %1581 = vrot.lane.b32.xlu0 %v1301, 9
      %v1582 = vpop.permute.xlu0 %1581
      %1583 = vrot.lane.b32.xlu0 %v1302, 9
      %v1584 = vpop.permute.xlu0 %1583
      %1585 = vrot.lane.b32.xlu0 %v1303, 9
      %v1586 = vpop.permute.xlu0 %1585
      %v1587 = vsel %vm528, %v1584, %v1586
      %v1588 = vsel %vm528, %v1582, %v1584
      %v1589 = vsel %vm528, %v1580, %v1582
      %v1590 = vsel %vm528, %v1586, %v1580
      %v1591 = vmul.f32 %v1306, %v1308
      %v1593 = vperm.slane %v1591, 0
      %v1594 = vperm.slane %v1591, 1
      %v1595 = vperm.slane %v1591, 2
      %v1596 = vperm.slane %v1591, 3
      %v1601 = vmul.f32 %v1590, %v1593
      %v1602 = vmul.f32 %v1589, %v1594
      %v1603 = vmul.f32 %v1588, %v1595
      %v1604 = vmul.f32 %v1587, %v1596
      %1605 = vst [vmem:[#allocation2 + $0x120] sm:$0xff] %v1601
      %1606 = vst [vmem:[#allocation2 + $0x128] sm:$0xff] %v1602
      %1607 = vst [vmem:[#allocation2 + $0x130] sm:$0xff] %v1603
      %1608 = vst [vmem:[#allocation2 + $0x138] sm:$0xff] %v1604
      %1609 = vrot.lane.b32.xlu0 %v1300, 8
      %v1610 = vpop.permute.xlu0 %1609
      %1611 = vrot.lane.b32.xlu0 %v1301, 8
      %v1612 = vpop.permute.xlu0 %1611
      %1613 = vrot.lane.b32.xlu0 %v1302, 8
      %v1614 = vpop.permute.xlu0 %1613
      %1615 = vrot.lane.b32.xlu0 %v1303, 8
      %v1616 = vpop.permute.xlu0 %1615
      %v1617 = vsel %vm559, %v1614, %v1616
      %v1618 = vsel %vm559, %v1612, %v1614
      %v1619 = vsel %vm559, %v1610, %v1612
      %v1620 = vsel %vm559, %v1616, %v1610
      %v1622 = vperm.slane %v1306, 0
      %v1623 = vperm.slane %v1306, 1
      %v1624 = vperm.slane %v1306, 2
      %v1625 = vperm.slane %v1306, 3
      %v1630 = vmul.f32 %v1620, %v1622
      %v1631 = vmul.f32 %v1619, %v1623
      %v1632 = vmul.f32 %v1618, %v1624
      %v1633 = vmul.f32 %v1617, %v1625
      %1634 = vst [vmem:[#allocation2 + $0x140] sm:$0xff] %v1630
      %1635 = vst [vmem:[#allocation2 + $0x148] sm:$0xff] %v1631
      %1636 = vst [vmem:[#allocation2 + $0x150] sm:$0xff] %v1632
      %1637 = vst [vmem:[#allocation2 + $0x158] sm:$0xff] %v1633
      %1638 = vrot.lane.b32.xlu0 %v1300, 7
      %v1639 = vpop.permute.xlu0 %1638
      %1640 = vrot.lane.b32.xlu0 %v1301, 7
      %v1641 = vpop.permute.xlu0 %1640
      %1642 = vrot.lane.b32.xlu0 %v1302, 7
      %v1643 = vpop.permute.xlu0 %1642
      %1644 = vrot.lane.b32.xlu0 %v1303, 7
      %v1645 = vpop.permute.xlu0 %1644
      %v1646 = vsel %vm589, %v1643, %v1645
      %v1647 = vsel %vm589, %v1641, %v1643
      %v1648 = vsel %vm589, %v1639, %v1641
      %v1649 = vsel %vm589, %v1645, %v1639
      %v1650 = vmul.f32 %v1306, %v1309
      %v1652 = vperm.slane %v1650, 0
      %v1653 = vperm.slane %v1650, 1
      %v1654 = vperm.slane %v1650, 2
      %v1655 = vperm.slane %v1650, 3
      %v1660 = vmul.f32 %v1649, %v1652
      %v1661 = vmul.f32 %v1648, %v1653
      %v1662 = vmul.f32 %v1647, %v1654
      %v1663 = vmul.f32 %v1646, %v1655
      %1664 = vst [vmem:[#allocation2 + $0x160] sm:$0xff] %v1660
      %1665 = vst [vmem:[#allocation2 + $0x168] sm:$0xff] %v1661
      %1666 = vst [vmem:[#allocation2 + $0x170] sm:$0xff] %v1662
      %1667 = vst [vmem:[#allocation2 + $0x178] sm:$0xff] %v1663
      %1668 = vrot.lane.b32.xlu0 %v1300, 1
      %v1669 = vpop.permute.xlu0 %1668
      %1670 = vrot.lane.b32.xlu0 %v1301, 1
      %v1671 = vpop.permute.xlu0 %1670
      %1672 = vrot.lane.b32.xlu0 %v1302, 1
      %v1673 = vpop.permute.xlu0 %1672
      %1674 = vrot.lane.b32.xlu0 %v1303, 1
      %v1675 = vpop.permute.xlu0 %1674
      %v1676 = vsel %vm620, %v1673, %v1675
      %v1677 = vsel %vm620, %v1671, %v1673
      %v1678 = vsel %vm620, %v1669, %v1671
      %v1679 = vsel %vm620, %v1675, %v1669
      %v1681 = vperm.slane %v1308, 0
      %v1682 = vperm.slane %v1308, 1
      %v1683 = vperm.slane %v1308, 2
      %v1684 = vperm.slane %v1308, 3
      %v1689 = vmul.f32 %v1679, %v1681
      %v1690 = vmul.f32 %v1678, %v1682
      %v1691 = vmul.f32 %v1677, %v1683
      %v1692 = vmul.f32 %v1676, %v1684
      %1693 = vst [vmem:[#allocation2 + $0x180] sm:$0xff] %v1689
      %1694 = vst [vmem:[#allocation2 + $0x188] sm:$0xff] %v1690
      %1695 = vst [vmem:[#allocation2 + $0x190] sm:$0xff] %v1691
      %1696 = vst [vmem:[#allocation2 + $0x198] sm:$0xff] %v1692
      %1697 = vst [vmem:[#allocation2 + $0x1a0] sm:$0xff] %v1300
      %1698 = vst [vmem:[#allocation2 + $0x1a8] sm:$0xff] %v1301
      %1699 = vst [vmem:[#allocation2 + $0x1b0] sm:$0xff] %v1302
      %1700 = vst [vmem:[#allocation2 + $0x1b8] sm:$0xff] %v1303
      %1701 = vrot.lane.b32.xlu0 %v1300, 127
      %v1702 = vpop.permute.xlu0 %1701
      %1703 = vrot.lane.b32.xlu0 %v1301, 127
      %v1704 = vpop.permute.xlu0 %1703
      %1705 = vrot.lane.b32.xlu0 %v1302, 127
      %v1706 = vpop.permute.xlu0 %1705
      %1707 = vrot.lane.b32.xlu0 %v1303, 127
      %v1708 = vpop.permute.xlu0 %1707
      %v1709 = vsel %vm654, %v1706, %v1708
      %v1710 = vsel %vm654, %v1704, %v1706
      %v1711 = vsel %vm654, %v1702, %v1704
      %v1712 = vsel %vm654, %v1708, %v1702
      %v1714 = vperm.slane %v1309, 0
      %v1715 = vperm.slane %v1309, 1
      %v1716 = vperm.slane %v1309, 2
      %v1717 = vperm.slane %v1309, 3
      %v1722 = vmul.f32 %v1711, %v1714
      %v1723 = vmul.f32 %v1710, %v1715
      %v1724 = vmul.f32 %v1709, %v1716
      %v1725 = vmul.f32 %v1712, %v1717
      %1726 = vst [vmem:[#allocation2 + $0x1c0] sm:$0xff] %v1722
      %1727 = vst [vmem:[#allocation2 + $0x1c8] sm:$0xff] %v1723
      %1728 = vst [vmem:[#allocation2 + $0x1d0] sm:$0xff] %v1724
      %1729 = vst [vmem:[#allocation2 + $0x1d8] sm:$0xff] %v1725
      %1730 = vrot.lane.b32.xlu0 %v1300, 121
      %v1731 = vpop.permute.xlu0 %1730
      %1732 = vrot.lane.b32.xlu0 %v1301, 121
      %v1733 = vpop.permute.xlu0 %1732
      %1734 = vrot.lane.b32.xlu0 %v1302, 121
      %v1735 = vpop.permute.xlu0 %1734
      %1736 = vrot.lane.b32.xlu0 %v1303, 121
      %v1737 = vpop.permute.xlu0 %1736
      %v1738 = vsel %vm684, %v1735, %v1737
      %v1739 = vsel %vm684, %v1733, %v1735
      %v1740 = vsel %vm684, %v1731, %v1733
      %v1741 = vsel %vm684, %v1737, %v1731
      %v1742 = vmul.f32 %v1307, %v1308
      %v1744 = vperm.slane %v1742, 0
      %v1745 = vperm.slane %v1742, 1
      %v1746 = vperm.slane %v1742, 2
      %v1747 = vperm.slane %v1742, 3
      %v1752 = vmul.f32 %v1740, %v1744
      %v1753 = vmul.f32 %v1739, %v1745
      %v1754 = vmul.f32 %v1738, %v1746
      %v1755 = vmul.f32 %v1741, %v1747
      %1756 = vst [vmem:[#allocation2 + $0x1e0] sm:$0xff] %v1752
      %1757 = vst [vmem:[#allocation2 + $0x1e8] sm:$0xff] %v1753
      %1758 = vst [vmem:[#allocation2 + $0x1f0] sm:$0xff] %v1754
      %1759 = vst [vmem:[#allocation2 + $0x1f8] sm:$0xff] %v1755
      %1760 = vrot.lane.b32.xlu0 %v1300, 120
      %v1761 = vpop.permute.xlu0 %1760
      %1762 = vrot.lane.b32.xlu0 %v1301, 120
      %v1763 = vpop.permute.xlu0 %1762
      %1764 = vrot.lane.b32.xlu0 %v1302, 120
      %v1765 = vpop.permute.xlu0 %1764
      %1766 = vrot.lane.b32.xlu0 %v1303, 120
      %v1767 = vpop.permute.xlu0 %1766
      %v1768 = vsel %vm715, %v1765, %v1767
      %v1769 = vsel %vm715, %v1763, %v1765
      %v1770 = vsel %vm715, %v1761, %v1763
      %v1771 = vsel %vm715, %v1767, %v1761
      %v1773 = vperm.slane %v1307, 0
      %v1774 = vperm.slane %v1307, 1
      %v1775 = vperm.slane %v1307, 2
      %v1776 = vperm.slane %v1307, 3
      %v1781 = vmul.f32 %v1770, %v1773
      %v1782 = vmul.f32 %v1769, %v1774
      %v1783 = vmul.f32 %v1768, %v1775
      %v1784 = vmul.f32 %v1771, %v1776
      %1785 = vst [vmem:[#allocation2 + $0x200] sm:$0xff] %v1781
      %1786 = vst [vmem:[#allocation2 + $0x208] sm:$0xff] %v1782
      %1787 = vst [vmem:[#allocation2 + $0x210] sm:$0xff] %v1783
      %1788 = vst [vmem:[#allocation2 + $0x218] sm:$0xff] %v1784
      %1789 = vrot.lane.b32.xlu0 %v1300, 119
      %v1790 = vpop.permute.xlu0 %1789
      %1791 = vrot.lane.b32.xlu0 %v1301, 119
      %v1792 = vpop.permute.xlu0 %1791
      %1793 = vrot.lane.b32.xlu0 %v1302, 119
      %v1794 = vpop.permute.xlu0 %1793
      %1795 = vrot.lane.b32.xlu0 %v1303, 119
      %v1796 = vpop.permute.xlu0 %1795
      %v1797 = vsel %vm745, %v1794, %v1796
      %v1798 = vsel %vm745, %v1792, %v1794
      %v1799 = vsel %vm745, %v1790, %v1792
      %v1800 = vsel %vm745, %v1796, %v1790
      %v1801 = vmul.f32 %v1307, %v1309
      %v1803 = vperm.slane %v1801, 0
      %v1804 = vperm.slane %v1801, 1
      %v1805 = vperm.slane %v1801, 2
      %v1806 = vperm.slane %v1801, 3
      %v1811 = vmul.f32 %v1799, %v1803
      %v1812 = vmul.f32 %v1798, %v1804
      %v1813 = vmul.f32 %v1797, %v1805
      %v1814 = vmul.f32 %v1800, %v1806
      %1815 = vst [vmem:[#allocation2 + $0x220] sm:$0xff] %v1811
      %1816 = vst [vmem:[#allocation2 + $0x228] sm:$0xff] %v1812
      %1817 = vst [vmem:[#allocation2 + $0x230] sm:$0xff] %v1813
      %1818 = vst [vmem:[#allocation2 + $0x238] sm:$0xff] %v1814
      %v1819 = vmul.f32 %v1305, %v1306
      %v1820 = vmul.f32 %v1819, %v1308
      %v1822 = vperm.slane %v1820, 0
      %v1823 = vperm.slane %v1820, 1
      %v1824 = vperm.slane %v1820, 2
      %v1825 = vperm.slane %v1820, 3
      %v1830 = vmul.f32 %v1320, %v1822
      %v1831 = vmul.f32 %v1319, %v1823
      %v1832 = vmul.f32 %v1318, %v1824
      %v1833 = vmul.f32 %v1321, %v1825
      %1834 = vst [vmem:[#allocation2 + $0x240] sm:$0xff] %v1830
      %1835 = vst [vmem:[#allocation2 + $0x248] sm:$0xff] %v1831
      %1836 = vst [vmem:[#allocation2 + $0x250] sm:$0xff] %v1832
      %1837 = vst [vmem:[#allocation2 + $0x258] sm:$0xff] %v1833
      %v1839 = vperm.slane %v1819, 0
      %v1840 = vperm.slane %v1819, 1
      %v1841 = vperm.slane %v1819, 2
      %v1842 = vperm.slane %v1819, 3
      %v1847 = vmul.f32 %v1351, %v1839
      %v1848 = vmul.f32 %v1350, %v1840
      %v1849 = vmul.f32 %v1349, %v1841
      %v1850 = vmul.f32 %v1352, %v1842
      %1851 = vst [vmem:[#allocation2 + $0x260] sm:$0xff] %v1847
      %1852 = vst [vmem:[#allocation2 + $0x268] sm:$0xff] %v1848
      %1853 = vst [vmem:[#allocation2 + $0x270] sm:$0xff] %v1849
      %1854 = vst [vmem:[#allocation2 + $0x278] sm:$0xff] %v1850
      %v1855 = vmul.f32 %v1819, %v1309
      %v1857 = vperm.slane %v1855, 0
      %v1858 = vperm.slane %v1855, 1
      %v1859 = vperm.slane %v1855, 2
      %v1860 = vperm.slane %v1855, 3
      %v1865 = vmul.f32 %v1380, %v1857
      %v1866 = vmul.f32 %v1379, %v1858
      %v1867 = vmul.f32 %v1378, %v1859
      %v1868 = vmul.f32 %v1381, %v1860
      %1869 = vst [vmem:[#allocation2 + $0x280] sm:$0xff] %v1865
      %1870 = vst [vmem:[#allocation2 + $0x288] sm:$0xff] %v1866
      %1871 = vst [vmem:[#allocation2 + $0x290] sm:$0xff] %v1867
      %1872 = vst [vmem:[#allocation2 + $0x298] sm:$0xff] %v1868
      %v1873 = vmul.f32 %v1305, %v1308
      %v1875 = vperm.slane %v1873, 0
      %v1876 = vperm.slane %v1873, 1
      %v1877 = vperm.slane %v1873, 2
      %v1878 = vperm.slane %v1873, 3
      %v1883 = vmul.f32 %v1410, %v1875
      %v1884 = vmul.f32 %v1409, %v1876
      %v1885 = vmul.f32 %v1408, %v1877
      %v1886 = vmul.f32 %v1411, %v1878
      %1887 = vst [vmem:[#allocation2 + $0x2a0] sm:$0xff] %v1883
      %1888 = vst [vmem:[#allocation2 + $0x2a8] sm:$0xff] %v1884
      %1889 = vst [vmem:[#allocation2 + $0x2b0] sm:$0xff] %v1885
      %1890 = vst [vmem:[#allocation2 + $0x2b8] sm:$0xff] %v1886
      %v1892 = vperm.slane %v1305, 0
      %v1893 = vperm.slane %v1305, 1
      %v1894 = vperm.slane %v1305, 2
      %v1895 = vperm.slane %v1305, 3
      %v1900 = vmul.f32 %v1440, %v1892
      %v1901 = vmul.f32 %v1439, %v1893
      %v1902 = vmul.f32 %v1438, %v1894
      %v1903 = vmul.f32 %v1441, %v1895
      %1904 = vst [vmem:[#allocation2 + $0x2c0] sm:$0xff] %v1900
      %1905 = vst [vmem:[#allocation2 + $0x2c8] sm:$0xff] %v1901
      %1906 = vst [vmem:[#allocation2 + $0x2d0] sm:$0xff] %v1902
      %1907 = vst [vmem:[#allocation2 + $0x2d8] sm:$0xff] %v1903
      %v1908 = vmul.f32 %v1305, %v1309
      %v1910 = vperm.slane %v1908, 0
      %v1911 = vperm.slane %v1908, 1
      %v1912 = vperm.slane %v1908, 2
      %v1913 = vperm.slane %v1908, 3
      %v1918 = vmul.f32 %v1469, %v1910
      %v1919 = vmul.f32 %v1468, %v1911
      %v1920 = vmul.f32 %v1467, %v1912
      %v1921 = vmul.f32 %v1470, %v1913
      %1922 = vst [vmem:[#allocation2 + $0x2e0] sm:$0xff] %v1918
      %1923 = vst [vmem:[#allocation2 + $0x2e8] sm:$0xff] %v1919
      %1924 = vst [vmem:[#allocation2 + $0x2f0] sm:$0xff] %v1920
      %1925 = vst [vmem:[#allocation2 + $0x2f8] sm:$0xff] %v1921
      %v1926 = vmul.f32 %v1305, %v1307
      %v1927 = vmul.f32 %v1926, %v1308
      %v1929 = vperm.slane %v1927, 0
      %v1930 = vperm.slane %v1927, 1
      %v1931 = vperm.slane %v1927, 2
      %v1932 = vperm.slane %v1927, 3
      %v1937 = vmul.f32 %v1499, %v1929
      %v1938 = vmul.f32 %v1498, %v1930
      %v1939 = vmul.f32 %v1497, %v1931
      %v1940 = vmul.f32 %v1500, %v1932
      %1941 = vst [vmem:[#allocation2 + $0x300] sm:$0xff] %v1937
      %1942 = vst [vmem:[#allocation2 + $0x308] sm:$0xff] %v1938
      %1943 = vst [vmem:[#allocation2 + $0x310] sm:$0xff] %v1939
      %1944 = vst [vmem:[#allocation2 + $0x318] sm:$0xff] %v1940
      %v1946 = vperm.slane %v1926, 0
      %v1947 = vperm.slane %v1926, 1
      %v1948 = vperm.slane %v1926, 2
      %v1949 = vperm.slane %v1926, 3
      %v1954 = vmul.f32 %v1530, %v1946
      %v1955 = vmul.f32 %v1529, %v1947
      %v1956 = vmul.f32 %v1528, %v1948
      %v1957 = vmul.f32 %v1531, %v1949
      %1958 = vst [vmem:[#allocation2 + $0x320] sm:$0xff] %v1954
      %1959 = vst [vmem:[#allocation2 + $0x328] sm:$0xff] %v1955
      %1960 = vst [vmem:[#allocation2 + $0x330] sm:$0xff] %v1956
      %1961 = vst [vmem:[#allocation2 + $0x338] sm:$0xff] %v1957
      %v1962 = vmul.f32 %v1926, %v1309
      %v1964 = vperm.slane %v1962, 0
      %v1965 = vperm.slane %v1962, 1
      %v1966 = vperm.slane %v1962, 2
      %v1967 = vperm.slane %v1962, 3
      %v1972 = vmul.f32 %v1559, %v1964
      %v1973 = vmul.f32 %v1558, %v1965
      %v1974 = vmul.f32 %v1557, %v1966
      %v1975 = vmul.f32 %v1560, %v1967
      %1976 = vst [vmem:[#allocation2 + $0x340] sm:$0xff] %v1972
      %1977 = vst [vmem:[#allocation2 + $0x348] sm:$0xff] %v1973
      %1978 = vst [vmem:[#allocation2 + $0x350] sm:$0xff] %v1974
      %1979 = vst [vmem:[#allocation2 + $0x358] sm:$0xff] %v1975
      %v1980 = vld [vmem:[%s3] sm:$0xff]
      %v1981 = vld [vmem:[%s3 + $0x8] sm:$0xff]
      %v1982 = vld [vmem:[#allocation2] sm:$0xff]
      %v1983 = vld [vmem:[#allocation2 + $0x8] sm:$0xff]
      %v1984 = vld [vmem:[#allocation2 + $0x10] sm:$0xff]
      %v1985 = vld [vmem:[#allocation2 + $0x18] sm:$0xff]
      %v1986 = vld [vmem:[#allocation2 + $0x20] sm:$0xff]
      %v1987 = vld [vmem:[#allocation2 + $0x28] sm:$0xff]
      %v1988 = vld [vmem:[#allocation2 + $0x30] sm:$0xff]
      %v1989 = vld [vmem:[#allocation2 + $0x38] sm:$0xff]
      %v1990 = vld [vmem:[#allocation2 + $0x40] sm:$0xff]
      %v1991 = vld [vmem:[#allocation2 + $0x48] sm:$0xff]
      %v1992 = vld [vmem:[#allocation2 + $0x50] sm:$0xff]
      %v1993 = vld [vmem:[#allocation2 + $0x58] sm:$0xff]
      %v1994 = vld [vmem:[#allocation2 + $0x60] sm:$0xff]
      %v1995 = vld [vmem:[#allocation2 + $0x68] sm:$0xff]
      %v1996 = vld [vmem:[#allocation2 + $0x70] sm:$0xff]
      %v1997 = vld [vmem:[#allocation2 + $0x78] sm:$0xff]
      %v1998 = vld [vmem:[#allocation2 + $0x80] sm:$0xff]
      %v1999 = vld [vmem:[#allocation2 + $0x88] sm:$0xff]
      %v2000 = vld [vmem:[#allocation2 + $0x90] sm:$0xff]
      %v2001 = vld [vmem:[#allocation2 + $0x98] sm:$0xff]
      %v2002 = vld [vmem:[#allocation2 + $0xa0] sm:$0xff]
      %v2003 = vld [vmem:[#allocation2 + $0xa8] sm:$0xff]
      %v2004 = vld [vmem:[#allocation2 + $0xb0] sm:$0xff]
      %v2005 = vld [vmem:[#allocation2 + $0xb8] sm:$0xff]
      %v2006 = vld [vmem:[#allocation2 + $0xc0] sm:$0xff]
      %v2007 = vld [vmem:[#allocation2 + $0xc8] sm:$0xff]
      %v2008 = vld [vmem:[#allocation2 + $0xd0] sm:$0xff]
      %v2009 = vld [vmem:[#allocation2 + $0xd8] sm:$0xff]
      %v2010 = vld [vmem:[#allocation2 + $0xe0] sm:$0xff]
      %v2011 = vld [vmem:[#allocation2 + $0xe8] sm:$0xff]
      %v2012 = vld [vmem:[#allocation2 + $0xf0] sm:$0xff]
      %v2013 = vld [vmem:[#allocation2 + $0xf8] sm:$0xff]
      %v2014 = vld [vmem:[#allocation2 + $0x100] sm:$0xff]
      %v2015 = vld [vmem:[#allocation2 + $0x108] sm:$0xff]
      %v2016 = vld [vmem:[#allocation2 + $0x110] sm:$0xff]
      %v2017 = vld [vmem:[#allocation2 + $0x118] sm:$0xff]
      %v2018 = vld [vmem:[#allocation2 + $0x120] sm:$0xff]
      %v2019 = vld [vmem:[#allocation2 + $0x128] sm:$0xff]
      %v2020 = vld [vmem:[#allocation2 + $0x130] sm:$0xff]
      %v2021 = vld [vmem:[#allocation2 + $0x138] sm:$0xff]
      %v2022 = vld [vmem:[#allocation2 + $0x140] sm:$0xff]
      %v2023 = vld [vmem:[#allocation2 + $0x148] sm:$0xff]
      %v2024 = vld [vmem:[#allocation2 + $0x150] sm:$0xff]
      %v2025 = vld [vmem:[#allocation2 + $0x158] sm:$0xff]
      %v2026 = vld [vmem:[#allocation2 + $0x160] sm:$0xff]
      %v2027 = vld [vmem:[#allocation2 + $0x168] sm:$0xff]
      %v2028 = vld [vmem:[#allocation2 + $0x170] sm:$0xff]
      %v2029 = vld [vmem:[#allocation2 + $0x178] sm:$0xff]
      %v2030 = vld [vmem:[#allocation2 + $0x180] sm:$0xff]
      %v2031 = vld [vmem:[#allocation2 + $0x188] sm:$0xff]
      %v2032 = vld [vmem:[#allocation2 + $0x190] sm:$0xff]
      %v2033 = vld [vmem:[#allocation2 + $0x198] sm:$0xff]
      %v2034 = vld [vmem:[#allocation2 + $0x1a0] sm:$0xff]
      %v2035 = vld [vmem:[#allocation2 + $0x1a8] sm:$0xff]
      %v2036 = vld [vmem:[#allocation2 + $0x1b0] sm:$0xff]
      %v2037 = vld [vmem:[#allocation2 + $0x1b8] sm:$0xff]
      %v2038 = vld [vmem:[#allocation2 + $0x1c0] sm:$0xff]
      %v2039 = vld [vmem:[#allocation2 + $0x1c8] sm:$0xff]
      %v2040 = vld [vmem:[#allocation2 + $0x1d0] sm:$0xff]
      %v2041 = vld [vmem:[#allocation2 + $0x1d8] sm:$0xff]
      %v2042 = vld [vmem:[#allocation2 + $0x1e0] sm:$0xff]
      %v2043 = vld [vmem:[#allocation2 + $0x1e8] sm:$0xff]
      %v2044 = vld [vmem:[#allocation2 + $0x1f0] sm:$0xff]
      %v2045 = vld [vmem:[#allocation2 + $0x1f8] sm:$0xff]
      %v2046 = vld [vmem:[#allocation2 + $0x200] sm:$0xff]
      %v2047 = vld [vmem:[#allocation2 + $0x208] sm:$0xff]
      %v2048 = vld [vmem:[#allocation2 + $0x210] sm:$0xff]
      %v2049 = vld [vmem:[#allocation2 + $0x218] sm:$0xff]
      %v2050 = vld [vmem:[#allocation2 + $0x220] sm:$0xff]
      %v2051 = vld [vmem:[#allocation2 + $0x228] sm:$0xff]
      %v2052 = vld [vmem:[#allocation2 + $0x230] sm:$0xff]
      %v2053 = vld [vmem:[#allocation2 + $0x238] sm:$0xff]
      %v2054 = vld [vmem:[#allocation2 + $0x240] sm:$0xff]
      %v2055 = vld [vmem:[#allocation2 + $0x248] sm:$0xff]
      %v2056 = vld [vmem:[#allocation2 + $0x250] sm:$0xff]
      %v2057 = vld [vmem:[#allocation2 + $0x258] sm:$0xff]
      %v2058 = vld [vmem:[#allocation2 + $0x260] sm:$0xff]
      %v2059 = vld [vmem:[#allocation2 + $0x268] sm:$0xff]
      %v2060 = vld [vmem:[#allocation2 + $0x270] sm:$0xff]
      %v2061 = vld [vmem:[#allocation2 + $0x278] sm:$0xff]
      %v2062 = vld [vmem:[#allocation2 + $0x280] sm:$0xff]
      %v2063 = vld [vmem:[#allocation2 + $0x288] sm:$0xff]
      %v2064 = vld [vmem:[#allocation2 + $0x290] sm:$0xff]
      %v2065 = vld [vmem:[#allocation2 + $0x298] sm:$0xff]
      %v2066 = vld [vmem:[#allocation2 + $0x2a0] sm:$0xff]
      %v2067 = vld [vmem:[#allocation2 + $0x2a8] sm:$0xff]
      %v2068 = vld [vmem:[#allocation2 + $0x2b0] sm:$0xff]
      %v2069 = vld [vmem:[#allocation2 + $0x2b8] sm:$0xff]
      %v2070 = vld [vmem:[#allocation2 + $0x2c0] sm:$0xff]
      %v2071 = vld [vmem:[#allocation2 + $0x2c8] sm:$0xff]
      %v2072 = vld [vmem:[#allocation2 + $0x2d0] sm:$0xff]
      %v2073 = vld [vmem:[#allocation2 + $0x2d8] sm:$0xff]
      %v2074 = vld [vmem:[#allocation2 + $0x2e0] sm:$0xff]
      %v2075 = vld [vmem:[#allocation2 + $0x2e8] sm:$0xff]
      %v2076 = vld [vmem:[#allocation2 + $0x2f0] sm:$0xff]
      %v2077 = vld [vmem:[#allocation2 + $0x2f8] sm:$0xff]
      %v2078 = vld [vmem:[#allocation2 + $0x300] sm:$0xff]
      %v2079 = vld [vmem:[#allocation2 + $0x308] sm:$0xff]
      %v2080 = vld [vmem:[#allocation2 + $0x310] sm:$0xff]
      %v2081 = vld [vmem:[#allocation2 + $0x318] sm:$0xff]
      %v2082 = vld [vmem:[#allocation2 + $0x320] sm:$0xff]
      %v2083 = vld [vmem:[#allocation2 + $0x328] sm:$0xff]
      %v2084 = vld [vmem:[#allocation2 + $0x330] sm:$0xff]
      %v2085 = vld [vmem:[#allocation2 + $0x338] sm:$0xff]
      %v2086 = vld [vmem:[#allocation2 + $0x340] sm:$0xff]
      %v2087 = vld [vmem:[#allocation2 + $0x348] sm:$0xff]
      %v2088 = vld [vmem:[#allocation2 + $0x350] sm:$0xff]
      %v2089 = vld [vmem:[#allocation2 + $0x358] sm:$0xff]
      %v2091 = vsel %vm1041, %v1981, 0
      %2093 = vmatpush.msra.mxu0 %v2042
      %2094 = vmatpush.msra.mxu0 %v2038
      %2095 = vmatpush.msra.mxu0 %v2034
      %2096 = vmatpush.msra.mxu0 %v2030
      %2097 = vmatpush.msra.mxu0 %v2026
      %2098 = vmatpush.msra.mxu0 %v2022
      %2099 = vmatpush.msra.mxu0 %v2018
      %2100 = vmatpush.msra.mxu0 %v2014
      %2101 = vmatpush.msra.mxu0 %v2010
      %2102 = vmatpush.msra.mxu0 %v2006
      %2103 = vmatpush.msra.mxu0 %v2002
      %2104 = vmatpush.msra.mxu0 %v1998
      %2105 = vmatpush.msra.mxu0 %v1994
      %2106 = vmatpush.msra.mxu0 %v1990
      %2107 = vmatpush.msra.mxu0 %v1986
      %2108 = vmatpush.msra.mxu0 %v1982
      %2109 = vmatmul.f32.gmra.mxu0 %v1980
      %v2110 = vpop.f32.mrf.mxu0
      %v2111 = vadd.f32 0.0, %v2110
      %2112 = vdwg.mxu0
      %2113 = vmatpush.msra.mxu0 0.0
      %2114 = vmatpush.msra.mxu0 0.0
      %2115 = vmatpush.msra.mxu0 0.0
      %2116 = vmatpush.msra.mxu0 0.0
      %2117 = vmatpush.msra.mxu0 0.0
      %2118 = vmatpush.msra.mxu0 %v2086
      %2119 = vmatpush.msra.mxu0 %v2082
      %2120 = vmatpush.msra.mxu0 %v2078
      %2121 = vmatpush.msra.mxu0 %v2074
      %2122 = vmatpush.msra.mxu0 %v2070
      %2123 = vmatpush.msra.mxu0 %v2066
      %2124 = vmatpush.msra.mxu0 %v2062
      %2125 = vmatpush.msra.mxu0 %v2058
      %2126 = vmatpush.msra.mxu0 %v2054
      %2127 = vmatpush.msra.mxu0 %v2050
      %2128 = vmatpush.msra.mxu0 %v2046
      %2129 = vmatmul.f32.gmra.mxu0 %v2091
      %v2130 = vpop.f32.mrf.mxu0
      %v2131 = vadd.f32 %v2111, %v2130
      %2132 = vdwg.mxu0
      %2133 = vmatpush.msra.mxu0 %v2043
      %2134 = vmatpush.msra.mxu0 %v2039
      %2135 = vmatpush.msra.mxu0 %v2035
      %2136 = vmatpush.msra.mxu0 %v2031
      %2137 = vmatpush.msra.mxu0 %v2027
      %2138 = vmatpush.msra.mxu0 %v2023
      %2139 = vmatpush.msra.mxu0 %v2019
      %2140 = vmatpush.msra.mxu0 %v2015
      %2141 = vmatpush.msra.mxu0 %v2011
      %2142 = vmatpush.msra.mxu0 %v2007
      %2143 = vmatpush.msra.mxu0 %v2003
      %2144 = vmatpush.msra.mxu0 %v1999
      %2145 = vmatpush.msra.mxu0 %v1995
      %2146 = vmatpush.msra.mxu0 %v1991
      %2147 = vmatpush.msra.mxu0 %v1987
      %2148 = vmatpush.msra.mxu0 %v1983
      %2149 = vmatmul.f32.gmra.mxu0 %v1980
      %v2150 = vpop.f32.mrf.mxu0
      %v2151 = vadd.f32 0.0, %v2150
      %2152 = vdwg.mxu0
      %2153 = vmatpush.msra.mxu0 0.0
      %2154 = vmatpush.msra.mxu0 0.0
      %2155 = vmatpush.msra.mxu0 0.0
      %2156 = vmatpush.msra.mxu0 0.0
      %2157 = vmatpush.msra.mxu0 0.0
      %2158 = vmatpush.msra.mxu0 %v2087
      %2159 = vmatpush.msra.mxu0 %v2083
      %2160 = vmatpush.msra.mxu0 %v2079
      %2161 = vmatpush.msra.mxu0 %v2075
      %2162 = vmatpush.msra.mxu0 %v2071
      %2163 = vmatpush.msra.mxu0 %v2067
      %2164 = vmatpush.msra.mxu0 %v2063
      %2165 = vmatpush.msra.mxu0 %v2059
      %2166 = vmatpush.msra.mxu0 %v2055
      %2167 = vmatpush.msra.mxu0 %v2051
      %2168 = vmatpush.msra.mxu0 %v2047
      %2169 = vmatmul.f32.gmra.mxu0 %v2091
      %v2170 = vpop.f32.mrf.mxu0
      %v2171 = vadd.f32 %v2151, %v2170
      %2172 = vdwg.mxu0
      %2173 = vmatpush.msra.mxu0 %v2044
      %2174 = vmatpush.msra.mxu0 %v2040
      %2175 = vmatpush.msra.mxu0 %v2036
      %2176 = vmatpush.msra.mxu0 %v2032
      %2177 = vmatpush.msra.mxu0 %v2028
      %2178 = vmatpush.msra.mxu0 %v2024
      %2179 = vmatpush.msra.mxu0 %v2020
      %2180 = vmatpush.msra.mxu0 %v2016
      %2181 = vmatpush.msra.mxu0 %v2012
      %2182 = vmatpush.msra.mxu0 %v2008
      %2183 = vmatpush.msra.mxu0 %v2004
      %2184 = vmatpush.msra.mxu0 %v2000
      %2185 = vmatpush.msra.mxu0 %v1996
      %2186 = vmatpush.msra.mxu0 %v1992
      %2187 = vmatpush.msra.mxu0 %v1988
      %2188 = vmatpush.msra.mxu0 %v1984
      %2189 = vmatmul.f32.gmra.mxu0 %v1980
      %v2190 = vpop.f32.mrf.mxu0
      %v2191 = vadd.f32 0.0, %v2190
      %2192 = vdwg.mxu0
      %2193 = vmatpush.msra.mxu0 0.0
      %2194 = vmatpush.msra.mxu0 0.0
      %2195 = vmatpush.msra.mxu0 0.0
      %2196 = vmatpush.msra.mxu0 0.0
      %2197 = vmatpush.msra.mxu0 0.0
      %2198 = vmatpush.msra.mxu0 %v2088
      %2199 = vmatpush.msra.mxu0 %v2084
      %2200 = vmatpush.msra.mxu0 %v2080
      %2201 = vmatpush.msra.mxu0 %v2076
      %2202 = vmatpush.msra.mxu0 %v2072
      %2203 = vmatpush.msra.mxu0 %v2068
      %2204 = vmatpush.msra.mxu0 %v2064
      %2205 = vmatpush.msra.mxu0 %v2060
      %2206 = vmatpush.msra.mxu0 %v2056
      %2207 = vmatpush.msra.mxu0 %v2052
      %2208 = vmatpush.msra.mxu0 %v2048
      %2209 = vmatmul.f32.gmra.mxu0 %v2091
      %v2210 = vpop.f32.mrf.mxu0
      %v2211 = vadd.f32 %v2191, %v2210
      %2212 = vdwg.mxu0
      %2213 = vmatpush.msra.mxu0 %v2045
      %2214 = vmatpush.msra.mxu0 %v2041
      %2215 = vmatpush.msra.mxu0 %v2037
      %2216 = vmatpush.msra.mxu0 %v2033
      %2217 = vmatpush.msra.mxu0 %v2029
      %2218 = vmatpush.msra.mxu0 %v2025
      %2219 = vmatpush.msra.mxu0 %v2021
      %2220 = vmatpush.msra.mxu0 %v2017
      %2221 = vmatpush.msra.mxu0 %v2013
      %2222 = vmatpush.msra.mxu0 %v2009
      %2223 = vmatpush.msra.mxu0 %v2005
      %2224 = vmatpush.msra.mxu0 %v2001
      %2225 = vmatpush.msra.mxu0 %v1997
      %2226 = vmatpush.msra.mxu0 %v1993
      %2227 = vmatpush.msra.mxu0 %v1989
      %2228 = vmatpush.msra.mxu0 %v1985
      %2229 = vmatmul.f32.gmra.mxu0 %v1980
      %v2230 = vpop.f32.mrf.mxu0
      %v2231 = vadd.f32 0.0, %v2230
      %2232 = vdwg.mxu0
      %2233 = vmatpush.msra.mxu0 0.0
      %2234 = vmatpush.msra.mxu0 0.0
      %2235 = vmatpush.msra.mxu0 0.0
      %2236 = vmatpush.msra.mxu0 0.0
      %2237 = vmatpush.msra.mxu0 0.0
      %2238 = vmatpush.msra.mxu0 %v2089
      %2239 = vmatpush.msra.mxu0 %v2085
      %2240 = vmatpush.msra.mxu0 %v2081
      %2241 = vmatpush.msra.mxu0 %v2077
      %2242 = vmatpush.msra.mxu0 %v2073
      %2243 = vmatpush.msra.mxu0 %v2069
      %2244 = vmatpush.msra.mxu0 %v2065
      %2245 = vmatpush.msra.mxu0 %v2061
      %2246 = vmatpush.msra.mxu0 %v2057
      %2247 = vmatpush.msra.mxu0 %v2053
      %2248 = vmatpush.msra.mxu0 %v2049
      %2249 = vmatmul.f32.gmra.mxu0 %v2091
      %v2250 = vpop.f32.mrf.mxu0
      %v2251 = vadd.f32 %v2231, %v2250
      %2252 = vdwg.mxu0
      %v2253 = vadd.f32 %v2131, %v2171
      %v2254 = vadd.f32 %v2253, %v2211
      %v2255 = vadd.f32 %v2254, %v2251
      %2256 = vadd.xlane.f32.xlu0 %v2255
      %v2257 = vpop.xlane.xlu0 %2256
      %v2258 = vmul.f32 %v2257, %v1244
      %v2259 = vsub.f32 %v2131, %v2258
      %v2260 = vsub.f32 %v2171, %v2258
      %v2261 = vsub.f32 %v2211, %v2258
      %v2262 = vsub.f32 %v2251, %v2258
      %v2263 = vmul.f32 %v2259, %v2259
      %v2264 = vmul.f32 %v2260, %v2260
      %v2265 = vmul.f32 %v2261, %v2261
      %v2266 = vmul.f32 %v2262, %v2262
      %v2267 = vadd.f32 %v2263, %v2264
      %v2268 = vadd.f32 %v2267, %v2265
      %v2269 = vadd.f32 %v2268, %v2266
      %2270 = vadd.xlane.f32.xlu0 %v2269
      %v2271 = vpop.xlane.xlu0 %2270
      %v2272 = vmul.f32 %v2271, %v1244
      %v2273 = vadd.f32 %v2272, 1e-05
      %v2274 = vrsqrt.pop %v2273
      %v2275 = vmul.f32 %v2274, %v2273
      %v2276 = vmul.f32 %v2275, %v2274
      %v2277 = vmul.f32 0.5, %v2276
      %v2278 = vsub.f32 1.5, %v2277
      %v2279 = vmul.f32 %v2274, %v2278
      %vm2280 = vweird.f32 %v2273
      %vm2281 = vweird.f32 %v2274
      %vm2282 = vmor %vm2280, %vm2281
      %v2283 = vsel %vm2282, %v2274, %v2279
      %v2284 = vmul.f32 %v2259, %v2283
      %v2285 = vmul.f32 %v2260, %v2283
      %v2286 = vmul.f32 %v2261, %v2283
      %v2287 = vmul.f32 %v2262, %v2283
      %2288 = vset.pattern.permute.xlu0 2
      %2289 = vperm.xlu0 %2288, %v1232
      %v2290 = vpop.permute.xlu0 %2289
      %v2292 = vmul.f32 %v2284, %v2290
      %v2293 = vmul.f32 %v2285, %v2290
      %v2294 = vmul.f32 %v2286, %v2290
      %v2295 = vmul.f32 %v2287, %v2290
      %2296 = vset.pattern.permute.xlu0 3
      %2297 = vperm.xlu0 %2296, %v1232
      %v2298 = vpop.permute.xlu0 %2297
      %v2300 = vadd.f32 %v2292, %v2298
      %v2301 = vadd.f32 %v2293, %v2298
      %v2302 = vadd.f32 %v2294, %v2298
      %v2303 = vadd.f32 %v2295, %v2298
      %v2304 = vadd.f32 %v1092, %v1138
      %v2305 = vadd.f32 %v2304, %v1184
      %v2306 = vadd.f32 %v2305, %v1230
      %2307 = vadd.xlane.f32.xlu0 %v2306
      %v2308 = vpop.xlane.xlu0 %2307
      %v2309 = vmul.f32 %v2308, %v1244
      %v2310 = vsub.f32 %v1092, %v2309
      %v2311 = vsub.f32 %v1138, %v2309
      %v2312 = vsub.f32 %v1184, %v2309
      %v2313 = vsub.f32 %v1230, %v2309
      %v2314 = vmul.f32 %v2310, %v2310
      %v2315 = vmul.f32 %v2311, %v2311
      %v2316 = vmul.f32 %v2312, %v2312
      %v2317 = vmul.f32 %v2313, %v2313
      %v2318 = vadd.f32 %v2314, %v2315
      %v2319 = vadd.f32 %v2318, %v2316
      %v2320 = vadd.f32 %v2319, %v2317
      %2321 = vadd.xlane.f32.xlu0 %v2320
      %v2322 = vpop.xlane.xlu0 %2321
      %v2323 = vmul.f32 %v2322, %v1244
      %v2324 = vadd.f32 %v2323, 1e-05
      %v2325 = vrsqrt.pop %v2324
      %v2326 = vmul.f32 %v2325, %v2324
      %v2327 = vmul.f32 %v2326, %v2325
      %v2328 = vmul.f32 0.5, %v2327
      %v2329 = vsub.f32 1.5, %v2328
      %v2330 = vmul.f32 %v2325, %v2329
      %vm2331 = vweird.f32 %v2324
      %vm2332 = vweird.f32 %v2325
      %vm2333 = vmor %vm2331, %vm2332
      %v2334 = vsel %vm2333, %v2325, %v2330
      %v2335 = vmul.f32 %v2310, %v2334
      %v2336 = vmul.f32 %v2311, %v2334
      %v2337 = vmul.f32 %v2312, %v2334
      %v2338 = vmul.f32 %v2313, %v2334
      %v2339 = vadd.f32 %v2300, %v2335
      %v2340 = vadd.f32 %v2301, %v2336
      %v2341 = vadd.f32 %v2302, %v2337
      %v2342 = vadd.f32 %v2303, %v2338
      %vm2343 = vcmp.gt.f32.partialorder %v2339, 0.0
      %vm2344 = vcmp.gt.f32.partialorder %v2340, 0.0
      %vm2345 = vcmp.gt.f32.partialorder %v2341, 0.0
      %vm2346 = vcmp.gt.f32.partialorder %v2342, 0.0
      %v2347 = vmul.f32 %v2339, 0.01
      %v2348 = vmul.f32 %v2340, 0.01
      %v2349 = vmul.f32 %v2341, 0.01
      %v2350 = vmul.f32 %v2342, 0.01
      %v2351 = vsel %vm2343, %v2339, %v2347
      %v2352 = vsel %vm2344, %v2340, %v2348
      %v2353 = vsel %vm2345, %v2341, %v2349
      %v2354 = vsel %vm2346, %v2342, %v2350
      %2355 = vst [vmem:[%s224] sm:$0xff] %v2351
      %2356 = vst [vmem:[%s224 + $0x8] sm:$0xff] %v2352
      %2357 = vst [vmem:[%s224 + $0x10] sm:$0xff] %v2353
      %2358 = vst [vmem:[%s224 + $0x18] sm:$0xff] %v2354
      %p2359 = scmp.lt.s32.totalorder %s16, 1
      %s2360 = scalar_select %p2359, %s16, 1
      %s2361 = smul.addr %s2360, 4
      %s2362 = smul.addr %s2361, 8
      %s2363 = scalar_lea.vmem %s5, %s2362
      // Predicated region
      $region41: #{de_ssf_block.1} parent=39 // pred_check
        %p2364 = pneg %p144
      $region42: #{de_ssf_block.1} parent=39 // pred_check_branch
        %2366 = sbr.rel (%p2364) target = $region44
      $region43: #{de_ssf_block.1} parent=39 // pred_region
        _
      $region44: #{de_ssf_block.1} parent=39 // pred_fallthru
        _
    $region40: #{de_ssf_block.1} parent=5 // pred_fallthru
      _
    %p2367 = scmp.le.s32.totalorder 2, %s11
    // Predicated region
    $region45: #{de_ssf_block.1} parent=5 // pred_check
      %p2368 = pneg %p2367
    $region46: #{de_ssf_block.1} parent=5 // pred_check_branch
      %2370 = sbr.rel (%p2368) target = $region48
    $region47: #{de_ssf_block.1} parent=5 // pred_region
      %s2371 = ssub.s32 %s11, 2
      // Predicated region
      $region49: #{de_ssf_block.1} parent=47 // pred_check
        %p2372 = pneg %p150
      $region50: #{de_ssf_block.1} parent=47 // pred_check_branch
        %2374 = sbr.rel (%p2372) target = $region52
      $region51: #{de_ssf_block.1} parent=47 // pred_region
        %p2375 = scmp.lt.s32.totalorder %s17, 1
        %s2376 = scalar_select %p2375, %s17, 1
        %s2377 = smul.addr %s2376, 4
        %s2378 = smul.addr %s2377, 8
        %s2379 = scalar_lea.vmem %s5, %s2378
      $region52: #{de_ssf_block.1} parent=47 // pred_fallthru
        _
    $region48: #{de_ssf_block.1} parent=5 // pred_fallthru
      _
  $region6: #{de_ssf_block.1} parent=0 // loop_footer
    %s15 = sadd.s32 1, %s11
  $region7: #{de_ssf_block.1} parent=0 // loop_footer_branch
    %10 = sbr.rel target = $region3
  $region8: #{de_ssf_block.1} parent=0 // loop_exit
    _

</llo_original>
